<compile_context>
chip_gen: v7x
topology: tpu7x:2x2x1
jax: 0.10.0
libtpu: 0.0.40
codegen_flags: <defaults>
</compile_context>

<pallas_src>
import math

import jax
import jax.numpy as jnp
from jax.experimental import pallas as pl
from jax.experimental.pallas import tpu as pltpu

# ----------------------------- small synthetic config -----------------------------
BATCH = 2
IN_CH = 3
IMG = 16
PATCH = 4
GRID = IMG // PATCH                  # 4
N_PATCH = GRID * GRID                # 16 patch tokens
WIDTH = 32                           # embed dim E
HEADS = 4
HEAD_DIM = WIDTH // HEADS            # 8
MLP_DIM = 4 * WIDTH                  # 128
NUM_TOKENS = 2                       # VPT prompt tokens
NUM_LAYERS = 12
NUM_DEEP = NUM_LAYERS - 1            # deep prompt embeddings used for layers 1..11
OUT_DIM = 16                         # visual.proj output dim
SEQ = 1 + NUM_TOKENS + N_PATCH       # 19 real tokens
SEQ_PAD = 24                         # padded to a sublane multiple of 8
ROWS = BATCH * SEQ_PAD               # 48 rows per batch-collapsed matmul
LN_EPS = 1e-5
NEG_INF = -1e9
QK_SCALE = 1.0 / math.sqrt(HEAD_DIM)

# packed per-layer vector slab: one [8, 128] f32 vreg per layer
#   row 0: ln1_gamma[:W]   row 1: ln1_beta[:W]
#   row 2: bias_qkv[:3W]   (q part pre-scaled by 1/sqrt(head_dim))
#   row 3: bias_out[:W]
#   row 4: ln2_gamma[:W]   row 5: ln2_beta[:W]
#   row 6: bias_mlp1[:MLP_DIM]
#   row 7: bias_mlp2[:W]
VEC_ROWS = 8
VEC_LANES = 128


# --------------------------------- kernel helpers ---------------------------------
def _ln(x, g, b):
    mu = jnp.mean(x, axis=-1, keepdims=True)
    var = jnp.mean(jnp.square(x - mu), axis=-1, keepdims=True)
    return (x - mu) * jax.lax.rsqrt(var + LN_EPS) * g + b


# ------------------------------ fused forward kernel -------------------------------
def fused_vpt_kernel(
    # ---- layer-invariant inputs (fetched once, VMEM-resident across all grid steps) ----
    patches_ref, conv_w_ref, cls_ref, pos_ref, lnpre_g_ref, lnpre_b_ref,
    prompt_ref, deep_ref, bias_ref,
    # ---- layer-stacked weights (one layer's slab per grid step, pipelined) ----
    w_qkv_ref, wo_ref, w1_ref, w2_ref, vec_ref,
    # ---- epilogue inputs ----
    lnpost_g_ref, lnpost_b_ref, proj_ref,
    # ---- output ----
    out_ref,
    # ---- scratch: token activations, carried across layers in VMEM ----
    hid_ref,
):
    l = pl.program_id(0)

    # -------------------- prologue (layer 0): incorporate_prompt --------------------
    @pl.when(l == 0)
    def _():
        g_pre = lnpre_g_ref[...]                                       # [1, E]
        b_pre = lnpre_b_ref[...]
        pos = pos_ref[...]                                             # [1+NP, E]
        # conv1 (stride == kernel size) as a single patch-embedding matmul
        tok = jnp.dot(patches_ref[...], conv_w_ref[...],
                      preferred_element_type=jnp.float32)              # [B*NP, E]
        pos_patch = pos[1:, :]                                         # [NP, E]
        cls_row = _ln(cls_ref[...] + pos[0:1, :], g_pre, b_pre)        # [1, E]
        prm = prompt_ref[...]                                          # [NT, E] (not ln_pre'd)
        zpad = jnp.zeros((SEQ_PAD - SEQ, WIDTH), jnp.float32)
        for b in range(BATCH):
            base = b * SEQ_PAD
            tok_b = _ln(tok[b * N_PATCH:(b + 1) * N_PATCH, :] + pos_patch,
                        g_pre, b_pre)                                  # ln_pre
            hid_ref[base:base + 1, :] = cls_row
            hid_ref[base + 1:base + 1 + NUM_TOKENS, :] = prm
            hid_ref[base + 1 + NUM_TOKENS:base + SEQ, :] = tok_b
            hid_ref[base + SEQ:base + SEQ_PAD, :] = zpad

    # ------------- deep-prompt row overwrite (layers 1..NUM_DEEP) -------------
    @pl.when((l >= 1) & (l <= NUM_DEEP))
    def _():
        dp = deep_ref[l - 1]                                           # [NT, E]
        for b in range(BATCH):
            base = b * SEQ_PAD
            hid_ref[base + 1:base + 1 + NUM_TOKENS, :] = dp

    # -------------------- residual attention block (layer l) --------------------
    vec = vec_ref[0]                                                   # [8, 128] f32
    ln1_g = vec[0:1, :WIDTH]
    ln1_b = vec[1:2, :WIDTH]
    b_qkv = vec[2:3, :3 * WIDTH]
    b_o = vec[3:4, :WIDTH]
    ln2_g = vec[4:5, :WIDTH]
    ln2_b = vec[5:6, :WIDTH]
    b_1 = vec[6:7, :MLP_DIM]
    b_2 = vec[7:8, :WIDTH]

    x = hid_ref[...]                                                   # [ROWS, E] f32
    xn = _ln(x, ln1_g, ln1_b).astype(jnp.bfloat16)

    # fused Q/K/V projection (Q weight & bias pre-scaled by 1/sqrt(head_dim))
    qkv = jnp.dot(xn, w_qkv_ref[0],
                  preferred_element_type=jnp.float32) + b_qkv          # [ROWS, 3E]

    bias = bias_ref[...]                                               # [ROWS, ROWS]
    head_outs = []
    for h in range(HEADS):
        qh = qkv[:, h * HEAD_DIM:(h + 1) * HEAD_DIM]
        kh = qkv[:, WIDTH + h * HEAD_DIM:WIDTH + (h + 1) * HEAD_DIM]
        vh = qkv[:, 2 * WIDTH + h * HEAD_DIM:2 * WIDTH + (h + 1) * HEAD_DIM]
        s = jax.lax.dot_general(qh, kh, (((1,), (1,)), ((), ())),
                                preferred_element_type=jnp.float32)    # [ROWS, ROWS]
        s = s + bias                                                   # mask pad / cross-image keys
        s = s - jnp.max(s, axis=-1, keepdims=True)
        p = jnp.exp(s)
        p = p * pl.reciprocal(jnp.sum(p, axis=-1, keepdims=True), approx=True)
        head_outs.append(jnp.dot(p.astype(jnp.bfloat16), vh.astype(jnp.bfloat16),
                                 preferred_element_type=jnp.float32))
    attn = jnp.concatenate(head_outs, axis=-1).astype(jnp.bfloat16)    # [ROWS, E]
    attn = jnp.dot(attn, wo_ref[0], preferred_element_type=jnp.float32) + b_o
    x = x + attn

    xn2 = _ln(x, ln2_g, ln2_b).astype(jnp.bfloat16)
    h1 = jnp.dot(xn2, w1_ref[0], preferred_element_type=jnp.float32) + b_1
    h1 = h1 * jax.nn.sigmoid(1.702 * h1)                               # QuickGELU (CLIP)
    h2 = jnp.dot(h1.astype(jnp.bfloat16), w2_ref[0],
                 preferred_element_type=jnp.float32) + b_2
    new_x = x + h2
    hid_ref[...] = new_x

    # -------------------- epilogue (last layer): ln_post + proj --------------------
    @pl.when(l == NUM_LAYERS - 1)
    def _():
        cls_rows = jnp.concatenate(
            [new_x[b * SEQ_PAD:b * SEQ_PAD + 1, :] for b in range(BATCH)], axis=0)  # [B, E]
        cn = _ln(cls_rows, lnpost_g_ref[...], lnpost_b_ref[...])
        out_ref[...] = jnp.dot(cn, proj_ref[...], preferred_element_type=jnp.float32)


# ------------------------------- pallas_call wrapper --------------------------------
def _full_spec(a):
    nd = a.ndim
    return pl.BlockSpec(a.shape, lambda l, _nd=nd: (0,) * _nd)


def _layer_spec(a):
    nd = a.ndim
    return pl.BlockSpec((1,) + a.shape[1:], lambda l, _nd=nd: (l,) + (0,) * (_nd - 1))


@jax.jit
def vpt_vit_forward(params, x, prompt_embeddings, deep_prompt_embeddings):
    B = x.shape[0]
    assert B == BATCH
    # patch extraction (pure data movement); the conv1 matmul itself runs in-kernel
    xp = x.reshape(B, IN_CH, GRID, PATCH, GRID, PATCH)
    patches = xp.transpose(0, 2, 4, 1, 3, 5).reshape(B * N_PATCH, IN_CH * PATCH * PATCH)

    prompt = prompt_embeddings.reshape(NUM_TOKENS, WIDTH).astype(jnp.float32)
    deep = deep_prompt_embeddings.reshape(NUM_DEEP, NUM_TOKENS, WIDTH).astype(jnp.float32)

    # additive attention bias: each token only attends to REAL tokens of its own image
    idx = jnp.arange(ROWS)
    img = idx // SEQ_PAD
    tok_in_img = idx % SEQ_PAD
    allowed = (img[:, None] == img[None, :]) & (tok_in_img[None, :] < SEQ)
    attn_bias = jnp.where(allowed, 0.0, NEG_INF).astype(jnp.float32)

    layer_invariant = (patches, params['conv_w_t'], params['class_embedding'],
                       params['pos_emb'], params['ln_pre_g'], params['ln_pre_b'],
                       prompt, deep, attn_bias)
    layer_stacked = (params['w_qkv'], params['wo'], params['w1'], params['w2'],
                     params['vec'])
    epilogue = (params['ln_post_g'], params['ln_post_b'], params['proj'])

    in_specs = ([_full_spec(a) for a in layer_invariant]
                + [_layer_spec(a) for a in layer_stacked]
                + [_full_spec(a) for a in epilogue])

    return pl.pallas_call(
        fused_vpt_kernel,
        grid=(NUM_LAYERS,),
        in_specs=in_specs,
        out_specs=pl.BlockSpec((BATCH, OUT_DIM), lambda l: (0, 0)),
        out_shape=jax.ShapeDtypeStruct((BATCH, OUT_DIM), jnp.float32),
        scratch_shapes=[pltpu.VMEM((ROWS, WIDTH), jnp.float32)],
        compiler_params=pltpu.CompilerParams(dimension_semantics=("arbitrary",)),
    )(*layer_invariant, *layer_stacked, *epilogue)


# ---------------------------------- parameters ------------------------------------
def init_params(key):
    def nrm(k, shape, scale=0.02):
        return (scale * jax.random.normal(k, shape)).astype(jnp.float32)

    keys = iter(jax.random.split(key, 20))

    wq = nrm(next(keys), (NUM_LAYERS, WIDTH, WIDTH))
    wk = nrm(next(keys), (NUM_LAYERS, WIDTH, WIDTH))
    wv = nrm(next(keys), (NUM_LAYERS, WIDTH, WIDTH))
    bq = nrm(next(keys), (NUM_LAYERS, WIDTH))
    bk = nrm(next(keys), (NUM_LAYERS, WIDTH))
    bv = nrm(next(keys), (NUM_LAYERS, WIDTH))
    wo = nrm(next(keys), (NUM_LAYERS, WIDTH, WIDTH))
    bo = nrm(next(keys), (NUM_LAYERS, WIDTH))
    w1 = nrm(next(keys), (NUM_LAYERS, WIDTH, MLP_DIM))
    b1 = nrm(next(keys), (NUM_LAYERS, MLP_DIM))
    w2 = nrm(next(keys), (NUM_LAYERS, MLP_DIM, WIDTH))
    b2 = nrm(next(keys), (NUM_LAYERS, WIDTH))
    ln1_g = jnp.ones((NUM_LAYERS, WIDTH), jnp.float32)
    ln1_b = jnp.zeros((NUM_LAYERS, WIDTH), jnp.float32)
    ln2_g = jnp.ones((NUM_LAYERS, WIDTH), jnp.float32)
    ln2_b = jnp.zeros((NUM_LAYERS, WIDTH), jnp.float32)

    # fused QKV weight; 1/sqrt(head_dim) folded into the Q part
    w_qkv = jnp.concatenate([wq * QK_SCALE, wk, wv], axis=-1).astype(jnp.bfloat16)

    # packed per-layer vector slab (one [8, 128] f32 vreg per layer)
    vec = jnp.zeros((NUM_LAYERS, VEC_ROWS, VEC_LANES), jnp.float32)
    vec = vec.at[:, 0, :WIDTH].set(ln1_g)
    vec = vec.at[:, 1, :WIDTH].set(ln1_b)
    vec = vec.at[:, 2, 0 * WIDTH:1 * WIDTH].set(bq * QK_SCALE)
    vec = vec.at[:, 2, 1 * WIDTH:2 * WIDTH].set(bk)
    vec = vec.at[:, 2, 2 * WIDTH:3 * WIDTH].set(bv)
    vec = vec.at[:, 3, :WIDTH].set(bo)
    vec = vec.at[:, 4, :WIDTH].set(ln2_g)
    vec = vec.at[:, 5, :WIDTH].set(ln2_b)
    vec = vec.at[:, 6, :MLP_DIM].set(b1)
    vec = vec.at[:, 7, :WIDTH].set(b2)

    return {
        # conv1 weight [C*P*P, WIDTH] stored pre-transposed for the patch matmul
        'conv_w_t': nrm(next(keys), (IN_CH * PATCH * PATCH, WIDTH)),
        'class_embedding': nrm(next(keys), (1, WIDTH)),
        'pos_emb': nrm(next(keys), (1 + N_PATCH, WIDTH)),
        'ln_pre_g': jnp.ones((1, WIDTH), jnp.float32),
        'ln_pre_b': jnp.zeros((1, WIDTH), jnp.float32),
        'ln_post_g': jnp.ones((1, WIDTH), jnp.float32),
        'ln_post_b': jnp.zeros((1, WIDTH), jnp.float32),
        'proj': nrm(next(keys), (WIDTH, OUT_DIM)),
        # per-layer weights, stacked along a leading NUM_LAYERS axis (streamed per grid step)
        'w_qkv': w_qkv,                               # [L, E, 3E] bf16
        'wo': wo.astype(jnp.bfloat16),                # [L, E, E]  bf16
        'w1': w1.astype(jnp.bfloat16),                # [L, E, 4E] bf16
        'w2': w2.astype(jnp.bfloat16),                # [L, 4E, E] bf16
        'vec': vec,                                   # [L, 8, 128] f32
    }


# ------------------------------------- main ----------------------------------------
if __name__ == "__main__":
    key = jax.random.PRNGKey(0)
    k_param, k_x, k_p, k_dp = jax.random.split(key, 4)

    params = init_params(k_param)
    x = jax.random.normal(k_x, (BATCH, IN_CH, IMG, IMG), dtype=jnp.float32)
    prompt_embeddings = 0.02 * jax.random.normal(k_p, (1, NUM_TOKENS, WIDTH), dtype=jnp.float32)
    deep_prompt_embeddings = 0.02 * jax.random.normal(
        k_dp, (NUM_DEEP, NUM_TOKENS, WIDTH), dtype=jnp.float32)

    out = vpt_vit_forward(params, x, prompt_embeddings, deep_prompt_embeddings)
    out = jax.block_until_ready(out)
    assert out.shape == (BATCH, OUT_DIM)
    assert bool(jnp.all(jnp.isfinite(out)))
    print("KERNEL_OK")
</pallas_src>

<mosaic_0001>
module attributes {stable_mosaic.version = 11 : i64} {
  func.func @fused_vpt_kernel(%arg0: i32, %arg1: memref<32x48xf32, #tpu.memory_space<vmem>>, %arg2: memref<48x32xf32, #tpu.memory_space<vmem>>, %arg3: memref<1x32xf32, #tpu.memory_space<vmem>>, %arg4: memref<17x32xf32, #tpu.memory_space<vmem>>, %arg5: memref<1x32xf32, #tpu.memory_space<vmem>>, %arg6: memref<1x32xf32, #tpu.memory_space<vmem>>, %arg7: memref<2x32xf32, #tpu.memory_space<vmem>>, %arg8: memref<11x2x32xf32, #tpu.memory_space<vmem>>, %arg9: memref<48x48xf32, #tpu.memory_space<vmem>>, %arg10: memref<1x32x96xbf16, #tpu.memory_space<vmem>>, %arg11: memref<1x32x32xbf16, #tpu.memory_space<vmem>>, %arg12: memref<1x32x128xbf16, #tpu.memory_space<vmem>>, %arg13: memref<1x128x32xbf16, #tpu.memory_space<vmem>>, %arg14: memref<1x8x128xf32, #tpu.memory_space<vmem>>, %arg15: memref<1x32xf32, #tpu.memory_space<vmem>>, %arg16: memref<1x32xf32, #tpu.memory_space<vmem>>, %arg17: memref<32x16xf32, #tpu.memory_space<vmem>>, %arg18: memref<2x16xf32, #tpu.memory_space<vmem>>, %arg19: memref<48x32xf32, #tpu.memory_space<vmem>>) attributes {dimension_semantics = [#tpu.dimension_semantics<arbitrary>], iteration_bounds = array<i64: 12>, scalar_prefetch = 0 : i64, scratch_operands = 1 : i64, tpu.core_type = #tpu.core_type<tc>, window_params = [{pipeline_mode = #tpu.pipeline_mode<synchronous>, transform_indices = @transform_0, window_bounds = array<i64: 32, 48>}, {pipeline_mode = #tpu.pipeline_mode<synchronous>, transform_indices = @transform_1, window_bounds = array<i64: 48, 32>}, {pipeline_mode = #tpu.pipeline_mode<synchronous>, transform_indices = @transform_2, window_bounds = array<i64: 1, 32>}, {pipeline_mode = #tpu.pipeline_mode<synchronous>, transform_indices = @transform_3, window_bounds = array<i64: 17, 32>}, {pipeline_mode = #tpu.pipeline_mode<synchronous>, transform_indices = @transform_4, window_bounds = array<i64: 1, 32>}, {pipeline_mode = #tpu.pipeline_mode<synchronous>, transform_indices = @transform_5, window_bounds = array<i64: 1, 32>}, {pipeline_mode = #tpu.pipeline_mode<synchronous>, transform_indices = @transform_6, window_bounds = array<i64: 2, 32>}, {pipeline_mode = #tpu.pipeline_mode<synchronous>, transform_indices = @transform_7, window_bounds = array<i64: 11, 2, 32>}, {pipeline_mode = #tpu.pipeline_mode<synchronous>, transform_indices = @transform_8, window_bounds = array<i64: 48, 48>}, {transform_indices = @transform_9, window_bounds = array<i64: 1, 32, 96>}, {transform_indices = @transform_10, window_bounds = array<i64: 1, 32, 32>}, {transform_indices = @transform_11, window_bounds = array<i64: 1, 32, 128>}, {transform_indices = @transform_12, window_bounds = array<i64: 1, 128, 32>}, {transform_indices = @transform_13, window_bounds = array<i64: 1, 8, 128>}, {pipeline_mode = #tpu.pipeline_mode<synchronous>, transform_indices = @transform_14, window_bounds = array<i64: 1, 32>}, {pipeline_mode = #tpu.pipeline_mode<synchronous>, transform_indices = @transform_15, window_bounds = array<i64: 1, 32>}, {pipeline_mode = #tpu.pipeline_mode<synchronous>, transform_indices = @transform_16, window_bounds = array<i64: 32, 16>}, {pipeline_mode = #tpu.pipeline_mode<synchronous>, transform_indices = @transform_17, window_bounds = array<i64: 2, 16>}]} {
    %c0_i32 = arith.constant 0 : i32
    %0 = arith.cmpi eq, %arg0, %c0_i32 : i32
    %1 = arith.extui %0 : i1 to i32
    %c0_i32_0 = arith.constant 0 : i32
    %2 = arith.cmpi ne, %1, %c0_i32_0 : i32
    scf.if %2 {
      %c0_55 = arith.constant 0 : index
      %c0_56 = arith.constant 0 : index
      %175 = vector.load %arg5[%c0_55, %c0_56] : memref<1x32xf32, #tpu.memory_space<vmem>>, vector<1x32xf32>
      %c0_57 = arith.constant 0 : index
      %c0_58 = arith.constant 0 : index
      %176 = vector.load %arg6[%c0_57, %c0_58] : memref<1x32xf32, #tpu.memory_space<vmem>>, vector<1x32xf32>
      %c0_59 = arith.constant 0 : index
      %c0_60 = arith.constant 0 : index
      %177 = vector.load %arg4[%c0_59, %c0_60] : memref<17x32xf32, #tpu.memory_space<vmem>>, vector<17x32xf32>
      %c0_61 = arith.constant 0 : index
      %c0_62 = arith.constant 0 : index
      %178 = vector.load %arg1[%c0_61, %c0_62] : memref<32x48xf32, #tpu.memory_space<vmem>>, vector<32x48xf32>
      %c0_63 = arith.constant 0 : index
      %c0_64 = arith.constant 0 : index
      %179 = vector.load %arg2[%c0_63, %c0_64] : memref<48x32xf32, #tpu.memory_space<vmem>>, vector<48x32xf32>
      %cst_65 = arith.constant dense<0.000000e+00> : vector<32x32xf32>
      %180 = tpu.matmul %178, %179, %cst_65 {dimension_numbers = #tpu.dot_dimension_numbers<[1], [0], [0], [1], [0, 0, 1, 1], [], []>} : vector<32x48xf32>, vector<48x32xf32>, vector<32x32xf32> -> vector<32x32xf32>
      %181 = vector.extract_strided_slice %177 {offsets = [1, 0], sizes = [16, 32], strides = [1, 1]} : vector<17x32xf32> to vector<16x32xf32>
      %c0_66 = arith.constant 0 : index
      %c0_67 = arith.constant 0 : index
      %182 = vector.load %arg3[%c0_66, %c0_67] : memref<1x32xf32, #tpu.memory_space<vmem>>, vector<1x32xf32>
      %183 = vector.extract_strided_slice %177 {offsets = [0, 0], sizes = [1, 32], strides = [1, 1]} : vector<17x32xf32> to vector<1x32xf32>
      %184 = arith.addf %182, %183 : vector<1x32xf32>
      %cst_68 = arith.constant dense<0.000000e+00> : vector<1xf32>
      %185 = vector.multi_reduction <add>, %184, %cst_68 [1] : vector<1x32xf32> to vector<1xf32>
      %186 = vector.shape_cast %185 : vector<1xf32> to vector<1x1xf32>
      %cst_69 = arith.constant 3.200000e+01 : f32
      %187 = vector.broadcast %cst_69 : f32 to vector<1x1xf32>
      %188 = arith.divf %186, %187 : vector<1x1xf32>
      %189 = vector.broadcast %188 : vector<1x1xf32> to vector<1x32xf32>
      %190 = arith.subf %184, %189 : vector<1x32xf32>
      %191 = arith.mulf %190, %190 : vector<1x32xf32>
      %cst_70 = arith.constant dense<0.000000e+00> : vector<1xf32>
      %192 = vector.multi_reduction <add>, %191, %cst_70 [1] : vector<1x32xf32> to vector<1xf32>
      %193 = vector.shape_cast %192 : vector<1xf32> to vector<1x1xf32>
      %cst_71 = arith.constant 3.200000e+01 : f32
      %194 = vector.broadcast %cst_71 : f32 to vector<1x1xf32>
      %195 = arith.divf %193, %194 : vector<1x1xf32>
      %196 = vector.broadcast %188 : vector<1x1xf32> to vector<1x32xf32>
      %197 = arith.subf %184, %196 : vector<1x32xf32>
      %cst_72 = arith.constant 9.99999974E-6 : f32
      %198 = vector.broadcast %cst_72 : f32 to vector<1x1xf32>
      %199 = arith.addf %195, %198 : vector<1x1xf32>
      %200 = math.rsqrt %199 : vector<1x1xf32>
      %201 = vector.broadcast %200 : vector<1x1xf32> to vector<1x32xf32>
      %202 = arith.mulf %197, %201 : vector<1x32xf32>
      %203 = arith.mulf %202, %175 : vector<1x32xf32>
      %204 = arith.addf %203, %176 : vector<1x32xf32>
      %c0_73 = arith.constant 0 : index
      %c0_74 = arith.constant 0 : index
      %205 = vector.load %arg7[%c0_73, %c0_74] : memref<2x32xf32, #tpu.memory_space<vmem>>, vector<2x32xf32>
      %cst_75 = arith.constant 0.000000e+00 : f32
      %206 = vector.broadcast %cst_75 : f32 to vector<5x32xf32>
      %207 = vector.extract_strided_slice %180 {offsets = [0, 0], sizes = [16, 32], strides = [1, 1]} : vector<32x32xf32> to vector<16x32xf32>
      %208 = arith.addf %207, %181 : vector<16x32xf32>
      %cst_76 = arith.constant dense<0.000000e+00> : vector<16xf32>
      %209 = vector.multi_reduction <add>, %208, %cst_76 [1] : vector<16x32xf32> to vector<16xf32>
      %210 = vector.shape_cast %209 : vector<16xf32> to vector<16x1xf32>
      %cst_77 = arith.constant 3.200000e+01 : f32
      %211 = vector.broadcast %cst_77 : f32 to vector<16x1xf32>
      %212 = arith.divf %210, %211 : vector<16x1xf32>
      %213 = vector.broadcast %212 : vector<16x1xf32> to vector<16x32xf32>
      %214 = arith.subf %208, %213 : vector<16x32xf32>
      %215 = arith.mulf %214, %214 : vector<16x32xf32>
      %cst_78 = arith.constant dense<0.000000e+00> : vector<16xf32>
      %216 = vector.multi_reduction <add>, %215, %cst_78 [1] : vector<16x32xf32> to vector<16xf32>
      %217 = vector.shape_cast %216 : vector<16xf32> to vector<16x1xf32>
      %cst_79 = arith.constant 3.200000e+01 : f32
      %218 = vector.broadcast %cst_79 : f32 to vector<16x1xf32>
      %219 = arith.divf %217, %218 : vector<16x1xf32>
      %220 = vector.broadcast %212 : vector<16x1xf32> to vector<16x32xf32>
      %221 = arith.subf %208, %220 : vector<16x32xf32>
      %cst_80 = arith.constant 9.99999974E-6 : f32
      %222 = vector.broadcast %cst_80 : f32 to vector<16x1xf32>
      %223 = arith.addf %219, %222 : vector<16x1xf32>
      %224 = math.rsqrt %223 : vector<16x1xf32>
      %225 = vector.broadcast %224 : vector<16x1xf32> to vector<16x32xf32>
      %226 = arith.mulf %221, %225 : vector<16x32xf32>
      %227 = vector.broadcast %175 : vector<1x32xf32> to vector<16x32xf32>
      %228 = arith.mulf %226, %227 : vector<16x32xf32>
      %229 = vector.broadcast %176 : vector<1x32xf32> to vector<16x32xf32>
      %230 = arith.addf %228, %229 : vector<16x32xf32>
      %c0_81 = arith.constant 0 : index
      %c0_82 = arith.constant 0 : index
      %231 = vector.load %arg19[%c0_81, %c0_82] : memref<48x32xf32, #tpu.memory_space<vmem>>, vector<1x32xf32>
      tpu.vector_store %arg19[%c0_81, %c0_82], %204 {strides = array<i32>} : memref<48x32xf32, #tpu.memory_space<vmem>>, vector<1x32xf32>,
      %c1 = arith.constant 1 : index
      %c0_83 = arith.constant 0 : index
      %232 = vector.load %arg19[%c1, %c0_83] : memref<48x32xf32, #tpu.memory_space<vmem>>, vector<2x32xf32>
      tpu.vector_store %arg19[%c1, %c0_83], %205 {strides = array<i32>} : memref<48x32xf32, #tpu.memory_space<vmem>>, vector<2x32xf32>,
      %c3 = arith.constant 3 : index
      %c0_84 = arith.constant 0 : index
      %233 = vector.load %arg19[%c3, %c0_84] : memref<48x32xf32, #tpu.memory_space<vmem>>, vector<16x32xf32>
      tpu.vector_store %arg19[%c3, %c0_84], %230 {strides = array<i32>} : memref<48x32xf32, #tpu.memory_space<vmem>>, vector<16x32xf32>,
      %c19 = arith.constant 19 : index
      %c0_85 = arith.constant 0 : index
      %234 = vector.load %arg19[%c19, %c0_85] : memref<48x32xf32, #tpu.memory_space<vmem>>, vector<5x32xf32>
      tpu.vector_store %arg19[%c19, %c0_85], %206 {strides = array<i32>} : memref<48x32xf32, #tpu.memory_space<vmem>>, vector<5x32xf32>,
      %235 = vector.extract_strided_slice %180 {offsets = [16, 0], sizes = [16, 32], strides = [1, 1]} : vector<32x32xf32> to vector<16x32xf32>
      %236 = arith.addf %235, %181 : vector<16x32xf32>
      %cst_86 = arith.constant dense<0.000000e+00> : vector<16xf32>
      %237 = vector.multi_reduction <add>, %236, %cst_86 [1] : vector<16x32xf32> to vector<16xf32>
      %238 = vector.shape_cast %237 : vector<16xf32> to vector<16x1xf32>
      %cst_87 = arith.constant 3.200000e+01 : f32
      %239 = vector.broadcast %cst_87 : f32 to vector<16x1xf32>
      %240 = arith.divf %238, %239 : vector<16x1xf32>
      %241 = vector.broadcast %240 : vector<16x1xf32> to vector<16x32xf32>
      %242 = arith.subf %236, %241 : vector<16x32xf32>
      %243 = arith.mulf %242, %242 : vector<16x32xf32>
      %cst_88 = arith.constant dense<0.000000e+00> : vector<16xf32>
      %244 = vector.multi_reduction <add>, %243, %cst_88 [1] : vector<16x32xf32> to vector<16xf32>
      %245 = vector.shape_cast %244 : vector<16xf32> to vector<16x1xf32>
      %cst_89 = arith.constant 3.200000e+01 : f32
      %246 = vector.broadcast %cst_89 : f32 to vector<16x1xf32>
      %247 = arith.divf %245, %246 : vector<16x1xf32>
      %248 = vector.broadcast %240 : vector<16x1xf32> to vector<16x32xf32>
      %249 = arith.subf %236, %248 : vector<16x32xf32>
      %cst_90 = arith.constant 9.99999974E-6 : f32
      %250 = vector.broadcast %cst_90 : f32 to vector<16x1xf32>
      %251 = arith.addf %247, %250 : vector<16x1xf32>
      %252 = math.rsqrt %251 : vector<16x1xf32>
      %253 = vector.broadcast %252 : vector<16x1xf32> to vector<16x32xf32>
      %254 = arith.mulf %249, %253 : vector<16x32xf32>
      %255 = vector.broadcast %175 : vector<1x32xf32> to vector<16x32xf32>
      %256 = arith.mulf %254, %255 : vector<16x32xf32>
      %257 = vector.broadcast %176 : vector<1x32xf32> to vector<16x32xf32>
      %258 = arith.addf %256, %257 : vector<16x32xf32>
      %c24 = arith.constant 24 : index
      %c0_91 = arith.constant 0 : index
      %259 = vector.load %arg19[%c24, %c0_91] : memref<48x32xf32, #tpu.memory_space<vmem>>, vector<1x32xf32>
      tpu.vector_store %arg19[%c24, %c0_91], %204 {strides = array<i32>} : memref<48x32xf32, #tpu.memory_space<vmem>>, vector<1x32xf32>,
      %c25 = arith.constant 25 : index
      %c0_92 = arith.constant 0 : index
      %260 = vector.load %arg19[%c25, %c0_92] : memref<48x32xf32, #tpu.memory_space<vmem>>, vector<2x32xf32>
      tpu.vector_store %arg19[%c25, %c0_92], %205 {strides = array<i32>} : memref<48x32xf32, #tpu.memory_space<vmem>>, vector<2x32xf32>,
      %c27 = arith.constant 27 : index
      %c0_93 = arith.constant 0 : index
      %261 = vector.load %arg19[%c27, %c0_93] : memref<48x32xf32, #tpu.memory_space<vmem>>, vector<16x32xf32>
      tpu.vector_store %arg19[%c27, %c0_93], %258 {strides = array<i32>} : memref<48x32xf32, #tpu.memory_space<vmem>>, vector<16x32xf32>,
      %c43 = arith.constant 43 : index
      %c0_94 = arith.constant 0 : index
      %262 = vector.load %arg19[%c43, %c0_94] : memref<48x32xf32, #tpu.memory_space<vmem>>, vector<5x32xf32>
      tpu.vector_store %arg19[%c43, %c0_94], %206 {strides = array<i32>} : memref<48x32xf32, #tpu.memory_space<vmem>>, vector<5x32xf32>,
    } else {
    }
    %c1_i32 = arith.constant 1 : i32
    %3 = arith.cmpi sge, %arg0, %c1_i32 : i32
    %c11_i32 = arith.constant 11 : i32
    %4 = arith.cmpi sle, %arg0, %c11_i32 : i32
    %5 = arith.andi %3, %4 : i1
    %6 = arith.extui %5 : i1 to i32
    %c0_i32_1 = arith.constant 0 : i32
    %7 = arith.cmpi ne, %6, %c0_i32_1 : i32
    scf.if %7 {
      %c1_i32_55 = arith.constant 1 : i32
      %175 = arith.subi %arg0, %c1_i32_55 : i32
      %176 = arith.index_cast %175 : i32 to index
      %c0_56 = arith.constant 0 : index
      %c0_57 = arith.constant 0 : index
      %177 = vector.load %arg8[%176, %c0_56, %c0_57] : memref<11x2x32xf32, #tpu.memory_space<vmem>>, vector<1x2x32xf32>
      %178 = vector.shape_cast %177 : vector<1x2x32xf32> to vector<2x32xf32>
      %c1 = arith.constant 1 : index
      %c0_58 = arith.constant 0 : index
      %179 = vector.load %arg19[%c1, %c0_58] : memref<48x32xf32, #tpu.memory_space<vmem>>, vector<2x32xf32>
      tpu.vector_store %arg19[%c1, %c0_58], %178 {strides = array<i32>} : memref<48x32xf32, #tpu.memory_space<vmem>>, vector<2x32xf32>,
      %c25 = arith.constant 25 : index
      %c0_59 = arith.constant 0 : index
      %180 = vector.load %arg19[%c25, %c0_59] : memref<48x32xf32, #tpu.memory_space<vmem>>, vector<2x32xf32>
      tpu.vector_store %arg19[%c25, %c0_59], %178 {strides = array<i32>} : memref<48x32xf32, #tpu.memory_space<vmem>>, vector<2x32xf32>,
    } else {
    }
    %c0 = arith.constant 0 : index
    %c0_2 = arith.constant 0 : index
    %c0_3 = arith.constant 0 : index
    %8 = vector.load %arg14[%c0, %c0_2, %c0_3] : memref<1x8x128xf32, #tpu.memory_space<vmem>>, vector<1x8x128xf32>
    %9 = vector.shape_cast %8 : vector<1x8x128xf32> to vector<8x128xf32>
    %10 = vector.extract_strided_slice %9 {offsets = [0, 0], sizes = [1, 32], strides = [1, 1]} : vector<8x128xf32> to vector<1x32xf32>
    %11 = vector.extract_strided_slice %9 {offsets = [1, 0], sizes = [1, 32], strides = [1, 1]} : vector<8x128xf32> to vector<1x32xf32>
    %12 = vector.extract_strided_slice %9 {offsets = [2, 0], sizes = [1, 96], strides = [1, 1]} : vector<8x128xf32> to vector<1x96xf32>
    %13 = vector.extract_strided_slice %9 {offsets = [3, 0], sizes = [1, 32], strides = [1, 1]} : vector<8x128xf32> to vector<1x32xf32>
    %14 = vector.extract_strided_slice %9 {offsets = [4, 0], sizes = [1, 32], strides = [1, 1]} : vector<8x128xf32> to vector<1x32xf32>
    %15 = vector.extract_strided_slice %9 {offsets = [5, 0], sizes = [1, 32], strides = [1, 1]} : vector<8x128xf32> to vector<1x32xf32>
    %16 = vector.extract_strided_slice %9 {offsets = [6, 0], sizes = [1, 128], strides = [1, 1]} : vector<8x128xf32> to vector<1x128xf32>
    %17 = vector.extract_strided_slice %9 {offsets = [7, 0], sizes = [1, 32], strides = [1, 1]} : vector<8x128xf32> to vector<1x32xf32>
    %c0_4 = arith.constant 0 : index
    %c0_5 = arith.constant 0 : index
    %18 = vector.load %arg19[%c0_4, %c0_5] : memref<48x32xf32, #tpu.memory_space<vmem>>, vector<48x32xf32>
    %cst = arith.constant dense<0.000000e+00> : vector<48xf32>
    %19 = vector.multi_reduction <add>, %18, %cst [1] : vector<48x32xf32> to vector<48xf32>
    %20 = vector.shape_cast %19 : vector<48xf32> to vector<48x1xf32>
    %cst_6 = arith.constant 3.200000e+01 : f32
    %21 = vector.broadcast %cst_6 : f32 to vector<48x1xf32>
    %22 = arith.divf %20, %21 : vector<48x1xf32>
    %23 = vector.broadcast %22 : vector<48x1xf32> to vector<48x32xf32>
    %24 = arith.subf %18, %23 : vector<48x32xf32>
    %25 = arith.mulf %24, %24 : vector<48x32xf32>
    %cst_7 = arith.constant dense<0.000000e+00> : vector<48xf32>
    %26 = vector.multi_reduction <add>, %25, %cst_7 [1] : vector<48x32xf32> to vector<48xf32>
    %27 = vector.shape_cast %26 : vector<48xf32> to vector<48x1xf32>
    %cst_8 = arith.constant 3.200000e+01 : f32
    %28 = vector.broadcast %cst_8 : f32 to vector<48x1xf32>
    %29 = arith.divf %27, %28 : vector<48x1xf32>
    %30 = vector.broadcast %22 : vector<48x1xf32> to vector<48x32xf32>
    %31 = arith.subf %18, %30 : vector<48x32xf32>
    %cst_9 = arith.constant 9.99999974E-6 : f32
    %32 = vector.broadcast %cst_9 : f32 to vector<48x1xf32>
    %33 = arith.addf %29, %32 : vector<48x1xf32>
    %34 = math.rsqrt %33 : vector<48x1xf32>
    %35 = vector.broadcast %34 : vector<48x1xf32> to vector<48x32xf32>
    %36 = arith.mulf %31, %35 : vector<48x32xf32>
    %37 = vector.broadcast %10 : vector<1x32xf32> to vector<48x32xf32>
    %38 = arith.mulf %36, %37 : vector<48x32xf32>
    %39 = vector.broadcast %11 : vector<1x32xf32> to vector<48x32xf32>
    %40 = arith.addf %38, %39 : vector<48x32xf32>
    %41 = arith.truncf %40 : vector<48x32xf32> to vector<48x32xbf16>
    %c0_10 = arith.constant 0 : index
    %c0_11 = arith.constant 0 : index
    %c0_12 = arith.constant 0 : index
    %42 = vector.load %arg10[%c0_10, %c0_11, %c0_12] : memref<1x32x96xbf16, #tpu.memory_space<vmem>>, vector<1x32x96xbf16>
    %43 = vector.shape_cast %42 : vector<1x32x96xbf16> to vector<32x96xbf16>
    %cst_13 = arith.constant dense<0.000000e+00> : vector<48x96xf32>
    %44 = tpu.matmul %41, %43, %cst_13 {dimension_numbers = #tpu.dot_dimension_numbers<[1], [0], [0], [1], [0, 0, 1, 1], [], []>} : vector<48x32xbf16>, vector<32x96xbf16>, vector<48x96xf32> -> vector<48x96xf32>
    %45 = vector.broadcast %12 : vector<1x96xf32> to vector<48x96xf32>
    %46 = arith.addf %44, %45 : vector<48x96xf32>
    %c0_14 = arith.constant 0 : index
    %c0_15 = arith.constant 0 : index
    %47 = vector.load %arg9[%c0_14, %c0_15] : memref<48x48xf32, #tpu.memory_space<vmem>>, vector<48x48xf32>
    %48 = vector.extract_strided_slice %46 {offsets = [0, 0], sizes = [48, 8], strides = [1, 1]} : vector<48x96xf32> to vector<48x8xf32>
    %49 = vector.extract_strided_slice %46 {offsets = [0, 32], sizes = [48, 8], strides = [1, 1]} : vector<48x96xf32> to vector<48x8xf32>
    %50 = vector.extract_strided_slice %46 {offsets = [0, 64], sizes = [48, 8], strides = [1, 1]} : vector<48x96xf32> to vector<48x8xf32>
    %cst_16 = arith.constant dense<0.000000e+00> : vector<48x48xf32>
    %51 = tpu.matmul %48, %49, %cst_16 {dimension_numbers = #tpu.dot_dimension_numbers<[1], [1], [0], [0], [0, 0, 1, 0], [], []>} : vector<48x8xf32>, vector<48x8xf32>, vector<48x48xf32> -> vector<48x48xf32>
    %52 = arith.addf %51, %47 : vector<48x48xf32>
    %cst_17 = arith.constant dense<0xFF800000> : vector<48xf32>
    %53 = vector.multi_reduction <maximumf>, %52, %cst_17 [1] : vector<48x48xf32> to vector<48xf32>
    %54 = vector.shape_cast %53 : vector<48xf32> to vector<48x1xf32>
    %55 = vector.broadcast %54 : vector<48x1xf32> to vector<48x48xf32>
    %56 = arith.subf %52, %55 : vector<48x48xf32>
    %57 = math.exp %56 : vector<48x48xf32>
    %cst_18 = arith.constant dense<0.000000e+00> : vector<48xf32>
    %58 = vector.multi_reduction <add>, %57, %cst_18 [1] : vector<48x48xf32> to vector<48xf32>
    %59 = vector.shape_cast %58 : vector<48xf32> to vector<48x1xf32>
    %60 = tpu.reciprocal %59 {approx = true} : vector<48x1xf32> -> vector<48x1xf32>
    %61 = vector.broadcast %60 : vector<48x1xf32> to vector<48x48xf32>
    %62 = arith.mulf %57, %61 : vector<48x48xf32>
    %63 = arith.truncf %62 : vector<48x48xf32> to vector<48x48xbf16>
    %64 = arith.truncf %50 : vector<48x8xf32> to vector<48x8xbf16>
    %cst_19 = arith.constant dense<0.000000e+00> : vector<48x8xf32>
    %65 = tpu.matmul %63, %64, %cst_19 {dimension_numbers = #tpu.dot_dimension_numbers<[1], [0], [0], [1], [0, 0, 1, 1], [], []>} : vector<48x48xbf16>, vector<48x8xbf16>, vector<48x8xf32> -> vector<48x8xf32>
    %66 = vector.extract_strided_slice %46 {offsets = [0, 8], sizes = [48, 8], strides = [1, 1]} : vector<48x96xf32> to vector<48x8xf32>
    %67 = vector.extract_strided_slice %46 {offsets = [0, 40], sizes = [48, 8], strides = [1, 1]} : vector<48x96xf32> to vector<48x8xf32>
    %68 = vector.extract_strided_slice %46 {offsets = [0, 72], sizes = [48, 8], strides = [1, 1]} : vector<48x96xf32> to vector<48x8xf32>
    %cst_20 = arith.constant dense<0.000000e+00> : vector<48x48xf32>
    %69 = tpu.matmul %66, %67, %cst_20 {dimension_numbers = #tpu.dot_dimension_numbers<[1], [1], [0], [0], [0, 0, 1, 0], [], []>} : vector<48x8xf32>, vector<48x8xf32>, vector<48x48xf32> -> vector<48x48xf32>
    %70 = arith.addf %69, %47 : vector<48x48xf32>
    %cst_21 = arith.constant dense<0xFF800000> : vector<48xf32>
    %71 = vector.multi_reduction <maximumf>, %70, %cst_21 [1] : vector<48x48xf32> to vector<48xf32>
    %72 = vector.shape_cast %71 : vector<48xf32> to vector<48x1xf32>
    %73 = vector.broadcast %72 : vector<48x1xf32> to vector<48x48xf32>
    %74 = arith.subf %70, %73 : vector<48x48xf32>
    %75 = math.exp %74 : vector<48x48xf32>
    %cst_22 = arith.constant dense<0.000000e+00> : vector<48xf32>
    %76 = vector.multi_reduction <add>, %75, %cst_22 [1] : vector<48x48xf32> to vector<48xf32>
    %77 = vector.shape_cast %76 : vector<48xf32> to vector<48x1xf32>
    %78 = tpu.reciprocal %77 {approx = true} : vector<48x1xf32> -> vector<48x1xf32>
    %79 = vector.broadcast %78 : vector<48x1xf32> to vector<48x48xf32>
    %80 = arith.mulf %75, %79 : vector<48x48xf32>
    %81 = arith.truncf %80 : vector<48x48xf32> to vector<48x48xbf16>
    %82 = arith.truncf %68 : vector<48x8xf32> to vector<48x8xbf16>
    %cst_23 = arith.constant dense<0.000000e+00> : vector<48x8xf32>
    %83 = tpu.matmul %81, %82, %cst_23 {dimension_numbers = #tpu.dot_dimension_numbers<[1], [0], [0], [1], [0, 0, 1, 1], [], []>} : vector<48x48xbf16>, vector<48x8xbf16>, vector<48x8xf32> -> vector<48x8xf32>
    %84 = vector.extract_strided_slice %46 {offsets = [0, 16], sizes = [48, 8], strides = [1, 1]} : vector<48x96xf32> to vector<48x8xf32>
    %85 = vector.extract_strided_slice %46 {offsets = [0, 48], sizes = [48, 8], strides = [1, 1]} : vector<48x96xf32> to vector<48x8xf32>
    %86 = vector.extract_strided_slice %46 {offsets = [0, 80], sizes = [48, 8], strides = [1, 1]} : vector<48x96xf32> to vector<48x8xf32>
    %cst_24 = arith.constant dense<0.000000e+00> : vector<48x48xf32>
    %87 = tpu.matmul %84, %85, %cst_24 {dimension_numbers = #tpu.dot_dimension_numbers<[1], [1], [0], [0], [0, 0, 1, 0], [], []>} : vector<48x8xf32>, vector<48x8xf32>, vector<48x48xf32> -> vector<48x48xf32>
    %88 = arith.addf %87, %47 : vector<48x48xf32>
    %cst_25 = arith.constant dense<0xFF800000> : vector<48xf32>
    %89 = vector.multi_reduction <maximumf>, %88, %cst_25 [1] : vector<48x48xf32> to vector<48xf32>
    %90 = vector.shape_cast %89 : vector<48xf32> to vector<48x1xf32>
    %91 = vector.broadcast %90 : vector<48x1xf32> to vector<48x48xf32>
    %92 = arith.subf %88, %91 : vector<48x48xf32>
    %93 = math.exp %92 : vector<48x48xf32>
    %cst_26 = arith.constant dense<0.000000e+00> : vector<48xf32>
    %94 = vector.multi_reduction <add>, %93, %cst_26 [1] : vector<48x48xf32> to vector<48xf32>
    %95 = vector.shape_cast %94 : vector<48xf32> to vector<48x1xf32>
    %96 = tpu.reciprocal %95 {approx = true} : vector<48x1xf32> -> vector<48x1xf32>
    %97 = vector.broadcast %96 : vector<48x1xf32> to vector<48x48xf32>
    %98 = arith.mulf %93, %97 : vector<48x48xf32>
    %99 = arith.truncf %98 : vector<48x48xf32> to vector<48x48xbf16>
    %100 = arith.truncf %86 : vector<48x8xf32> to vector<48x8xbf16>
    %cst_27 = arith.constant dense<0.000000e+00> : vector<48x8xf32>
    %101 = tpu.matmul %99, %100, %cst_27 {dimension_numbers = #tpu.dot_dimension_numbers<[1], [0], [0], [1], [0, 0, 1, 1], [], []>} : vector<48x48xbf16>, vector<48x8xbf16>, vector<48x8xf32> -> vector<48x8xf32>
    %102 = vector.extract_strided_slice %46 {offsets = [0, 24], sizes = [48, 8], strides = [1, 1]} : vector<48x96xf32> to vector<48x8xf32>
    %103 = vector.extract_strided_slice %46 {offsets = [0, 56], sizes = [48, 8], strides = [1, 1]} : vector<48x96xf32> to vector<48x8xf32>
    %104 = vector.extract_strided_slice %46 {offsets = [0, 88], sizes = [48, 8], strides = [1, 1]} : vector<48x96xf32> to vector<48x8xf32>
    %cst_28 = arith.constant dense<0.000000e+00> : vector<48x48xf32>
    %105 = tpu.matmul %102, %103, %cst_28 {dimension_numbers = #tpu.dot_dimension_numbers<[1], [1], [0], [0], [0, 0, 1, 0], [], []>} : vector<48x8xf32>, vector<48x8xf32>, vector<48x48xf32> -> vector<48x48xf32>
    %106 = arith.addf %105, %47 : vector<48x48xf32>
    %cst_29 = arith.constant dense<0xFF800000> : vector<48xf32>
    %107 = vector.multi_reduction <maximumf>, %106, %cst_29 [1] : vector<48x48xf32> to vector<48xf32>
    %108 = vector.shape_cast %107 : vector<48xf32> to vector<48x1xf32>
    %109 = vector.broadcast %108 : vector<48x1xf32> to vector<48x48xf32>
    %110 = arith.subf %106, %109 : vector<48x48xf32>
    %111 = math.exp %110 : vector<48x48xf32>
    %cst_30 = arith.constant dense<0.000000e+00> : vector<48xf32>
    %112 = vector.multi_reduction <add>, %111, %cst_30 [1] : vector<48x48xf32> to vector<48xf32>
    %113 = vector.shape_cast %112 : vector<48xf32> to vector<48x1xf32>
    %114 = tpu.reciprocal %113 {approx = true} : vector<48x1xf32> -> vector<48x1xf32>
    %115 = vector.broadcast %114 : vector<48x1xf32> to vector<48x48xf32>
    %116 = arith.mulf %111, %115 : vector<48x48xf32>
    %117 = arith.truncf %116 : vector<48x48xf32> to vector<48x48xbf16>
    %118 = arith.truncf %104 : vector<48x8xf32> to vector<48x8xbf16>
    %cst_31 = arith.constant dense<0.000000e+00> : vector<48x8xf32>
    %119 = tpu.matmul %117, %118, %cst_31 {dimension_numbers = #tpu.dot_dimension_numbers<[1], [0], [0], [1], [0, 0, 1, 1], [], []>} : vector<48x48xbf16>, vector<48x8xbf16>, vector<48x8xf32> -> vector<48x8xf32>
    %120 = tpu.concatenate %65, %83, %101, %119 in 1 : vector<48x8xf32>, vector<48x8xf32>, vector<48x8xf32>, vector<48x8xf32> -> vector<48x32xf32>
    %121 = arith.truncf %120 : vector<48x32xf32> to vector<48x32xbf16>
    %c0_32 = arith.constant 0 : index
    %c0_33 = arith.constant 0 : index
    %c0_34 = arith.constant 0 : index
    %122 = vector.load %arg11[%c0_32, %c0_33, %c0_34] : memref<1x32x32xbf16, #tpu.memory_space<vmem>>, vector<1x32x32xbf16>
    %123 = vector.shape_cast %122 : vector<1x32x32xbf16> to vector<32x32xbf16>
    %cst_35 = arith.constant dense<0.000000e+00> : vector<48x32xf32>
    %124 = tpu.matmul %121, %123, %cst_35 {dimension_numbers = #tpu.dot_dimension_numbers<[1], [0], [0], [1], [0, 0, 1, 1], [], []>} : vector<48x32xbf16>, vector<32x32xbf16>, vector<48x32xf32> -> vector<48x32xf32>
    %125 = vector.broadcast %13 : vector<1x32xf32> to vector<48x32xf32>
    %126 = arith.addf %124, %125 : vector<48x32xf32>
    %127 = arith.addf %18, %126 : vector<48x32xf32>
    %cst_36 = arith.constant dense<0.000000e+00> : vector<48xf32>
    %128 = vector.multi_reduction <add>, %127, %cst_36 [1] : vector<48x32xf32> to vector<48xf32>
    %129 = vector.shape_cast %128 : vector<48xf32> to vector<48x1xf32>
    %cst_37 = arith.constant 3.200000e+01 : f32
    %130 = vector.broadcast %cst_37 : f32 to vector<48x1xf32>
    %131 = arith.divf %129, %130 : vector<48x1xf32>
    %132 = vector.broadcast %131 : vector<48x1xf32> to vector<48x32xf32>
    %133 = arith.subf %127, %132 : vector<48x32xf32>
    %134 = arith.mulf %133, %133 : vector<48x32xf32>
    %cst_38 = arith.constant dense<0.000000e+00> : vector<48xf32>
    %135 = vector.multi_reduction <add>, %134, %cst_38 [1] : vector<48x32xf32> to vector<48xf32>
    %136 = vector.shape_cast %135 : vector<48xf32> to vector<48x1xf32>
    %cst_39 = arith.constant 3.200000e+01 : f32
    %137 = vector.broadcast %cst_39 : f32 to vector<48x1xf32>
    %138 = arith.divf %136, %137 : vector<48x1xf32>
    %139 = vector.broadcast %131 : vector<48x1xf32> to vector<48x32xf32>
    %140 = arith.subf %127, %139 : vector<48x32xf32>
    %cst_40 = arith.constant 9.99999974E-6 : f32
    %141 = vector.broadcast %cst_40 : f32 to vector<48x1xf32>
    %142 = arith.addf %138, %141 : vector<48x1xf32>
    %143 = math.rsqrt %142 : vector<48x1xf32>
    %144 = vector.broadcast %143 : vector<48x1xf32> to vector<48x32xf32>
    %145 = arith.mulf %140, %144 : vector<48x32xf32>
    %146 = vector.broadcast %14 : vector<1x32xf32> to vector<48x32xf32>
    %147 = arith.mulf %145, %146 : vector<48x32xf32>
    %148 = vector.broadcast %15 : vector<1x32xf32> to vector<48x32xf32>
    %149 = arith.addf %147, %148 : vector<48x32xf32>
    %150 = arith.truncf %149 : vector<48x32xf32> to vector<48x32xbf16>
    %c0_41 = arith.constant 0 : index
    %c0_42 = arith.constant 0 : index
    %c0_43 = arith.constant 0 : index
    %151 = vector.load %arg12[%c0_41, %c0_42, %c0_43] : memref<1x32x128xbf16, #tpu.memory_space<vmem>>, vector<1x32x128xbf16>
    %152 = vector.shape_cast %151 : vector<1x32x128xbf16> to vector<32x128xbf16>
    %cst_44 = arith.constant dense<0.000000e+00> : vector<48x128xf32>
    %153 = tpu.matmul %150, %152, %cst_44 {dimension_numbers = #tpu.dot_dimension_numbers<[1], [0], [0], [1], [0, 0, 1, 1], [], []>} : vector<48x32xbf16>, vector<32x128xbf16>, vector<48x128xf32> -> vector<48x128xf32>
    %154 = vector.broadcast %16 : vector<1x128xf32> to vector<48x128xf32>
    %155 = arith.addf %153, %154 : vector<48x128xf32>
    %cst_45 = arith.constant 1.702000e+00 : f32
    %156 = vector.broadcast %cst_45 : f32 to vector<48x128xf32>
    %157 = arith.mulf %156, %155 : vector<48x128xf32>
    %158 = arith.negf %157 : vector<48x128xf32>
    %159 = math.exp %158 : vector<48x128xf32>
    %cst_46 = arith.constant 1.000000e+00 : f32
    %160 = vector.broadcast %cst_46 : f32 to vector<48x128xf32>
    %161 = arith.addf %160, %159 : vector<48x128xf32>
    %162 = arith.divf %160, %161 : vector<48x128xf32>
    %163 = arith.mulf %155, %162 : vector<48x128xf32>
    %164 = arith.truncf %163 : vector<48x128xf32> to vector<48x128xbf16>
    %c0_47 = arith.constant 0 : index
    %c0_48 = arith.constant 0 : index
    %c0_49 = arith.constant 0 : index
    %165 = vector.load %arg13[%c0_47, %c0_48, %c0_49] : memref<1x128x32xbf16, #tpu.memory_space<vmem>>, vector<1x128x32xbf16>
    %166 = vector.shape_cast %165 : vector<1x128x32xbf16> to vector<128x32xbf16>
    %cst_50 = arith.constant dense<0.000000e+00> : vector<48x32xf32>
    %167 = tpu.matmul %164, %166, %cst_50 {dimension_numbers = #tpu.dot_dimension_numbers<[1], [0], [0], [1], [0, 0, 1, 1], [], []>} : vector<48x128xbf16>, vector<128x32xbf16>, vector<48x32xf32> -> vector<48x32xf32>
    %168 = vector.broadcast %17 : vector<1x32xf32> to vector<48x32xf32>
    %169 = arith.addf %167, %168 : vector<48x32xf32>
    %170 = arith.addf %127, %169 : vector<48x32xf32>
    %c0_51 = arith.constant 0 : index
    %c0_52 = arith.constant 0 : index
    %171 = vector.load %arg19[%c0_51, %c0_52] : memref<48x32xf32, #tpu.memory_space<vmem>>, vector<48x32xf32>
    tpu.vector_store %arg19[%c0_51, %c0_52], %170 {strides = array<i32>} : memref<48x32xf32, #tpu.memory_space<vmem>>, vector<48x32xf32>,
    %c11_i32_53 = arith.constant 11 : i32
    %172 = arith.cmpi eq, %arg0, %c11_i32_53 : i32
    %173 = arith.extui %172 : i1 to i32
    %c0_i32_54 = arith.constant 0 : i32
    %174 = arith.cmpi ne, %173, %c0_i32_54 : i32
    scf.if %174 {
      %175 = vector.extract_strided_slice %170 {offsets = [0, 0], sizes = [1, 32], strides = [1, 1]} : vector<48x32xf32> to vector<1x32xf32>
      %176 = vector.extract_strided_slice %170 {offsets = [24, 0], sizes = [1, 32], strides = [1, 1]} : vector<48x32xf32> to vector<1x32xf32>
      %177 = tpu.concatenate %175, %176 in 0 : vector<1x32xf32>, vector<1x32xf32> -> vector<2x32xf32>
      %c0_55 = arith.constant 0 : index
      %c0_56 = arith.constant 0 : index
      %178 = vector.load %arg15[%c0_55, %c0_56] : memref<1x32xf32, #tpu.memory_space<vmem>>, vector<1x32xf32>
      %c0_57 = arith.constant 0 : index
      %c0_58 = arith.constant 0 : index
      %179 = vector.load %arg16[%c0_57, %c0_58] : memref<1x32xf32, #tpu.memory_space<vmem>>, vector<1x32xf32>
      %cst_59 = arith.constant dense<0.000000e+00> : vector<2xf32>
      %180 = vector.multi_reduction <add>, %177, %cst_59 [1] : vector<2x32xf32> to vector<2xf32>
      %181 = vector.shape_cast %180 : vector<2xf32> to vector<2x1xf32>
      %cst_60 = arith.constant 3.200000e+01 : f32
      %182 = vector.broadcast %cst_60 : f32 to vector<2x1xf32>
      %183 = arith.divf %181, %182 : vector<2x1xf32>
      %184 = vector.broadcast %183 : vector<2x1xf32> to vector<2x32xf32>
      %185 = arith.subf %177, %184 : vector<2x32xf32>
      %186 = arith.mulf %185, %185 : vector<2x32xf32>
      %cst_61 = arith.constant dense<0.000000e+00> : vector<2xf32>
      %187 = vector.multi_reduction <add>, %186, %cst_61 [1] : vector<2x32xf32> to vector<2xf32>
      %188 = vector.shape_cast %187 : vector<2xf32> to vector<2x1xf32>
      %cst_62 = arith.constant 3.200000e+01 : f32
      %189 = vector.broadcast %cst_62 : f32 to vector<2x1xf32>
      %190 = arith.divf %188, %189 : vector<2x1xf32>
      %191 = vector.broadcast %183 : vector<2x1xf32> to vector<2x32xf32>
      %192 = arith.subf %177, %191 : vector<2x32xf32>
      %cst_63 = arith.constant 9.99999974E-6 : f32
      %193 = vector.broadcast %cst_63 : f32 to vector<2x1xf32>
      %194 = arith.addf %190, %193 : vector<2x1xf32>
      %195 = math.rsqrt %194 : vector<2x1xf32>
      %196 = vector.broadcast %195 : vector<2x1xf32> to vector<2x32xf32>
      %197 = arith.mulf %192, %196 : vector<2x32xf32>
      %198 = vector.broadcast %178 : vector<1x32xf32> to vector<2x32xf32>
      %199 = arith.mulf %197, %198 : vector<2x32xf32>
      %200 = vector.broadcast %179 : vector<1x32xf32> to vector<2x32xf32>
      %201 = arith.addf %199, %200 : vector<2x32xf32>
      %c0_64 = arith.constant 0 : index
      %c0_65 = arith.constant 0 : index
      %202 = vector.load %arg17[%c0_64, %c0_65] : memref<32x16xf32, #tpu.memory_space<vmem>>, vector<32x16xf32>
      %cst_66 = arith.constant dense<0.000000e+00> : vector<2x16xf32>
      %203 = tpu.matmul %201, %202, %cst_66 {dimension_numbers = #tpu.dot_dimension_numbers<[1], [0], [0], [1], [0, 0, 1, 1], [], []>} : vector<2x32xf32>, vector<32x16xf32>, vector<2x16xf32> -> vector<2x16xf32>
      %c0_67 = arith.constant 0 : index
      %c0_68 = arith.constant 0 : index
      %204 = vector.load %arg18[%c0_67, %c0_68] : memref<2x16xf32, #tpu.memory_space<vmem>>, vector<2x16xf32>
      tpu.vector_store %arg18[%c0_67, %c0_68], %203 {strides = array<i32>} : memref<2x16xf32, #tpu.memory_space<vmem>>, vector<2x16xf32>,
    } else {
    }
    return
  }
  func.func @transform_0(%arg0: i32) -> (i32, i32) {
    %c0_i32 = arith.constant 0 : i32
    %c0_i32_0 = arith.constant 0 : i32
    %c0_i32_1 = arith.constant 0 : i32
    return %c0_i32, %c0_i32_0 : i32, i32
  }
  func.func @transform_1(%arg0: i32) -> (i32, i32) {
    %c0_i32 = arith.constant 0 : i32
    %c0_i32_0 = arith.constant 0 : i32
    %c0_i32_1 = arith.constant 0 : i32
    return %c0_i32, %c0_i32_0 : i32, i32
  }
  func.func @transform_2(%arg0: i32) -> (i32, i32) {
    %c0_i32 = arith.constant 0 : i32
    %c0_i32_0 = arith.constant 0 : i32
    %c0_i32_1 = arith.constant 0 : i32
    return %c0_i32, %c0_i32_0 : i32, i32
  }
  func.func @transform_3(%arg0: i32) -> (i32, i32) {
    %c0_i32 = arith.constant 0 : i32
    %c0_i32_0 = arith.constant 0 : i32
    %c0_i32_1 = arith.constant 0 : i32
    return %c0_i32, %c0_i32_0 : i32, i32
  }
  func.func @transform_4(%arg0: i32) -> (i32, i32) {
    %c0_i32 = arith.constant 0 : i32
    %c0_i32_0 = arith.constant 0 : i32
    %c0_i32_1 = arith.constant 0 : i32
    return %c0_i32, %c0_i32_0 : i32, i32
  }
  func.func @transform_5(%arg0: i32) -> (i32, i32) {
    %c0_i32 = arith.constant 0 : i32
    %c0_i32_0 = arith.constant 0 : i32
    %c0_i32_1 = arith.constant 0 : i32
    return %c0_i32, %c0_i32_0 : i32, i32
  }
  func.func @transform_6(%arg0: i32) -> (i32, i32) {
    %c0_i32 = arith.constant 0 : i32
    %c0_i32_0 = arith.constant 0 : i32
    %c0_i32_1 = arith.constant 0 : i32
    return %c0_i32, %c0_i32_0 : i32, i32
  }
  func.func @transform_7(%arg0: i32) -> (i32, i32, i32) {
    %c0_i32 = arith.constant 0 : i32
    %c0_i32_0 = arith.constant 0 : i32
    %c0_i32_1 = arith.constant 0 : i32
    %c0_i32_2 = arith.constant 0 : i32
    return %c0_i32, %c0_i32_0, %c0_i32_1 : i32, i32, i32
  }
  func.func @transform_8(%arg0: i32) -> (i32, i32) {
    %c0_i32 = arith.constant 0 : i32
    %c0_i32_0 = arith.constant 0 : i32
    %c0_i32_1 = arith.constant 0 : i32
    return %c0_i32, %c0_i32_0 : i32, i32
  }
  func.func @transform_9(%arg0: i32) -> (i32, i32, i32) {
    %c0_i32 = arith.constant 0 : i32
    %c0_i32_0 = arith.constant 0 : i32
    %c0_i32_1 = arith.constant 0 : i32
    return %arg0, %c0_i32, %c0_i32_0 : i32, i32, i32
  }
  func.func @transform_10(%arg0: i32) -> (i32, i32, i32) {
    %c0_i32 = arith.constant 0 : i32
    %c0_i32_0 = arith.constant 0 : i32
    %c0_i32_1 = arith.constant 0 : i32
    return %arg0, %c0_i32, %c0_i32_0 : i32, i32, i32
  }
  func.func @transform_11(%arg0: i32) -> (i32, i32, i32) {
    %c0_i32 = arith.constant 0 : i32
    %c0_i32_0 = arith.constant 0 : i32
    %c0_i32_1 = arith.constant 0 : i32
    return %arg0, %c0_i32, %c0_i32_0 : i32, i32, i32
  }
  func.func @transform_12(%arg0: i32) -> (i32, i32, i32) {
    %c0_i32 = arith.constant 0 : i32
    %c0_i32_0 = arith.constant 0 : i32
    %c0_i32_1 = arith.constant 0 : i32
    return %arg0, %c0_i32, %c0_i32_0 : i32, i32, i32
  }
  func.func @transform_13(%arg0: i32) -> (i32, i32, i32) {
    %c0_i32 = arith.constant 0 : i32
    %c0_i32_0 = arith.constant 0 : i32
    %c0_i32_1 = arith.constant 0 : i32
    return %arg0, %c0_i32, %c0_i32_0 : i32, i32, i32
  }
  func.func @transform_14(%arg0: i32) -> (i32, i32) {
    %c0_i32 = arith.constant 0 : i32
    %c0_i32_0 = arith.constant 0 : i32
    %c0_i32_1 = arith.constant 0 : i32
    return %c0_i32, %c0_i32_0 : i32, i32
  }
  func.func @transform_15(%arg0: i32) -> (i32, i32) {
    %c0_i32 = arith.constant 0 : i32
    %c0_i32_0 = arith.constant 0 : i32
    %c0_i32_1 = arith.constant 0 : i32
    return %c0_i32, %c0_i32_0 : i32, i32
  }
  func.func @transform_16(%arg0: i32) -> (i32, i32) {
    %c0_i32 = arith.constant 0 : i32
    %c0_i32_0 = arith.constant 0 : i32
    %c0_i32_1 = arith.constant 0 : i32
    return %c0_i32, %c0_i32_0 : i32, i32
  }
  func.func @transform_17(%arg0: i32) -> (i32, i32) {
    %c0_i32 = arith.constant 0 : i32
    %c0_i32_0 = arith.constant 0 : i32
    %c0_i32_1 = arith.constant 0 : i32
    return %c0_i32, %c0_i32_0 : i32, i32
  }
}

</mosaic_0001>

<llo_original>
// kernel: vpt_vit_forward.1
$region0: #{vpt_vit_forward.1}
  #allocation0 [shape = 'u32[]', space=smem, size = 0x4, offset = 0x4, fixed_abs, tag = 'smem constant byte address 0x4 - core index']
  #allocation1 [shape = 'u32[144,128]{1,0:T(1,128)}', space=vmem, size = 0x12000, scoped, tag = 'internal scratch']
  #allocation2 [shape = 'f32[48,32]{1,0:T(8,128)}', space=vmem, size = 0x6000, scoped, tag = 'scratch operand']
  %s0 = inlined_call_operand.vmem [shape: f32[32,48], index: 0, kind: input, shape index: {}]
  %s1 = inlined_call_operand.vmem [shape: f32[48,32], index: 1, kind: input, shape index: {}]
  %s2 = inlined_call_operand.vmem [shape: f32[1,32], index: 2, kind: input, shape index: {}]
  %s3 = inlined_call_operand.vmem [shape: f32[17,32], index: 3, kind: input, shape index: {}]
  %s4 = inlined_call_operand.vmem [shape: f32[1,32], index: 4, kind: input, shape index: {}]
  %s5 = inlined_call_operand.vmem [shape: f32[1,32], index: 5, kind: input, shape index: {}]
  %s6 = inlined_call_operand.vmem [shape: f32[2,32], index: 6, kind: input, shape index: {}]
  %s7 = inlined_call_operand.vmem [shape: f32[11,2,32], index: 7, kind: input, shape index: {}]
  %s8 = inlined_call_operand.vmem [shape: f32[48,48], index: 8, kind: input, shape index: {}]
  %s9 = inlined_call_operand.vmem [shape: bf16[12,32,96], index: 9, kind: input, shape index: {}]
  %s10 = inlined_call_operand.vmem [shape: bf16[12,32,32], index: 10, kind: input, shape index: {}]
  %s11 = inlined_call_operand.vmem [shape: bf16[12,32,128], index: 11, kind: input, shape index: {}]
  %s12 = inlined_call_operand.vmem [shape: bf16[12,128,32], index: 12, kind: input, shape index: {}]
  %s13 = inlined_call_operand.vmem [shape: f32[12,8,128], index: 13, kind: input, shape index: {}]
  %s14 = inlined_call_operand.vmem [shape: f32[1,32], index: 14, kind: input, shape index: {}]
  %s15 = inlined_call_operand.vmem [shape: f32[1,32], index: 15, kind: input, shape index: {}]
  %s16 = inlined_call_operand.vmem [shape: f32[32,16], index: 16, kind: input, shape index: {}]
  %s17 = inlined_call_operand.hbm [shape: f32[2,16], index: 17, kind: output, shape index: {}]
  %s18 = sld [smem:[#allocation0]]
  $region113: #{vpt_vit_forward.1} parent=0
    _
  %s20 = ssub.s32 1, %s18
  %s21 = scalar_select 0, %s20, %s18
  $region1: #{vpt_vit_forward.1} parent=0
    #allocation3 [shape = 'u8[1024]{0}', space=vmem, size = 0x400, scoped, tag = 'output window, operand 0, single buffered']
    #allocation4 [shape = 's32[2]{0}', space=sflag, size = 0x8, scoped, tag = 'scoped memory for vpt_vit_forward.1']
    %22 = vsyncpa [#allocation4], 0
    loop: start=0, step=1, limit=14
    $region2: #{vpt_vit_forward.1} parent=1 // loop_pre_header
      _
    $region3: #{vpt_vit_forward.1} parent=1 // loop_header
      %s24 = sphi 0, %s28
      %p25 = scmp.ge.s32.totalorder %s24, 14
      %s32 = sphi 0, %s32
      %s34 = sphi 0, %s32
      %s35 = sphi 0, %s34
      %s49 = sphi 0, %s35
      %s53 = sphi 0, %s53
      %s55 = sphi 0, %s53
      %s56 = sphi 0, %s55
      %s70 = sphi 0, %s56
      %s74 = sphi 0, %s74
      %s76 = sphi 0, %s74
      %s77 = sphi 0, %s76
      %s91 = sphi 0, %s77
      %s95 = sphi 0, %s95
      %s97 = sphi 0, %s95
      %s98 = sphi 0, %s97
      %s112 = sphi 0, %s98
      %s116 = sphi 0, %s116
      %s118 = sphi 0, %s116
      %s119 = sphi 0, %s118
      %s133 = sphi 0, %s119
      %s137 = sphi 0, %s137
      %s139 = sphi 0, %s137
      %s140 = sphi 0, %s139
      %s154 = sphi 0, %s140
      %s158 = sphi 0, %s158
      %s160 = sphi 0, %s158
      %s161 = sphi 0, %s160
      %s175 = sphi 0, %s161
      %s179 = sphi 0, %s179
      %s181 = sphi 0, %s179
      %s182 = sphi 0, %s181
      %s196 = sphi 0, %s182
      %s200 = sphi 0, %s200
      %s202 = sphi 0, %s200
      %s203 = sphi 0, %s202
      %s217 = sphi 0, %s203
      %s223 = sphi 0, %s225
      %s226 = sphi 0, %s223
      %s227 = sphi 0, %s226
      %s243 = sphi 0, %s227
      %s249 = sphi 0, %s251
      %s252 = sphi 0, %s249
      %s253 = sphi 0, %s252
      %s269 = sphi 0, %s253
      %s275 = sphi 0, %s277
      %s278 = sphi 0, %s275
      %s279 = sphi 0, %s278
      %s295 = sphi 0, %s279
      %s301 = sphi 0, %s303
      %s304 = sphi 0, %s301
      %s305 = sphi 0, %s304
      %s321 = sphi 0, %s305
      %s327 = sphi 0, %s329
      %s330 = sphi 0, %s327
      %s331 = sphi 0, %s330
      %s347 = sphi 0, %s331
      %s351 = sphi 0, %s351
      %s353 = sphi 0, %s351
      %s354 = sphi 0, %s353
      %s368 = sphi 0, %s354
      %s372 = sphi 0, %s372
      %s374 = sphi 0, %s372
      %s375 = sphi 0, %s374
      %s389 = sphi 0, %s375
      %s393 = sphi 0, %s393
      %s395 = sphi 0, %s393
      %s396 = sphi 0, %s395
      %s410 = sphi 0, %s396
      %s414 = sphi 0, %s414
      %s416 = sphi 0, %s414
      %s417 = sphi 0, %s416
      %s431 = sphi 0, %s417
    $region4: #{vpt_vit_forward.1} parent=1 // loop_header_branch
      %27 = sbr.rel (%p25) target = $region8
    $region5: #{vpt_vit_forward.1} parent=1 // loop_body
      %s29 = ssub.s32 %s24, 1
      %s30 = ssub.s32 %s24, 2
      %s31 = sadd.s32 %s24, 1
      %s33 = sadd.s32 %s32, 1
      %p36 = scmp.eq.s32.totalorder %s24, 11
      %p37 = scmp.ne.s32.totalorder %s32, %s34
      %p38 = scmp.eq.s32.totalorder %s24, 0
      %p39 = por %p37, %p38
      %p40 = scmp.ne.s32.totalorder %s32, %s34
      %p41 = scmp.eq.s32.totalorder %s29, 11
      %p42 = por %p40, %p41
      %p43 = scmp.ne.s32.totalorder %s34, %s35
      %p44 = scmp.eq.s32.totalorder %s29, 0
      %p45 = por %p43, %p44
      %p46 = scmp.ne.s32.totalorder %s34, %s35
      %p47 = scmp.eq.s32.totalorder %s30, 11
      %p48 = por %p46, %p47
      %p50 = scmp.ne.s32.totalorder %s35, %s49
      %p51 = scmp.eq.s32.totalorder %s30, 0
      %p52 = por %p50, %p51
      %s54 = sadd.s32 %s53, 1
      %p57 = scmp.eq.s32.totalorder %s24, 11
      %p58 = scmp.ne.s32.totalorder %s53, %s55
      %p59 = scmp.eq.s32.totalorder %s24, 0
      %p60 = por %p58, %p59
      %p61 = scmp.ne.s32.totalorder %s53, %s55
      %p62 = scmp.eq.s32.totalorder %s29, 11
      %p63 = por %p61, %p62
      %p64 = scmp.ne.s32.totalorder %s55, %s56
      %p65 = scmp.eq.s32.totalorder %s29, 0
      %p66 = por %p64, %p65
      %p67 = scmp.ne.s32.totalorder %s55, %s56
      %p68 = scmp.eq.s32.totalorder %s30, 11
      %p69 = por %p67, %p68
      %p71 = scmp.ne.s32.totalorder %s56, %s70
      %p72 = scmp.eq.s32.totalorder %s30, 0
      %p73 = por %p71, %p72
      %s75 = sadd.s32 %s74, 1
      %p78 = scmp.eq.s32.totalorder %s24, 11
      %p79 = scmp.ne.s32.totalorder %s74, %s76
      %p80 = scmp.eq.s32.totalorder %s24, 0
      %p81 = por %p79, %p80
      %p82 = scmp.ne.s32.totalorder %s74, %s76
      %p83 = scmp.eq.s32.totalorder %s29, 11
      %p84 = por %p82, %p83
      %p85 = scmp.ne.s32.totalorder %s76, %s77
      %p86 = scmp.eq.s32.totalorder %s29, 0
      %p87 = por %p85, %p86
      %p88 = scmp.ne.s32.totalorder %s76, %s77
      %p89 = scmp.eq.s32.totalorder %s30, 11
      %p90 = por %p88, %p89
      %p92 = scmp.ne.s32.totalorder %s77, %s91
      %p93 = scmp.eq.s32.totalorder %s30, 0
      %p94 = por %p92, %p93
      %s96 = sadd.s32 %s95, 1
      %p99 = scmp.eq.s32.totalorder %s24, 11
      %p100 = scmp.ne.s32.totalorder %s95, %s97
      %p101 = scmp.eq.s32.totalorder %s24, 0
      %p102 = por %p100, %p101
      %p103 = scmp.ne.s32.totalorder %s95, %s97
      %p104 = scmp.eq.s32.totalorder %s29, 11
      %p105 = por %p103, %p104
      %p106 = scmp.ne.s32.totalorder %s97, %s98
      %p107 = scmp.eq.s32.totalorder %s29, 0
      %p108 = por %p106, %p107
      %p109 = scmp.ne.s32.totalorder %s97, %s98
      %p110 = scmp.eq.s32.totalorder %s30, 11
      %p111 = por %p109, %p110
      %p113 = scmp.ne.s32.totalorder %s98, %s112
      %p114 = scmp.eq.s32.totalorder %s30, 0
      %p115 = por %p113, %p114
      %s117 = sadd.s32 %s116, 1
      %p120 = scmp.eq.s32.totalorder %s24, 11
      %p121 = scmp.ne.s32.totalorder %s116, %s118
      %p122 = scmp.eq.s32.totalorder %s24, 0
      %p123 = por %p121, %p122
      %p124 = scmp.ne.s32.totalorder %s116, %s118
      %p125 = scmp.eq.s32.totalorder %s29, 11
      %p126 = por %p124, %p125
      %p127 = scmp.ne.s32.totalorder %s118, %s119
      %p128 = scmp.eq.s32.totalorder %s29, 0
      %p129 = por %p127, %p128
      %p130 = scmp.ne.s32.totalorder %s118, %s119
      %p131 = scmp.eq.s32.totalorder %s30, 11
      %p132 = por %p130, %p131
      %p134 = scmp.ne.s32.totalorder %s119, %s133
      %p135 = scmp.eq.s32.totalorder %s30, 0
      %p136 = por %p134, %p135
      %s138 = sadd.s32 %s137, 1
      %p141 = scmp.eq.s32.totalorder %s24, 11
      %p142 = scmp.ne.s32.totalorder %s137, %s139
      %p143 = scmp.eq.s32.totalorder %s24, 0
      %p144 = por %p142, %p143
      %p145 = scmp.ne.s32.totalorder %s137, %s139
      %p146 = scmp.eq.s32.totalorder %s29, 11
      %p147 = por %p145, %p146
      %p148 = scmp.ne.s32.totalorder %s139, %s140
      %p149 = scmp.eq.s32.totalorder %s29, 0
      %p150 = por %p148, %p149
      %p151 = scmp.ne.s32.totalorder %s139, %s140
      %p152 = scmp.eq.s32.totalorder %s30, 11
      %p153 = por %p151, %p152
      %p155 = scmp.ne.s32.totalorder %s140, %s154
      %p156 = scmp.eq.s32.totalorder %s30, 0
      %p157 = por %p155, %p156
      %s159 = sadd.s32 %s158, 1
      %p162 = scmp.eq.s32.totalorder %s24, 11
      %p163 = scmp.ne.s32.totalorder %s158, %s160
      %p164 = scmp.eq.s32.totalorder %s24, 0
      %p165 = por %p163, %p164
      %p166 = scmp.ne.s32.totalorder %s158, %s160
      %p167 = scmp.eq.s32.totalorder %s29, 11
      %p168 = por %p166, %p167
      %p169 = scmp.ne.s32.totalorder %s160, %s161
      %p170 = scmp.eq.s32.totalorder %s29, 0
      %p171 = por %p169, %p170
      %p172 = scmp.ne.s32.totalorder %s160, %s161
      %p173 = scmp.eq.s32.totalorder %s30, 11
      %p174 = por %p172, %p173
      %p176 = scmp.ne.s32.totalorder %s161, %s175
      %p177 = scmp.eq.s32.totalorder %s30, 0
      %p178 = por %p176, %p177
      %s180 = sadd.s32 %s179, 1
      %p183 = scmp.eq.s32.totalorder %s24, 11
      %p184 = scmp.ne.s32.totalorder %s179, %s181
      %p185 = scmp.eq.s32.totalorder %s24, 0
      %p186 = por %p184, %p185
      %p187 = scmp.ne.s32.totalorder %s179, %s181
      %p188 = scmp.eq.s32.totalorder %s29, 11
      %p189 = por %p187, %p188
      %p190 = scmp.ne.s32.totalorder %s181, %s182
      %p191 = scmp.eq.s32.totalorder %s29, 0
      %p192 = por %p190, %p191
      %p193 = scmp.ne.s32.totalorder %s181, %s182
      %p194 = scmp.eq.s32.totalorder %s30, 11
      %p195 = por %p193, %p194
      %p197 = scmp.ne.s32.totalorder %s182, %s196
      %p198 = scmp.eq.s32.totalorder %s30, 0
      %p199 = por %p197, %p198
      %s201 = sadd.s32 %s200, 1
      %p204 = scmp.eq.s32.totalorder %s24, 11
      %p205 = scmp.ne.s32.totalorder %s200, %s202
      %p206 = scmp.eq.s32.totalorder %s24, 0
      %p207 = por %p205, %p206
      %p208 = scmp.ne.s32.totalorder %s200, %s202
      %p209 = scmp.eq.s32.totalorder %s29, 11
      %p210 = por %p208, %p209
      %p211 = scmp.ne.s32.totalorder %s202, %s203
      %p212 = scmp.eq.s32.totalorder %s29, 0
      %p213 = por %p211, %p212
      %p214 = scmp.ne.s32.totalorder %s202, %s203
      %p215 = scmp.eq.s32.totalorder %s30, 11
      %p216 = por %p214, %p215
      %p218 = scmp.ne.s32.totalorder %s203, %s217
      %p219 = scmp.eq.s32.totalorder %s30, 0
      %p220 = por %p218, %p219
      %s221 = ssub.s32 %s24, %s31
      %p222 = scmp.eq.s32.totalorder %s221, 0
      %s224 = sadd.s32 %s223, 1
      %s225 = scalar_select %p222, %s223, %s224
      %p228 = pneg %p222
      %p229 = scmp.eq.s32.totalorder %s24, 11
      %p230 = por %p228, %p229
      %p231 = scmp.ne.s32.totalorder %s223, %s226
      %p232 = scmp.eq.s32.totalorder %s24, 0
      %p233 = por %p231, %p232
      %p234 = scmp.ne.s32.totalorder %s223, %s226
      %p235 = scmp.eq.s32.totalorder %s29, 11
      %p236 = por %p234, %p235
      %p237 = scmp.ne.s32.totalorder %s226, %s227
      %p238 = scmp.eq.s32.totalorder %s29, 0
      %p239 = por %p237, %p238
      %p240 = scmp.ne.s32.totalorder %s226, %s227
      %p241 = scmp.eq.s32.totalorder %s30, 11
      %p242 = por %p240, %p241
      %p244 = scmp.ne.s32.totalorder %s227, %s243
      %p245 = scmp.eq.s32.totalorder %s30, 0
      %p246 = por %p244, %p245
      %s247 = ssub.s32 %s24, %s31
      %p248 = scmp.eq.s32.totalorder %s247, 0
      %s250 = sadd.s32 %s249, 1
      %s251 = scalar_select %p248, %s249, %s250
      %p254 = pneg %p248
      %p255 = scmp.eq.s32.totalorder %s24, 11
      %p256 = por %p254, %p255
      %p257 = scmp.ne.s32.totalorder %s249, %s252
      %p258 = scmp.eq.s32.totalorder %s24, 0
      %p259 = por %p257, %p258
      %p260 = scmp.ne.s32.totalorder %s249, %s252
      %p261 = scmp.eq.s32.totalorder %s29, 11
      %p262 = por %p260, %p261
      %p263 = scmp.ne.s32.totalorder %s252, %s253
      %p264 = scmp.eq.s32.totalorder %s29, 0
      %p265 = por %p263, %p264
      %p266 = scmp.ne.s32.totalorder %s252, %s253
      %p267 = scmp.eq.s32.totalorder %s30, 11
      %p268 = por %p266, %p267
      %p270 = scmp.ne.s32.totalorder %s253, %s269
      %p271 = scmp.eq.s32.totalorder %s30, 0
      %p272 = por %p270, %p271
      %s273 = ssub.s32 %s24, %s31
      %p274 = scmp.eq.s32.totalorder %s273, 0
      %s276 = sadd.s32 %s275, 1
      %s277 = scalar_select %p274, %s275, %s276
      %p280 = pneg %p274
      %p281 = scmp.eq.s32.totalorder %s24, 11
      %p282 = por %p280, %p281
      %p283 = scmp.ne.s32.totalorder %s275, %s278
      %p284 = scmp.eq.s32.totalorder %s24, 0
      %p285 = por %p283, %p284
      %p286 = scmp.ne.s32.totalorder %s275, %s278
      %p287 = scmp.eq.s32.totalorder %s29, 11
      %p288 = por %p286, %p287
      %p289 = scmp.ne.s32.totalorder %s278, %s279
      %p290 = scmp.eq.s32.totalorder %s29, 0
      %p291 = por %p289, %p290
      %p292 = scmp.ne.s32.totalorder %s278, %s279
      %p293 = scmp.eq.s32.totalorder %s30, 11
      %p294 = por %p292, %p293
      %p296 = scmp.ne.s32.totalorder %s279, %s295
      %p297 = scmp.eq.s32.totalorder %s30, 0
      %p298 = por %p296, %p297
      %s299 = ssub.s32 %s24, %s31
      %p300 = scmp.eq.s32.totalorder %s299, 0
      %s302 = sadd.s32 %s301, 1
      %s303 = scalar_select %p300, %s301, %s302
      %p306 = pneg %p300
      %p307 = scmp.eq.s32.totalorder %s24, 11
      %p308 = por %p306, %p307
      %p309 = scmp.ne.s32.totalorder %s301, %s304
      %p310 = scmp.eq.s32.totalorder %s24, 0
      %p311 = por %p309, %p310
      %p312 = scmp.ne.s32.totalorder %s301, %s304
      %p313 = scmp.eq.s32.totalorder %s29, 11
      %p314 = por %p312, %p313
      %p315 = scmp.ne.s32.totalorder %s304, %s305
      %p316 = scmp.eq.s32.totalorder %s29, 0
      %p317 = por %p315, %p316
      %p318 = scmp.ne.s32.totalorder %s304, %s305
      %p319 = scmp.eq.s32.totalorder %s30, 11
      %p320 = por %p318, %p319
      %p322 = scmp.ne.s32.totalorder %s305, %s321
      %p323 = scmp.eq.s32.totalorder %s30, 0
      %p324 = por %p322, %p323
      %s325 = ssub.s32 %s24, %s31
      %p326 = scmp.eq.s32.totalorder %s325, 0
      %s328 = sadd.s32 %s327, 1
      %s329 = scalar_select %p326, %s327, %s328
      %p332 = pneg %p326
      %p333 = scmp.eq.s32.totalorder %s24, 11
      %p334 = por %p332, %p333
      %p335 = scmp.ne.s32.totalorder %s327, %s330
      %p336 = scmp.eq.s32.totalorder %s24, 0
      %p337 = por %p335, %p336
      %p338 = scmp.ne.s32.totalorder %s327, %s330
      %p339 = scmp.eq.s32.totalorder %s29, 11
      %p340 = por %p338, %p339
      %p341 = scmp.ne.s32.totalorder %s330, %s331
      %p342 = scmp.eq.s32.totalorder %s29, 0
      %p343 = por %p341, %p342
      %p344 = scmp.ne.s32.totalorder %s330, %s331
      %p345 = scmp.eq.s32.totalorder %s30, 11
      %p346 = por %p344, %p345
      %p348 = scmp.ne.s32.totalorder %s331, %s347
      %p349 = scmp.eq.s32.totalorder %s30, 0
      %p350 = por %p348, %p349
      %s352 = sadd.s32 %s351, 1
      %p355 = scmp.eq.s32.totalorder %s24, 11
      %p356 = scmp.ne.s32.totalorder %s351, %s353
      %p357 = scmp.eq.s32.totalorder %s24, 0
      %p358 = por %p356, %p357
      %p359 = scmp.ne.s32.totalorder %s351, %s353
      %p360 = scmp.eq.s32.totalorder %s29, 11
      %p361 = por %p359, %p360
      %p362 = scmp.ne.s32.totalorder %s353, %s354
      %p363 = scmp.eq.s32.totalorder %s29, 0
      %p364 = por %p362, %p363
      %p365 = scmp.ne.s32.totalorder %s353, %s354
      %p366 = scmp.eq.s32.totalorder %s30, 11
      %p367 = por %p365, %p366
      %p369 = scmp.ne.s32.totalorder %s354, %s368
      %p370 = scmp.eq.s32.totalorder %s30, 0
      %p371 = por %p369, %p370
      %s373 = sadd.s32 %s372, 1
      %p376 = scmp.eq.s32.totalorder %s24, 11
      %p377 = scmp.ne.s32.totalorder %s372, %s374
      %p378 = scmp.eq.s32.totalorder %s24, 0
      %p379 = por %p377, %p378
      %p380 = scmp.ne.s32.totalorder %s372, %s374
      %p381 = scmp.eq.s32.totalorder %s29, 11
      %p382 = por %p380, %p381
      %p383 = scmp.ne.s32.totalorder %s374, %s375
      %p384 = scmp.eq.s32.totalorder %s29, 0
      %p385 = por %p383, %p384
      %p386 = scmp.ne.s32.totalorder %s374, %s375
      %p387 = scmp.eq.s32.totalorder %s30, 11
      %p388 = por %p386, %p387
      %p390 = scmp.ne.s32.totalorder %s375, %s389
      %p391 = scmp.eq.s32.totalorder %s30, 0
      %p392 = por %p390, %p391
      %s394 = sadd.s32 %s393, 1
      %p397 = scmp.eq.s32.totalorder %s24, 11
      %p398 = scmp.ne.s32.totalorder %s393, %s395
      %p399 = scmp.eq.s32.totalorder %s24, 0
      %p400 = por %p398, %p399
      %p401 = scmp.ne.s32.totalorder %s393, %s395
      %p402 = scmp.eq.s32.totalorder %s29, 11
      %p403 = por %p401, %p402
      %p404 = scmp.ne.s32.totalorder %s395, %s396
      %p405 = scmp.eq.s32.totalorder %s29, 0
      %p406 = por %p404, %p405
      %p407 = scmp.ne.s32.totalorder %s395, %s396
      %p408 = scmp.eq.s32.totalorder %s30, 11
      %p409 = por %p407, %p408
      %p411 = scmp.ne.s32.totalorder %s396, %s410
      %p412 = scmp.eq.s32.totalorder %s30, 0
      %p413 = por %p411, %p412
      %s415 = sadd.s32 %s414, 1
      %p418 = scmp.eq.s32.totalorder %s24, 11
      %p419 = scmp.ne.s32.totalorder %s414, %s416
      %p420 = scmp.eq.s32.totalorder %s24, 0
      %p421 = por %p419, %p420
      %p422 = scmp.ne.s32.totalorder %s414, %s416
      %p423 = scmp.eq.s32.totalorder %s29, 11
      %p424 = por %p422, %p423
      %p425 = scmp.ne.s32.totalorder %s416, %s417
      %p426 = scmp.eq.s32.totalorder %s29, 0
      %p427 = por %p425, %p426
      %p428 = scmp.ne.s32.totalorder %s416, %s417
      %p429 = scmp.eq.s32.totalorder %s30, 11
      %p430 = por %p428, %p429
      %p432 = scmp.ne.s32.totalorder %s417, %s431
      %p433 = scmp.eq.s32.totalorder %s30, 0
      %p434 = por %p432, %p433
      %p435 = scmp.le.s32.totalorder 1, %s24
      %p436 = scmp.lt.s32.totalorder %s24, 13
      %p437 = pnand %p435, %p436
      %p438 = pneg %p437
      // Predicated region
      $region9: #{vpt_vit_forward.1} parent=5 // pred_check
        _
      $region10: #{vpt_vit_forward.1} parent=5 // pred_check_branch
        %440 = sbr.rel (%p437) target = $region12
      $region11: #{vpt_vit_forward.1} parent=5 // pred_region
        %s441 = ssub.s32 %s24, 1
        // Predicated region
        $region13: #{vpt_vit_forward.1} parent=11 // pred_check
          %p442 = pneg %p45
        $region14: #{vpt_vit_forward.1} parent=11 // pred_check_branch
          %444 = sbr.rel (%p442) target = $region16
        $region15: #{vpt_vit_forward.1} parent=11 // pred_region
          _
        $region16: #{vpt_vit_forward.1} parent=11 // pred_fallthru
          _
        // Predicated region
        $region17: #{vpt_vit_forward.1} parent=11 // pred_check
          %p445 = pneg %p66
        $region18: #{vpt_vit_forward.1} parent=11 // pred_check_branch
          %447 = sbr.rel (%p445) target = $region20
        $region19: #{vpt_vit_forward.1} parent=11 // pred_region
          _
        $region20: #{vpt_vit_forward.1} parent=11 // pred_fallthru
          _
        // Predicated region
        $region21: #{vpt_vit_forward.1} parent=11 // pred_check
          %p448 = pneg %p87
        $region22: #{vpt_vit_forward.1} parent=11 // pred_check_branch
          %450 = sbr.rel (%p448) target = $region24
        $region23: #{vpt_vit_forward.1} parent=11 // pred_region
          _
        $region24: #{vpt_vit_forward.1} parent=11 // pred_fallthru
          _
        // Predicated region
        $region25: #{vpt_vit_forward.1} parent=11 // pred_check
          %p451 = pneg %p108
        $region26: #{vpt_vit_forward.1} parent=11 // pred_check_branch
          %453 = sbr.rel (%p451) target = $region28
        $region27: #{vpt_vit_forward.1} parent=11 // pred_region
          _
        $region28: #{vpt_vit_forward.1} parent=11 // pred_fallthru
          _
        // Predicated region
        $region29: #{vpt_vit_forward.1} parent=11 // pred_check
          %p454 = pneg %p129
        $region30: #{vpt_vit_forward.1} parent=11 // pred_check_branch
          %456 = sbr.rel (%p454) target = $region32
        $region31: #{vpt_vit_forward.1} parent=11 // pred_region
          _
        $region32: #{vpt_vit_forward.1} parent=11 // pred_fallthru
          _
        // Predicated region
        $region33: #{vpt_vit_forward.1} parent=11 // pred_check
          %p457 = pneg %p150
        $region34: #{vpt_vit_forward.1} parent=11 // pred_check_branch
          %459 = sbr.rel (%p457) target = $region36
        $region35: #{vpt_vit_forward.1} parent=11 // pred_region
          _
        $region36: #{vpt_vit_forward.1} parent=11 // pred_fallthru
          _
        // Predicated region
        $region37: #{vpt_vit_forward.1} parent=11 // pred_check
          %p460 = pneg %p171
        $region38: #{vpt_vit_forward.1} parent=11 // pred_check_branch
          %462 = sbr.rel (%p460) target = $region40
        $region39: #{vpt_vit_forward.1} parent=11 // pred_region
          _
        $region40: #{vpt_vit_forward.1} parent=11 // pred_fallthru
          _
        // Predicated region
        $region41: #{vpt_vit_forward.1} parent=11 // pred_check
          %p463 = pneg %p192
        $region42: #{vpt_vit_forward.1} parent=11 // pred_check_branch
          %465 = sbr.rel (%p463) target = $region44
        $region43: #{vpt_vit_forward.1} parent=11 // pred_region
          _
        $region44: #{vpt_vit_forward.1} parent=11 // pred_fallthru
          _
        // Predicated region
        $region45: #{vpt_vit_forward.1} parent=11 // pred_check
          %p466 = pneg %p213
        $region46: #{vpt_vit_forward.1} parent=11 // pred_check_branch
          %468 = sbr.rel (%p466) target = $region48
        $region47: #{vpt_vit_forward.1} parent=11 // pred_region
          _
        $region48: #{vpt_vit_forward.1} parent=11 // pred_fallthru
          _
        // Predicated region
        $region49: #{vpt_vit_forward.1} parent=11 // pred_check
          %p469 = pneg %p364
        $region50: #{vpt_vit_forward.1} parent=11 // pred_check_branch
          %471 = sbr.rel (%p469) target = $region52
        $region51: #{vpt_vit_forward.1} parent=11 // pred_region
          _
        $region52: #{vpt_vit_forward.1} parent=11 // pred_fallthru
          _
        // Predicated region
        $region53: #{vpt_vit_forward.1} parent=11 // pred_check
          %p472 = pneg %p385
        $region54: #{vpt_vit_forward.1} parent=11 // pred_check_branch
          %474 = sbr.rel (%p472) target = $region56
        $region55: #{vpt_vit_forward.1} parent=11 // pred_region
          _
        $region56: #{vpt_vit_forward.1} parent=11 // pred_fallthru
          _
        // Predicated region
        $region57: #{vpt_vit_forward.1} parent=11 // pred_check
          %p475 = pneg %p406
        $region58: #{vpt_vit_forward.1} parent=11 // pred_check_branch
          %477 = sbr.rel (%p475) target = $region60
        $region59: #{vpt_vit_forward.1} parent=11 // pred_region
          _
        $region60: #{vpt_vit_forward.1} parent=11 // pred_fallthru
          _
      $region12: #{vpt_vit_forward.1} parent=5 // pred_fallthru
        _
      %p478 = scmp.lt.s32.totalorder %s24, 12
      // Predicated region
      $region61: #{vpt_vit_forward.1} parent=5 // pred_check
        %p479 = pneg %p478
      $region62: #{vpt_vit_forward.1} parent=5 // pred_check_branch
        %481 = sbr.rel (%p479) target = $region64
      $region63: #{vpt_vit_forward.1} parent=5 // pred_region
        // Predicated region
        $region65: #{vpt_vit_forward.1} parent=63 // pred_check
          %p482 = pneg %p233
        $region66: #{vpt_vit_forward.1} parent=63 // pred_check_branch
          %484 = sbr.rel (%p482) target = $region68
        $region67: #{vpt_vit_forward.1} parent=63 // pred_region
          %p485 = scmp.lt.s32.totalorder %s24, 11
          %s486 = scalar_select %p485, %s24, 11
          %s487 = smul.addr %s486, 4
          %s488 = smul.addr %s487, 4
          %s489 = scalar_lea.vmem %s9, %s488
        $region68: #{vpt_vit_forward.1} parent=63 // pred_fallthru
          _
        // Predicated region
        $region69: #{vpt_vit_forward.1} parent=63 // pred_check
          %p490 = pneg %p259
        $region70: #{vpt_vit_forward.1} parent=63 // pred_check_branch
          %492 = sbr.rel (%p490) target = $region72
        $region71: #{vpt_vit_forward.1} parent=63 // pred_region
          %p493 = scmp.lt.s32.totalorder %s24, 11
          %s494 = scalar_select %p493, %s24, 11
          %s495 = smul.addr %s494, 4
          %s496 = smul.addr %s495, 4
          %s497 = scalar_lea.vmem %s10, %s496
        $region72: #{vpt_vit_forward.1} parent=63 // pred_fallthru
          _
        // Predicated region
        $region73: #{vpt_vit_forward.1} parent=63 // pred_check
          %p498 = pneg %p285
        $region74: #{vpt_vit_forward.1} parent=63 // pred_check_branch
          %500 = sbr.rel (%p498) target = $region76
        $region75: #{vpt_vit_forward.1} parent=63 // pred_region
          %p501 = scmp.lt.s32.totalorder %s24, 11
          %s502 = scalar_select %p501, %s24, 11
          %s503 = smul.addr %s502, 4
          %s504 = smul.addr %s503, 4
          %s505 = scalar_lea.vmem %s11, %s504
        $region76: #{vpt_vit_forward.1} parent=63 // pred_fallthru
          _
        // Predicated region
        $region77: #{vpt_vit_forward.1} parent=63 // pred_check
          %p506 = pneg %p311
        $region78: #{vpt_vit_forward.1} parent=63 // pred_check_branch
          %508 = sbr.rel (%p506) target = $region80
        $region79: #{vpt_vit_forward.1} parent=63 // pred_region
          %p509 = scmp.lt.s32.totalorder %s24, 11
          %s510 = scalar_select %p509, %s24, 11
          %s511 = smul.addr %s510, 16
          %s512 = smul.addr %s511, 4
          %s513 = scalar_lea.vmem %s12, %s512
        $region80: #{vpt_vit_forward.1} parent=63 // pred_fallthru
          _
        // Predicated region
        $region81: #{vpt_vit_forward.1} parent=63 // pred_check
          %p514 = pneg %p337
        $region82: #{vpt_vit_forward.1} parent=63 // pred_check_branch
          %516 = sbr.rel (%p514) target = $region84
        $region83: #{vpt_vit_forward.1} parent=63 // pred_region
          %p517 = scmp.lt.s32.totalorder %s24, 11
          %s518 = scalar_select %p517, %s24, 11
          %s519 = smul.addr %s518, 8
          %s520 = scalar_lea.vmem %s13, %s519
        $region84: #{vpt_vit_forward.1} parent=63 // pred_fallthru
          _
      $region64: #{vpt_vit_forward.1} parent=5 // pred_fallthru
        _
      %p521 = scmp.le.s32.totalorder 1, %s24
      %p522 = scmp.lt.s32.totalorder %s24, 13
      %p523 = pnand %p521, %p522
      %p524 = pneg %p523
      // Predicated region
      $region85: #{vpt_vit_forward.1} parent=5 // pred_check
        _
      $region86: #{vpt_vit_forward.1} parent=5 // pred_check_branch
        %526 = sbr.rel (%p523) target = $region88
      $region87: #{vpt_vit_forward.1} parent=5 // pred_region
        %s527 = ssub.s32 %s24, 1
        %p528 = pneg %p45
        %p529 = pneg %p42
        %p530 = pneg %p66
        %p531 = pneg %p63
        %p532 = pneg %p87
        %p533 = pneg %p84
        %p534 = pneg %p108
        %p535 = pneg %p105
        %p536 = pneg %p129
        %p537 = pneg %p126
        %p538 = pneg %p150
        %p539 = pneg %p147
        %p540 = pneg %p171
        %p541 = pneg %p168
        %p542 = pneg %p192
        %p543 = pneg %p189
        %p544 = pneg %p213
        %p545 = pneg %p210
        %p546 = scmp.lt.s32.totalorder %s29, 11
        %s547 = scalar_select %p546, %s29, 11
        %s548 = smul.addr %s547, 4
        %s549 = smul.addr %s548, 4
        %s550 = scalar_lea.vmem %s9, %s549
        %p551 = pneg %p239
        %p552 = pneg %p236
        %p553 = scmp.lt.s32.totalorder %s29, 11
        %s554 = scalar_select %p553, %s29, 11
        %s555 = smul.addr %s554, 4
        %s556 = smul.addr %s555, 4
        %s557 = scalar_lea.vmem %s10, %s556
        %p558 = pneg %p265
        %p559 = pneg %p262
        %p560 = scmp.lt.s32.totalorder %s29, 11
        %s561 = scalar_select %p560, %s29, 11
        %s562 = smul.addr %s561, 4
        %s563 = smul.addr %s562, 4
        %s564 = scalar_lea.vmem %s11, %s563
        %p565 = pneg %p291
        %p566 = pneg %p288
        %p567 = scmp.lt.s32.totalorder %s29, 11
        %s568 = scalar_select %p567, %s29, 11
        %s569 = smul.addr %s568, 16
        %s570 = smul.addr %s569, 4
        %s571 = scalar_lea.vmem %s12, %s570
        %p572 = pneg %p317
        %p573 = pneg %p314
        %p574 = scmp.lt.s32.totalorder %s29, 11
        %s575 = scalar_select %p574, %s29, 11
        %s576 = smul.addr %s575, 8
        %s577 = scalar_lea.vmem %s13, %s576
        %p578 = pneg %p343
        %p579 = pneg %p340
        %p580 = pneg %p364
        %p581 = pneg %p361
        %p582 = pneg %p385
        %p583 = pneg %p382
        %p584 = pneg %p406
        %p585 = pneg %p403
        %p586 = pneg %p427
        %p587 = pneg %p424
        %p588 = scmp.lt.s32.totalorder %s29, 11
        %s589 = scalar_select %p588, %s29, 11
        %s590 = smul.addr %s589, 4
        %s591 = smul.addr %s590, 4
        %s592 = scalar_lea.vmem %s9, %s591
        %p593 = scmp.lt.s32.totalorder %s29, 11
        %s594 = scalar_select %p593, %s29, 11
        %s595 = smul.addr %s594, 4
        %s596 = smul.addr %s595, 4
        %s597 = scalar_lea.vmem %s10, %s596
        %p598 = scmp.lt.s32.totalorder %s29, 11
        %s599 = scalar_select %p598, %s29, 11
        %s600 = smul.addr %s599, 4
        %s601 = smul.addr %s600, 4
        %s602 = scalar_lea.vmem %s11, %s601
        %p603 = scmp.lt.s32.totalorder %s29, 11
        %s604 = scalar_select %p603, %s29, 11
        %s605 = smul.addr %s604, 16
        %s606 = smul.addr %s605, 4
        %s607 = scalar_lea.vmem %s12, %s606
        %p608 = scmp.lt.s32.totalorder %s29, 11
        %s609 = scalar_select %p608, %s29, 11
        %s610 = smul.addr %s609, 8
        %s611 = scalar_lea.vmem %s13, %s610
        %p613 = scmp.eq.s32.totalorder %s29, 0
        // Predicated region
        $region89: #{vpt_vit_forward.1} parent=87 // pred_check
          %p614 = pneg %p613
        $region90: #{vpt_vit_forward.1} parent=87 // pred_check_branch
          %616 = sbr.rel (%p614) target = $region92
        $region91: #{vpt_vit_forward.1} parent=87 // pred_region
          %v617 = vld [vmem:[%s4] sm:$0x1]
          %v618 = vld [vmem:[%s5] sm:$0x1]
          %v619 = vld [vmem:[%s3] sm:$0xff]
          %v620 = vld [vmem:[%s3 + $0x8] sm:$0xff]
          %v621 = vld [vmem:[%s3 + $0x10] sm:$0x1]
          %v622 = vld [vmem:[%s0] sm:$0xff]
          %v623 = vld [vmem:[%s0 + $0x8] sm:$0xff]
          %v624 = vld [vmem:[%s0 + $0x10] sm:$0xff]
          %v625 = vld [vmem:[%s0 + $0x18] sm:$0xff]
          %v626 = vld [vmem:[%s1] sm:$0xff]
          %v627 = vld [vmem:[%s1 + $0x8] sm:$0xff]
          %v628 = vld [vmem:[%s1 + $0x10] sm:$0xff]
          %v629 = vld [vmem:[%s1 + $0x18] sm:$0xff]
          %v630 = vld [vmem:[%s1 + $0x20] sm:$0xff]
          %v631 = vld [vmem:[%s1 + $0x28] sm:$0xff]
          %vm632 = vcmask 392192
          %v634 = vsel %vm632, %v622, 0
          %v637 = vsel %vm632, %v623, 0
          %v640 = vsel %vm632, %v624, 0
          %v643 = vsel %vm632, %v625, 0
          %645 = vmatprep.subr.mxu0 0.0
          %646 = vmatpush1.msra.mxu0 %v626
          %647 = vmatprep.subr.mxu0 0.0
          %648 = vmatpush1.msra.mxu0 %v627
          %649 = vmatprep.subr.mxu0 0.0
          %650 = vmatpush1.msra.mxu0 %v628
          %651 = vmatprep.subr.mxu0 0.0
          %652 = vmatpush1.msra.mxu0 %v629
          %653 = vmatprep.subr.mxu0 0.0
          %654 = vmatpush1.msra.mxu0 %v630
          %655 = vmatprep.subr.mxu0 0.0
          %656 = vmatpush1.msra.mxu0 %v631
          %657 = vmatprep.subr.mxu0 0.0
          %658 = vmatpush1.msra.mxu0 0.0
          %659 = vmatprep.subr.mxu0 0.0
          %660 = vmatpush1.msra.mxu0 0.0
          %661 = vmatprep.subr.mxu0 0.0
          %662 = vmatpush1.msra.mxu0 0.0
          %663 = vmatprep.subr.mxu0 0.0
          %664 = vmatpush1.msra.mxu0 0.0
          %665 = vmatprep.subr.mxu0 0.0
          %666 = vmatpush1.msra.mxu0 0.0
          %667 = vmatprep.subr.mxu0 0.0
          %668 = vmatpush1.msra.mxu0 0.0
          %669 = vmatprep.subr.mxu0 0.0
          %670 = vmatpush1.msra.mxu0 0.0
          %671 = vmatprep.subr.mxu0 0.0
          %672 = vmatpush1.msra.mxu0 0.0
          %673 = vmatprep.subr.mxu0 0.0
          %674 = vmatpush1.msra.mxu0 0.0
          %675 = vmatprep.subr.mxu0 0.0
          %676 = vmatpush1.msra.mxu0 0.0
          %677 = vmatprep.subr.mxu0 0.0
          %678 = vmatpush1.msra.mxu0 0.0
          %679 = vmatprep.subr.mxu0 0.0
          %680 = vmatpush1.msra.mxu0 0.0
          %681 = vmatprep.subr.mxu0 0.0
          %682 = vmatpush1.msra.mxu0 0.0
          %683 = vmatprep.subr.mxu0 0.0
          %684 = vmatpush1.msra.mxu0 0.0
          %685 = vmatprep.subr.mxu0 0.0
          %686 = vmatpush1.msra.mxu0 0.0
          %687 = vmatprep.subr.mxu0 0.0
          %688 = vmatpush1.msra.mxu0 0.0
          %689 = vmatprep.subr.mxu0 0.0
          %690 = vmatpush1.msra.mxu0 0.0
          %691 = vmatprep.subr.mxu0 0.0
          %692 = vmatpush1.msra.mxu0 0.0
          %693 = vmatprep.subr.mxu0 0.0
          %694 = vmatpush1.msra.mxu0 0.0
          %695 = vmatprep.subr.mxu0 0.0
          %696 = vmatpush1.msra.mxu0 0.0
          %697 = vmatprep.subr.mxu0 0.0
          %698 = vmatpush1.msra.mxu0 0.0
          %699 = vmatprep.subr.mxu0 0.0
          %700 = vmatpush1.msra.mxu0 0.0
          %701 = vmatprep.subr.mxu0 0.0
          %702 = vmatpush1.msra.mxu0 0.0
          %703 = vmatprep.subr.mxu0 0.0
          %704 = vmatpush1.msra.mxu0 0.0
          %705 = vmatprep.subr.mxu0 0.0
          %706 = vmatpush1.msra.mxu0 0.0
          %707 = vmatprep.subr.mxu0 0.0
          %708 = vmatpush1.msra.mxu0 0.0
          %709 = vmatprep.mubr.f32.mxu0 0.0
          %710 = vmatmul.mubr.f32.gmra.mrb[0].mxu0 %v634
          %v711 = vpop.f32.mrb[0].mxu0
          %v712 = vadd.f32 0.0, %v711
          %v713 = vpop.f32.mrb[0].mxu0
          %714 = vmatprep.mubr.f32.mxu0 0.0
          %715 = vmatmul.mubr.f32.gmra.mrb[0].mxu0 %v637
          %v716 = vpop.f32.mrb[0].mxu0
          %v717 = vadd.f32 0.0, %v716
          %v718 = vpop.f32.mrb[0].mxu0
          %719 = vmatprep.mubr.f32.mxu0 0.0
          %720 = vmatmul.mubr.f32.gmra.mrb[0].mxu0 %v640
          %v721 = vpop.f32.mrb[0].mxu0
          %v722 = vadd.f32 0.0, %v721
          %v723 = vpop.f32.mrb[0].mxu0
          %724 = vmatprep.mubr.f32.mxu0 0.0
          %725 = vmatmul.mubr.f32.gmra.mrb[0].mxu0 %v643
          %v726 = vpop.f32.mrb[0].mxu0
          %v727 = vadd.f32 0.0, %v726
          %v728 = vpop.f32.mrb[0].mxu0
          %729 = vdwg.mxu0
          %v730 = vld [vmem:[%s2] sm:$0x1]
          %v731 = vadd.f32 %v730, %v619
          %vm732 = vcmask 253952
          %v733 = vsel %vm732, %v731, 0.0
          %734 = vadd.xlane.f32.xlu0 %v733
          %v735 = vpop.xlane.xlu0 %734
          %v736 = vrcp.pop 32.0
          %v737 = vmul.f32 %v735, %v736
          %v738 = vsub.f32 %v731, %v737
          %v739 = vmul.f32 %v738, %v738
          %v740 = vsel %vm732, %v739, 0.0
          %741 = vadd.xlane.f32.xlu0 %v740
          %v742 = vpop.xlane.xlu0 %741
          %v743 = vmul.f32 %v742, %v736
          %v744 = vadd.f32 %v743, 1e-05
          %v745 = vrsqrt.pop %v744
          %v746 = vmul.f32 %v738, %v745
          %v747 = vmul.f32 %v746, %v617
          %v748 = vadd.f32 %v747, %v618
          %v749 = vld [vmem:[%s6] sm:$0x3]
          %vm753 = vcmask 1046528
          %v754 = vrot.slane %v619, 1
          %v755 = vrot.slane %v620, 1
          %v756 = vsel %vm753, %v754, %v755
          %v757 = vrot.slane %v621, 1
          %v758 = vsel %vm753, %v755, %v757
          %v761 = vadd.f32 %v712, %v756
          %v762 = vadd.f32 %v717, %v758
          %vm763 = vcmask 261120
          %v764 = vsel %vm763, %v761, 0.0
          %765 = vadd.xlane.f32.xlu0 %v764
          %v766 = vpop.xlane.xlu0 %765
          %v767 = vsel %vm763, %v762, 0.0
          %768 = vadd.xlane.f32.xlu0 %v767
          %v769 = vpop.xlane.xlu0 %768
          %v770 = vmul.f32 %v766, %v736
          %v771 = vmul.f32 %v769, %v736
          %v772 = vsub.f32 %v761, %v770
          %v773 = vsub.f32 %v762, %v771
          %v774 = vmul.f32 %v772, %v772
          %v775 = vmul.f32 %v773, %v773
          %v776 = vsel %vm763, %v774, 0.0
          %777 = vadd.xlane.f32.xlu0 %v776
          %v778 = vpop.xlane.xlu0 %777
          %v779 = vsel %vm763, %v775, 0.0
          %780 = vadd.xlane.f32.xlu0 %v779
          %v781 = vpop.xlane.xlu0 %780
          %v782 = vmul.f32 %v778, %v736
          %v783 = vmul.f32 %v781, %v736
          %v784 = vadd.f32 %v782, 1e-05
          %v785 = vadd.f32 %v783, 1e-05
          %v786 = vrsqrt.pop %v784
          %v787 = vrsqrt.pop %v785
          %v788 = vmul.f32 %v772, %v786
          %v789 = vmul.f32 %v773, %v787
          %v791 = vlaneseq
          %v792 = vshrl.u32 %v791, 7
          %v793 = vsub.s32 0, %v792
          %v794 = vrot.slane %v617, %v793
          %v796 = vmul.f32 %v788, %v794
          %v797 = vmul.f32 %v789, %v794
          %v799 = vlaneseq
          %v800 = vshrl.u32 %v799, 7
          %v801 = vsub.s32 0, %v800
          %v802 = vrot.slane %v618, %v801
          %v804 = vadd.f32 %v796, %v802
          %v805 = vadd.f32 %v797, %v802
          %806 = vst.msk [vmem:[#allocation2] sm:$0x1] %vm732, %v748
          %vm807 = vcmask 254976
          %808 = vst.msk [vmem:[#allocation2 + $0x1] sm:$0x3] %vm807, %v749
          %809 = vst.msk [vmem:[#allocation2 + $0x3] sm:$0xff] %vm763, %v804
          %810 = vst.msk [vmem:[#allocation2 + $0xb] sm:$0xff] %vm763, %v805
          %vm811 = vcmask 258048
          %812 = vst.msk [vmem:[#allocation2 + $0x13] sm:$0x1f] %vm811, 0.0
          %v813 = vadd.f32 %v722, %v756
          %v814 = vadd.f32 %v727, %v758
          %v815 = vsel %vm763, %v813, 0.0
          %816 = vadd.xlane.f32.xlu0 %v815
          %v817 = vpop.xlane.xlu0 %816
          %v818 = vsel %vm763, %v814, 0.0
          %819 = vadd.xlane.f32.xlu0 %v818
          %v820 = vpop.xlane.xlu0 %819
          %v821 = vmul.f32 %v817, %v736
          %v822 = vmul.f32 %v820, %v736
          %v823 = vsub.f32 %v813, %v821
          %v824 = vsub.f32 %v814, %v822
          %v825 = vmul.f32 %v823, %v823
          %v826 = vmul.f32 %v824, %v824
          %v827 = vsel %vm763, %v825, 0.0
          %828 = vadd.xlane.f32.xlu0 %v827
          %v829 = vpop.xlane.xlu0 %828
          %v830 = vsel %vm763, %v826, 0.0
          %831 = vadd.xlane.f32.xlu0 %v830
          %v832 = vpop.xlane.xlu0 %831
          %v833 = vmul.f32 %v829, %v736
          %v834 = vmul.f32 %v832, %v736
          %v835 = vadd.f32 %v833, 1e-05
          %v836 = vadd.f32 %v834, 1e-05
          %v837 = vrsqrt.pop %v835
          %v838 = vrsqrt.pop %v836
          %v839 = vmul.f32 %v823, %v837
          %v840 = vmul.f32 %v824, %v838
          %v841 = vmul.f32 %v839, %v794
          %v842 = vmul.f32 %v840, %v794
          %v843 = vadd.f32 %v841, %v802
          %v844 = vadd.f32 %v842, %v802
          %845 = vst.msk [vmem:[#allocation2 + $0x18] sm:$0x1] %vm732, %v748
          %846 = vst.msk [vmem:[#allocation2 + $0x19] sm:$0x3] %vm807, %v749
          %847 = vst.msk [vmem:[#allocation2 + $0x1b] sm:$0xff] %vm763, %v843
          %848 = vst.msk [vmem:[#allocation2 + $0x23] sm:$0xff] %vm763, %v844
          %849 = vst.msk [vmem:[#allocation2 + $0x2b] sm:$0x1f] %vm811, 0.0
        $region92: #{vpt_vit_forward.1} parent=87 // pred_fallthru
          _
        %p850 = scmp.ge.s32.totalorder %s29, 1
        %p851 = scmp.le.s32.totalorder %s29, 11
        %p852 = pnand %p850, %p851
        %p853 = pneg %p852
        // Predicated region
        $region93: #{vpt_vit_forward.1} parent=87 // pred_check
          _
        $region94: #{vpt_vit_forward.1} parent=87 // pred_check_branch
          %855 = sbr.rel (%p852) target = $region96
        $region95: #{vpt_vit_forward.1} parent=87 // pred_region
          %s856 = ssub.s32 %s29, 1
          %s857 = smul.u32 %s856, 2
          %s858 = scalar_lea.vmem %s7, %s857
          %v859 = vld [vmem:[%s858] sm:$0x3]
          %vm860 = vcmask 254976
          %861 = vst.msk [vmem:[#allocation2 + $0x1] sm:$0x3] %vm860, %v859
          %862 = vst.msk [vmem:[#allocation2 + $0x19] sm:$0x3] %vm860, %v859
        $region96: #{vpt_vit_forward.1} parent=87 // pred_fallthru
          _
        %v863 = vld [vmem:[%s611] sm:$0xff]
        %v864 = vld [vmem:[#allocation2] sm:$0xff]
        %v865 = vld [vmem:[#allocation2 + $0x8] sm:$0xff]
        %v866 = vld [vmem:[#allocation2 + $0x10] sm:$0xff]
        %v867 = vld [vmem:[#allocation2 + $0x18] sm:$0xff]
        %v868 = vld [vmem:[#allocation2 + $0x20] sm:$0xff]
        %v869 = vld [vmem:[#allocation2 + $0x28] sm:$0xff]
        %vm870 = vcmask 261120
        %v871 = vsel %vm870, %v864, 0.0
        %872 = vadd.xlane.f32.xlu0 %v871
        %v873 = vpop.xlane.xlu0 %872
        %v874 = vsel %vm870, %v865, 0.0
        %875 = vadd.xlane.f32.xlu0 %v874
        %v876 = vpop.xlane.xlu0 %875
        %v877 = vsel %vm870, %v866, 0.0
        %878 = vadd.xlane.f32.xlu0 %v877
        %v879 = vpop.xlane.xlu0 %878
        %v880 = vsel %vm870, %v867, 0.0
        %881 = vadd.xlane.f32.xlu0 %v880
        %v882 = vpop.xlane.xlu0 %881
        %v883 = vsel %vm870, %v868, 0.0
        %884 = vadd.xlane.f32.xlu0 %v883
        %v885 = vpop.xlane.xlu0 %884
        %v886 = vsel %vm870, %v869, 0.0
        %887 = vadd.xlane.f32.xlu0 %v886
        %v888 = vpop.xlane.xlu0 %887
        %v889 = vrcp.pop 32.0
        %v890 = vmul.f32 %v873, %v889
        %v891 = vmul.f32 %v876, %v889
        %v892 = vmul.f32 %v879, %v889
        %v893 = vmul.f32 %v882, %v889
        %v894 = vmul.f32 %v885, %v889
        %v895 = vmul.f32 %v888, %v889
        %v896 = vsub.f32 %v864, %v890
        %v897 = vsub.f32 %v865, %v891
        %v898 = vsub.f32 %v866, %v892
        %v899 = vsub.f32 %v867, %v893
        %v900 = vsub.f32 %v868, %v894
        %v901 = vsub.f32 %v869, %v895
        %v902 = vmul.f32 %v896, %v896
        %v903 = vmul.f32 %v897, %v897
        %v904 = vmul.f32 %v898, %v898
        %v905 = vmul.f32 %v899, %v899
        %v906 = vmul.f32 %v900, %v900
        %v907 = vmul.f32 %v901, %v901
        %v908 = vsel %vm870, %v902, 0.0
        %909 = vadd.xlane.f32.xlu0 %v908
        %v910 = vpop.xlane.xlu0 %909
        %v911 = vsel %vm870, %v903, 0.0
        %912 = vadd.xlane.f32.xlu0 %v911
        %v913 = vpop.xlane.xlu0 %912
        %v914 = vsel %vm870, %v904, 0.0
        %915 = vadd.xlane.f32.xlu0 %v914
        %v916 = vpop.xlane.xlu0 %915
        %v917 = vsel %vm870, %v905, 0.0
        %918 = vadd.xlane.f32.xlu0 %v917
        %v919 = vpop.xlane.xlu0 %918
        %v920 = vsel %vm870, %v906, 0.0
        %921 = vadd.xlane.f32.xlu0 %v920
        %v922 = vpop.xlane.xlu0 %921
        %v923 = vsel %vm870, %v907, 0.0
        %924 = vadd.xlane.f32.xlu0 %v923
        %v925 = vpop.xlane.xlu0 %924
        %v926 = vmul.f32 %v910, %v889
        %v927 = vmul.f32 %v913, %v889
        %v928 = vmul.f32 %v916, %v889
        %v929 = vmul.f32 %v919, %v889
        %v930 = vmul.f32 %v922, %v889
        %v931 = vmul.f32 %v925, %v889
        %v932 = vadd.f32 %v926, 1e-05
        %v933 = vadd.f32 %v927, 1e-05
        %v934 = vadd.f32 %v928, 1e-05
        %v935 = vadd.f32 %v929, 1e-05
        %v936 = vadd.f32 %v930, 1e-05
        %v937 = vadd.f32 %v931, 1e-05
        %v938 = vrsqrt.pop %v932
        %v939 = vrsqrt.pop %v933
        %v940 = vrsqrt.pop %v934
        %v941 = vrsqrt.pop %v935
        %v942 = vrsqrt.pop %v936
        %v943 = vrsqrt.pop %v937
        %v944 = vmul.f32 %v896, %v938
        %v945 = vmul.f32 %v897, %v939
        %v946 = vmul.f32 %v898, %v940
        %v947 = vmul.f32 %v899, %v941
        %v948 = vmul.f32 %v900, %v942
        %v949 = vmul.f32 %v901, %v943
        %v950 = vlaneseq
        %v951 = vshrl.u32 %v950, 7
        %v952 = vsub.s32 0, %v951
        %v953 = vrot.slane %v863, %v952
        %v954 = vmul.f32 %v944, %v953
        %v955 = vmul.f32 %v945, %v953
        %v956 = vmul.f32 %v946, %v953
        %v957 = vmul.f32 %v947, %v953
        %v958 = vmul.f32 %v948, %v953
        %v959 = vmul.f32 %v949, %v953
        %v960 = vlaneseq
        %v961 = vshrl.u32 %v960, 7
        %v962 = vsub.s32 1, %v961
        %v963 = vrot.slane %v863, %v962
        %v964 = vadd.f32 %v954, %v963
        %v965 = vadd.f32 %v955, %v963
        %v966 = vadd.f32 %v956, %v963
        %v967 = vadd.f32 %v957, %v963
        %v968 = vadd.f32 %v958, %v963
        %v969 = vadd.f32 %v959, %v963
        %v970 = vpack.c.bf16 %v965, %v964
        %v971 = vpack.c.bf16 %v967, %v966
        %v972 = vpack.c.bf16 %v969, %v968
        %v973 = vld [vmem:[%s592] sm:$0xf]
        %v974 = vld [vmem:[%s592 + $0x4] sm:$0xf]
        %v975 = vld [vmem:[%s592 + $0x8] sm:$0xf]
        %v976 = vld [vmem:[%s592 + $0xc] sm:$0xf]
        %v977 = vlaneseq
        %v978 = vshrl.u32 %v977, 7
        %v979 = vsub.s32 2, %v978
        %v980 = vrot.slane %v863, %v979
        %v985 = vunpack.c.l.b16 %v973
        %v986 = vunpack.c.l.b16 %v974
        %v987 = vunpack.c.l.b16 %v975
        %v988 = vunpack.c.l.b16 %v976
        %v989 = vpack.c.b16 %v986, %v985
        %v990 = vpack.c.b16 %v988, %v987
        %v994 = vsel %vm870, %v970, 0
        %v997 = vsel %vm870, %v971, 0
        %v1000 = vsel %vm870, %v972, 0
        %1002 = vmatprep.subr.bf16.mxu0 0
        %1003 = vmatpush1.bf16.msra.mxu0 %v989
        %1004 = vmatprep.subr.bf16.mxu0 0
        %1005 = vmatpush1.bf16.msra.mxu0 %v990
        %1006 = vmatprep.subr.bf16.mxu0 0
        %1007 = vmatpush1.bf16.msra.mxu0 0
        %1008 = vmatprep.subr.bf16.mxu0 0
        %1009 = vmatpush1.bf16.msra.mxu0 0
        %1010 = vmatprep.subr.bf16.mxu0 0
        %1011 = vmatpush1.bf16.msra.mxu0 0
        %1012 = vmatprep.subr.bf16.mxu0 0
        %1013 = vmatpush1.bf16.msra.mxu0 0
        %1014 = vmatprep.subr.bf16.mxu0 0
        %1015 = vmatpush1.bf16.msra.mxu0 0
        %1016 = vmatprep.subr.bf16.mxu0 0
        %1017 = vmatpush1.bf16.msra.mxu0 0
        %1018 = vmatprep.subr.bf16.mxu0 0
        %1019 = vmatpush1.bf16.msra.mxu0 0
        %1020 = vmatprep.subr.bf16.mxu0 0
        %1021 = vmatpush1.bf16.msra.mxu0 0
        %1022 = vmatprep.subr.bf16.mxu0 0
        %1023 = vmatpush1.bf16.msra.mxu0 0
        %1024 = vmatprep.subr.bf16.mxu0 0
        %1025 = vmatpush1.bf16.msra.mxu0 0
        %1026 = vmatprep.subr.bf16.mxu0 0
        %1027 = vmatpush1.bf16.msra.mxu0 0
        %1028 = vmatprep.subr.bf16.mxu0 0
        %1029 = vmatpush1.bf16.msra.mxu0 0
        %1030 = vmatprep.subr.bf16.mxu0 0
        %1031 = vmatpush1.bf16.msra.mxu0 0
        %1032 = vmatprep.subr.bf16.mxu0 0
        %1033 = vmatpush1.bf16.msra.mxu0 0
        %1034 = vmatprep.mubr.bf16.mxu0 0
        %1035 = vmatmul.mubr.bf16.gmra.mrb[0].mxu0 %v994
        %v1036 = vpop.f32.mrb[0].mxu0
        %v1037 = vadd.f32 %v980, %v1036
        %v1038 = vpop.f32.mrb[0].mxu0
        %v1039 = vpop.f32.mrb[0].mxu0
        %v1040 = vadd.f32 %v980, %v1039
        %v1041 = vpop.f32.mrb[0].mxu0
        %1042 = vmatprep.mubr.bf16.mxu0 0
        %1043 = vmatmul.mubr.bf16.gmra.mrb[0].mxu0 %v997
        %v1044 = vpop.f32.mrb[0].mxu0
        %v1045 = vadd.f32 %v980, %v1044
        %v1046 = vpop.f32.mrb[0].mxu0
        %v1047 = vpop.f32.mrb[0].mxu0
        %v1048 = vadd.f32 %v980, %v1047
        %v1049 = vpop.f32.mrb[0].mxu0
        %1050 = vmatprep.mubr.bf16.mxu0 0
        %1051 = vmatmul.mubr.bf16.gmra.mrb[0].mxu0 %v1000
        %v1052 = vpop.f32.mrb[0].mxu0
        %v1053 = vadd.f32 %v980, %v1052
        %v1054 = vpop.f32.mrb[0].mxu0
        %v1055 = vpop.f32.mrb[0].mxu0
        %v1056 = vadd.f32 %v980, %v1055
        %v1057 = vpop.f32.mrb[0].mxu0
        %1058 = vdwg.mxu0
        %v1059 = vld [vmem:[%s8] sm:$0xff]
        %v1060 = vld [vmem:[%s8 + $0x8] sm:$0xff]
        %v1061 = vld [vmem:[%s8 + $0x10] sm:$0xff]
        %v1062 = vld [vmem:[%s8 + $0x18] sm:$0xff]
        %v1063 = vld [vmem:[%s8 + $0x20] sm:$0xff]
        %v1064 = vld [vmem:[%s8 + $0x28] sm:$0xff]
        %1071 = vrot.lane.b32.xlu0 %v1037, 96
        %v1072 = vpop.permute.xlu0 %1071
        %1073 = vrot.lane.b32.xlu0 %v1040, 96
        %v1074 = vpop.permute.xlu0 %1073
        %1075 = vrot.lane.b32.xlu0 %v1045, 96
        %v1076 = vpop.permute.xlu0 %1075
        %1077 = vrot.lane.b32.xlu0 %v1048, 96
        %v1078 = vpop.permute.xlu0 %1077
        %1079 = vrot.lane.b32.xlu0 %v1053, 96
        %v1080 = vpop.permute.xlu0 %1079
        %1081 = vrot.lane.b32.xlu0 %v1056, 96
        %v1082 = vpop.permute.xlu0 %1081
        %vm1083 = vcmask 64512
        %v1084 = vsel %vm1083, %v1037, 0
        %v1086 = vsel %vm1083, %v1040, 0
        %v1088 = vsel %vm1083, %v1045, 0
        %v1090 = vsel %vm1083, %v1048, 0
        %v1092 = vsel %vm1083, %v1053, 0
        %v1094 = vsel %vm1083, %v1056, 0
        %v1096 = vsel %vm1083, %v1072, 0
        %v1098 = vsel %vm1083, %v1074, 0
        %v1100 = vsel %vm1083, %v1076, 0
        %v1102 = vsel %vm1083, %v1078, 0
        %v1104 = vsel %vm1083, %v1080, 0
        %v1106 = vsel %vm1083, %v1082, 0
        %1108 = vmatprep.subr.mxu0 0.0
        %1109 = vmatpush1.xpose.msra.mxu0 %v1096
        %1110 = vmatprep.subr.mxu0 0.0
        %1111 = vmatpush1.xpose.msra.mxu0 %v1098
        %1112 = vmatprep.subr.mxu0 0.0
        %1113 = vmatpush1.xpose.msra.mxu0 %v1100
        %1114 = vmatprep.subr.mxu0 0.0
        %1115 = vmatpush1.xpose.msra.mxu0 %v1102
        %1116 = vmatprep.subr.mxu0 0.0
        %1117 = vmatpush1.xpose.msra.mxu0 %v1104
        %1118 = vmatprep.subr.mxu0 0.0
        %1119 = vmatpush1.xpose.msra.mxu0 %v1106
        %1120 = vmatprep.subr.mxu0 0.0
        %1121 = vmatpush1.xpose.msra.mxu0 0.0
        %1122 = vmatprep.subr.mxu0 0.0
        %1123 = vmatpush1.xpose.msra.mxu0 0.0
        %1124 = vmatprep.subr.mxu0 0.0
        %1125 = vmatpush1.xpose.msra.mxu0 0.0
        %1126 = vmatprep.subr.mxu0 0.0
        %1127 = vmatpush1.xpose.msra.mxu0 0.0
        %1128 = vmatprep.subr.mxu0 0.0
        %1129 = vmatpush1.xpose.msra.mxu0 0.0
        %1130 = vmatprep.subr.mxu0 0.0
        %1131 = vmatpush1.xpose.msra.mxu0 0.0
        %1132 = vmatprep.subr.mxu0 0.0
        %1133 = vmatpush1.xpose.msra.mxu0 0.0
        %1134 = vmatprep.subr.mxu0 0.0
        %1135 = vmatpush1.xpose.msra.mxu0 0.0
        %1136 = vmatprep.subr.mxu0 0.0
        %1137 = vmatpush1.xpose.msra.mxu0 0.0
        %1138 = vmatprep.subr.mxu0 0.0
        %1139 = vmatpush1.xpose.msra.mxu0 0.0
        %1140 = vmatprep.subr.mxu0 0.0
        %1141 = vmatpush1.xpose.msra.mxu0 0.0
        %1142 = vmatprep.subr.mxu0 0.0
        %1143 = vmatpush1.xpose.msra.mxu0 0.0
        %1144 = vmatprep.subr.mxu0 0.0
        %1145 = vmatpush1.xpose.msra.mxu0 0.0
        %1146 = vmatprep.subr.mxu0 0.0
        %1147 = vmatpush1.xpose.msra.mxu0 0.0
        %1148 = vmatprep.subr.mxu0 0.0
        %1149 = vmatpush1.xpose.msra.mxu0 0.0
        %1150 = vmatprep.subr.mxu0 0.0
        %1151 = vmatpush1.xpose.msra.mxu0 0.0
        %1152 = vmatprep.subr.mxu0 0.0
        %1153 = vmatpush1.xpose.msra.mxu0 0.0
        %1154 = vmatprep.subr.mxu0 0.0
        %1155 = vmatpush1.xpose.msra.mxu0 0.0
        %1156 = vmatprep.subr.mxu0 0.0
        %1157 = vmatpush1.xpose.msra.mxu0 0.0
        %1158 = vmatprep.subr.mxu0 0.0
        %1159 = vmatpush1.xpose.msra.mxu0 0.0
        %1160 = vmatprep.subr.mxu0 0.0
        %1161 = vmatpush1.xpose.msra.mxu0 0.0
        %1162 = vmatprep.subr.mxu0 0.0
        %1163 = vmatpush1.xpose.msra.mxu0 0.0
        %1164 = vmatprep.subr.mxu0 0.0
        %1165 = vmatpush1.xpose.msra.mxu0 0.0
        %1166 = vmatprep.subr.mxu0 0.0
        %1167 = vmatpush1.xpose.msra.mxu0 0.0
        %1168 = vmatprep.subr.mxu0 0.0
        %1169 = vmatpush1.xpose.msra.mxu0 0.0
        %1170 = vmatprep.subr.mxu0 0.0
        %1171 = vmatpush1.xpose.msra.mxu0 0.0
        %1172 = vmatprep.mubr.f32.mxu0 0.0
        %1173 = vmatmul.mubr.f32.gmra.mrb[0].mxu0 %v1084
        %v1174 = vpop.f32.mrb[0].mxu0
        %v1175 = vadd.f32 %v1059, %v1174
        %v1176 = vpop.f32.mrb[0].mxu0
        %1177 = vmatprep.mubr.f32.mxu0 0.0
        %1178 = vmatmul.mubr.f32.gmra.mrb[0].mxu0 %v1086
        %v1179 = vpop.f32.mrb[0].mxu0
        %v1180 = vadd.f32 %v1060, %v1179
        %v1181 = vpop.f32.mrb[0].mxu0
        %1182 = vmatprep.mubr.f32.mxu0 0.0
        %1183 = vmatmul.mubr.f32.gmra.mrb[0].mxu0 %v1088
        %v1184 = vpop.f32.mrb[0].mxu0
        %v1185 = vadd.f32 %v1061, %v1184
        %v1186 = vpop.f32.mrb[0].mxu0
        %1187 = vmatprep.mubr.f32.mxu0 0.0
        %1188 = vmatmul.mubr.f32.gmra.mrb[0].mxu0 %v1090
        %v1189 = vpop.f32.mrb[0].mxu0
        %v1190 = vadd.f32 %v1062, %v1189
        %v1191 = vpop.f32.mrb[0].mxu0
        %1192 = vmatprep.mubr.f32.mxu0 0.0
        %1193 = vmatmul.mubr.f32.gmra.mrb[0].mxu0 %v1092
        %v1194 = vpop.f32.mrb[0].mxu0
        %v1195 = vadd.f32 %v1063, %v1194
        %v1196 = vpop.f32.mrb[0].mxu0
        %1197 = vmatprep.mubr.f32.mxu0 0.0
        %1198 = vmatmul.mubr.f32.gmra.mrb[0].mxu0 %v1094
        %v1199 = vpop.f32.mrb[0].mxu0
        %v1200 = vadd.f32 %v1064, %v1199
        %v1201 = vpop.f32.mrb[0].mxu0
        %1202 = vdwg.mxu0
        %vm1203 = vcmask 392192
        %v1204 = vsel %vm1203, %v1175, -inf
        %1205 = vmax.xlane.f32.xlu0 %v1204
        %v1206 = vpop.xlane.xlu0 %1205
        %v1207 = vsel %vm1203, %v1180, -inf
        %1208 = vmax.xlane.f32.xlu0 %v1207
        %v1209 = vpop.xlane.xlu0 %1208
        %v1210 = vsel %vm1203, %v1185, -inf
        %1211 = vmax.xlane.f32.xlu0 %v1210
        %v1212 = vpop.xlane.xlu0 %1211
        %v1213 = vsel %vm1203, %v1190, -inf
        %1214 = vmax.xlane.f32.xlu0 %v1213
        %v1215 = vpop.xlane.xlu0 %1214
        %v1216 = vsel %vm1203, %v1195, -inf
        %1217 = vmax.xlane.f32.xlu0 %v1216
        %v1218 = vpop.xlane.xlu0 %1217
        %v1219 = vsel %vm1203, %v1200, -inf
        %1220 = vmax.xlane.f32.xlu0 %v1219
        %v1221 = vpop.xlane.xlu0 %1220
        %v1222 = vsub.f32 %v1175, %v1206
        %v1223 = vsub.f32 %v1180, %v1209
        %v1224 = vsub.f32 %v1185, %v1212
        %v1225 = vsub.f32 %v1190, %v1215
        %v1226 = vsub.f32 %v1195, %v1218
        %v1227 = vsub.f32 %v1200, %v1221
        %v1228 = vmul.f32 %v1222, 1.442695
        %v1229 = vpow.pop %v1228
        %v1230 = vmul.f32 %v1223, 1.442695
        %v1231 = vpow.pop %v1230
        %v1232 = vmul.f32 %v1224, 1.442695
        %v1233 = vpow.pop %v1232
        %v1234 = vmul.f32 %v1225, 1.442695
        %v1235 = vpow.pop %v1234
        %v1236 = vmul.f32 %v1226, 1.442695
        %v1237 = vpow.pop %v1236
        %v1238 = vmul.f32 %v1227, 1.442695
        %v1239 = vpow.pop %v1238
        %v1240 = vsel %vm1203, %v1229, 0.0
        %1241 = vadd.xlane.f32.xlu0 %v1240
        %v1242 = vpop.xlane.xlu0 %1241
        %v1243 = vsel %vm1203, %v1231, 0.0
        %1244 = vadd.xlane.f32.xlu0 %v1243
        %v1245 = vpop.xlane.xlu0 %1244
        %v1246 = vsel %vm1203, %v1233, 0.0
        %1247 = vadd.xlane.f32.xlu0 %v1246
        %v1248 = vpop.xlane.xlu0 %1247
        %v1249 = vsel %vm1203, %v1235, 0.0
        %1250 = vadd.xlane.f32.xlu0 %v1249
        %v1251 = vpop.xlane.xlu0 %1250
        %v1252 = vsel %vm1203, %v1237, 0.0
        %1253 = vadd.xlane.f32.xlu0 %v1252
        %v1254 = vpop.xlane.xlu0 %1253
        %v1255 = vsel %vm1203, %v1239, 0.0
        %1256 = vadd.xlane.f32.xlu0 %v1255
        %v1257 = vpop.xlane.xlu0 %1256
        %v1258 = vrcp.pop %v1242
        %v1259 = vrcp.pop %v1245
        %v1260 = vrcp.pop %v1248
        %v1261 = vrcp.pop %v1251
        %v1262 = vrcp.pop %v1254
        %v1263 = vrcp.pop %v1257
        %v1264 = vmul.f32 %v1229, %v1258
        %v1265 = vmul.f32 %v1231, %v1259
        %v1266 = vmul.f32 %v1233, %v1260
        %v1267 = vmul.f32 %v1235, %v1261
        %v1268 = vmul.f32 %v1237, %v1262
        %v1269 = vmul.f32 %v1239, %v1263
        %v1270 = vpack.c.bf16 %v1265, %v1264
        %v1271 = vpack.c.bf16 %v1267, %v1266
        %v1272 = vpack.c.bf16 %v1269, %v1268
        %v1273 = vpack.c.bf16 %v1040, %v1037
        %v1274 = vpack.c.bf16 %v1048, %v1045
        %v1275 = vpack.c.bf16 %v1056, %v1053
        %1279 = vrot.lane.b32.xlu0 %v1273, 64
        %v1280 = vpop.permute.xlu0 %1279
        %1281 = vrot.lane.b32.xlu0 %v1274, 64
        %v1282 = vpop.permute.xlu0 %1281
        %1283 = vrot.lane.b32.xlu0 %v1275, 64
        %v1284 = vpop.permute.xlu0 %1283
        %v1289 = vsel %vm1203, %v1270, 0
        %v1292 = vsel %vm1203, %v1271, 0
        %v1295 = vsel %vm1203, %v1272, 0
        %1297 = vmatprep.subr.bf16.mxu0 0
        %1298 = vmatpush1.bf16.msra.mxu0 %v1280
        %1299 = vmatprep.subr.bf16.mxu0 0
        %1300 = vmatpush1.bf16.msra.mxu0 %v1282
        %1301 = vmatprep.subr.bf16.mxu0 0
        %1302 = vmatpush1.bf16.msra.mxu0 %v1284
        %1303 = vmatprep.subr.bf16.mxu0 0
        %1304 = vmatpush1.bf16.msra.mxu0 0
        %1305 = vmatprep.subr.bf16.mxu0 0
        %1306 = vmatpush1.bf16.msra.mxu0 0
        %1307 = vmatprep.subr.bf16.mxu0 0
        %1308 = vmatpush1.bf16.msra.mxu0 0
        %1309 = vmatprep.subr.bf16.mxu0 0
        %1310 = vmatpush1.bf16.msra.mxu0 0
        %1311 = vmatprep.subr.bf16.mxu0 0
        %1312 = vmatpush1.bf16.msra.mxu0 0
        %1313 = vmatprep.subr.bf16.mxu0 0
        %1314 = vmatpush1.bf16.msra.mxu0 0
        %1315 = vmatprep.subr.bf16.mxu0 0
        %1316 = vmatpush1.bf16.msra.mxu0 0
        %1317 = vmatprep.subr.bf16.mxu0 0
        %1318 = vmatpush1.bf16.msra.mxu0 0
        %1319 = vmatprep.subr.bf16.mxu0 0
        %1320 = vmatpush1.bf16.msra.mxu0 0
        %1321 = vmatprep.subr.bf16.mxu0 0
        %1322 = vmatpush1.bf16.msra.mxu0 0
        %1323 = vmatprep.subr.bf16.mxu0 0
        %1324 = vmatpush1.bf16.msra.mxu0 0
        %1325 = vmatprep.subr.bf16.mxu0 0
        %1326 = vmatpush1.bf16.msra.mxu0 0
        %1327 = vmatprep.subr.bf16.mxu0 0
        %1328 = vmatpush1.bf16.msra.mxu0 0
        %1329 = vmatprep.mubr.bf16.mxu0 0
        %1330 = vmatmul.mubr.bf16.gmra.mrb[0].mxu0 %v1289
        %v1331 = vpop.f32.mrb[0].mxu0
        %v1332 = vadd.f32 0.0, %v1331
        %v1333 = vpop.f32.mrb[0].mxu0
        %v1334 = vpop.f32.mrb[0].mxu0
        %v1335 = vadd.f32 0.0, %v1334
        %v1336 = vpop.f32.mrb[0].mxu0
        %1337 = vmatprep.mubr.bf16.mxu0 0
        %1338 = vmatmul.mubr.bf16.gmra.mrb[0].mxu0 %v1292
        %v1339 = vpop.f32.mrb[0].mxu0
        %v1340 = vadd.f32 0.0, %v1339
        %v1341 = vpop.f32.mrb[0].mxu0
        %v1342 = vpop.f32.mrb[0].mxu0
        %v1343 = vadd.f32 0.0, %v1342
        %v1344 = vpop.f32.mrb[0].mxu0
        %1345 = vmatprep.mubr.bf16.mxu0 0
        %1346 = vmatmul.mubr.bf16.gmra.mrb[0].mxu0 %v1295
        %v1347 = vpop.f32.mrb[0].mxu0
        %v1348 = vadd.f32 0.0, %v1347
        %v1349 = vpop.f32.mrb[0].mxu0
        %v1350 = vpop.f32.mrb[0].mxu0
        %v1351 = vadd.f32 0.0, %v1350
        %v1352 = vpop.f32.mrb[0].mxu0
        %1353 = vdwg.mxu0
        %1354 = vrot.lane.b32.xlu0 %v1037, 120
        %v1355 = vpop.permute.xlu0 %1354
        %1356 = vrot.lane.b32.xlu0 %v1040, 120
        %v1357 = vpop.permute.xlu0 %1356
        %1358 = vrot.lane.b32.xlu0 %v1045, 120
        %v1359 = vpop.permute.xlu0 %1358
        %1360 = vrot.lane.b32.xlu0 %v1048, 120
        %v1361 = vpop.permute.xlu0 %1360
        %1362 = vrot.lane.b32.xlu0 %v1053, 120
        %v1363 = vpop.permute.xlu0 %1362
        %1364 = vrot.lane.b32.xlu0 %v1056, 120
        %v1365 = vpop.permute.xlu0 %1364
        %1366 = vrot.lane.b32.xlu0 %v1037, 88
        %v1367 = vpop.permute.xlu0 %1366
        %1368 = vrot.lane.b32.xlu0 %v1040, 88
        %v1369 = vpop.permute.xlu0 %1368
        %1370 = vrot.lane.b32.xlu0 %v1045, 88
        %v1371 = vpop.permute.xlu0 %1370
        %1372 = vrot.lane.b32.xlu0 %v1048, 88
        %v1373 = vpop.permute.xlu0 %1372
        %1374 = vrot.lane.b32.xlu0 %v1053, 88
        %v1375 = vpop.permute.xlu0 %1374
        %1376 = vrot.lane.b32.xlu0 %v1056, 88
        %v1377 = vpop.permute.xlu0 %1376
        %v1378 = vsel %vm1083, %v1355, 0
        %v1380 = vsel %vm1083, %v1357, 0
        %v1382 = vsel %vm1083, %v1359, 0
        %v1384 = vsel %vm1083, %v1361, 0
        %v1386 = vsel %vm1083, %v1363, 0
        %v1388 = vsel %vm1083, %v1365, 0
        %v1390 = vsel %vm1083, %v1367, 0
        %v1392 = vsel %vm1083, %v1369, 0
        %v1394 = vsel %vm1083, %v1371, 0
        %v1396 = vsel %vm1083, %v1373, 0
        %v1398 = vsel %vm1083, %v1375, 0
        %v1400 = vsel %vm1083, %v1377, 0
        %1402 = vmatprep.subr.mxu0 0.0
        %1403 = vmatpush1.xpose.msra.mxu0 %v1390
        %1404 = vmatprep.subr.mxu0 0.0
        %1405 = vmatpush1.xpose.msra.mxu0 %v1392
        %1406 = vmatprep.subr.mxu0 0.0
        %1407 = vmatpush1.xpose.msra.mxu0 %v1394
        %1408 = vmatprep.subr.mxu0 0.0
        %1409 = vmatpush1.xpose.msra.mxu0 %v1396
        %1410 = vmatprep.subr.mxu0 0.0
        %1411 = vmatpush1.xpose.msra.mxu0 %v1398
        %1412 = vmatprep.subr.mxu0 0.0
        %1413 = vmatpush1.xpose.msra.mxu0 %v1400
        %1414 = vmatprep.subr.mxu0 0.0
        %1415 = vmatpush1.xpose.msra.mxu0 0.0
        %1416 = vmatprep.subr.mxu0 0.0
        %1417 = vmatpush1.xpose.msra.mxu0 0.0
        %1418 = vmatprep.subr.mxu0 0.0
        %1419 = vmatpush1.xpose.msra.mxu0 0.0
        %1420 = vmatprep.subr.mxu0 0.0
        %1421 = vmatpush1.xpose.msra.mxu0 0.0
        %1422 = vmatprep.subr.mxu0 0.0
        %1423 = vmatpush1.xpose.msra.mxu0 0.0
        %1424 = vmatprep.subr.mxu0 0.0
        %1425 = vmatpush1.xpose.msra.mxu0 0.0
        %1426 = vmatprep.subr.mxu0 0.0
        %1427 = vmatpush1.xpose.msra.mxu0 0.0
        %1428 = vmatprep.subr.mxu0 0.0
        %1429 = vmatpush1.xpose.msra.mxu0 0.0
        %1430 = vmatprep.subr.mxu0 0.0
        %1431 = vmatpush1.xpose.msra.mxu0 0.0
        %1432 = vmatprep.subr.mxu0 0.0
        %1433 = vmatpush1.xpose.msra.mxu0 0.0
        %1434 = vmatprep.subr.mxu0 0.0
        %1435 = vmatpush1.xpose.msra.mxu0 0.0
        %1436 = vmatprep.subr.mxu0 0.0
        %1437 = vmatpush1.xpose.msra.mxu0 0.0
        %1438 = vmatprep.subr.mxu0 0.0
        %1439 = vmatpush1.xpose.msra.mxu0 0.0
        %1440 = vmatprep.subr.mxu0 0.0
        %1441 = vmatpush1.xpose.msra.mxu0 0.0
        %1442 = vmatprep.subr.mxu0 0.0
        %1443 = vmatpush1.xpose.msra.mxu0 0.0
        %1444 = vmatprep.subr.mxu0 0.0
        %1445 = vmatpush1.xpose.msra.mxu0 0.0
        %1446 = vmatprep.subr.mxu0 0.0
        %1447 = vmatpush1.xpose.msra.mxu0 0.0
        %1448 = vmatprep.subr.mxu0 0.0
        %1449 = vmatpush1.xpose.msra.mxu0 0.0
        %1450 = vmatprep.subr.mxu0 0.0
        %1451 = vmatpush1.xpose.msra.mxu0 0.0
        %1452 = vmatprep.subr.mxu0 0.0
        %1453 = vmatpush1.xpose.msra.mxu0 0.0
        %1454 = vmatprep.subr.mxu0 0.0
        %1455 = vmatpush1.xpose.msra.mxu0 0.0
        %1456 = vmatprep.subr.mxu0 0.0
        %1457 = vmatpush1.xpose.msra.mxu0 0.0
        %1458 = vmatprep.subr.mxu0 0.0
        %1459 = vmatpush1.xpose.msra.mxu0 0.0
        %1460 = vmatprep.subr.mxu0 0.0
        %1461 = vmatpush1.xpose.msra.mxu0 0.0
        %1462 = vmatprep.subr.mxu0 0.0
        %1463 = vmatpush1.xpose.msra.mxu0 0.0
        %1464 = vmatprep.subr.mxu0 0.0
        %1465 = vmatpush1.xpose.msra.mxu0 0.0
        %1466 = vmatprep.mubr.f32.mxu0 0.0
        %1467 = vmatmul.mubr.f32.gmra.mrb[0].mxu0 %v1378
        %v1468 = vpop.f32.mrb[0].mxu0
        %v1469 = vadd.f32 %v1059, %v1468
        %v1470 = vpop.f32.mrb[0].mxu0
        %1471 = vmatprep.mubr.f32.mxu0 0.0
        %1472 = vmatmul.mubr.f32.gmra.mrb[0].mxu0 %v1380
        %v1473 = vpop.f32.mrb[0].mxu0
        %v1474 = vadd.f32 %v1060, %v1473
        %v1475 = vpop.f32.mrb[0].mxu0
        %1476 = vmatprep.mubr.f32.mxu0 0.0
        %1477 = vmatmul.mubr.f32.gmra.mrb[0].mxu0 %v1382
        %v1478 = vpop.f32.mrb[0].mxu0
        %v1479 = vadd.f32 %v1061, %v1478
        %v1480 = vpop.f32.mrb[0].mxu0
        %1481 = vmatprep.mubr.f32.mxu0 0.0
        %1482 = vmatmul.mubr.f32.gmra.mrb[0].mxu0 %v1384
        %v1483 = vpop.f32.mrb[0].mxu0
        %v1484 = vadd.f32 %v1062, %v1483
        %v1485 = vpop.f32.mrb[0].mxu0
        %1486 = vmatprep.mubr.f32.mxu0 0.0
        %1487 = vmatmul.mubr.f32.gmra.mrb[0].mxu0 %v1386
        %v1488 = vpop.f32.mrb[0].mxu0
        %v1489 = vadd.f32 %v1063, %v1488
        %v1490 = vpop.f32.mrb[0].mxu0
        %1491 = vmatprep.mubr.f32.mxu0 0.0
        %1492 = vmatmul.mubr.f32.gmra.mrb[0].mxu0 %v1388
        %v1493 = vpop.f32.mrb[0].mxu0
        %v1494 = vadd.f32 %v1064, %v1493
        %v1495 = vpop.f32.mrb[0].mxu0
        %1496 = vdwg.mxu0
        %v1497 = vsel %vm1203, %v1469, -inf
        %1498 = vmax.xlane.f32.xlu0 %v1497
        %v1499 = vpop.xlane.xlu0 %1498
        %v1500 = vsel %vm1203, %v1474, -inf
        %1501 = vmax.xlane.f32.xlu0 %v1500
        %v1502 = vpop.xlane.xlu0 %1501
        %v1503 = vsel %vm1203, %v1479, -inf
        %1504 = vmax.xlane.f32.xlu0 %v1503
        %v1505 = vpop.xlane.xlu0 %1504
        %v1506 = vsel %vm1203, %v1484, -inf
        %1507 = vmax.xlane.f32.xlu0 %v1506
        %v1508 = vpop.xlane.xlu0 %1507
        %v1509 = vsel %vm1203, %v1489, -inf
        %1510 = vmax.xlane.f32.xlu0 %v1509
        %v1511 = vpop.xlane.xlu0 %1510
        %v1512 = vsel %vm1203, %v1494, -inf
        %1513 = vmax.xlane.f32.xlu0 %v1512
        %v1514 = vpop.xlane.xlu0 %1513
        %v1515 = vsub.f32 %v1469, %v1499
        %v1516 = vsub.f32 %v1474, %v1502
        %v1517 = vsub.f32 %v1479, %v1505
        %v1518 = vsub.f32 %v1484, %v1508
        %v1519 = vsub.f32 %v1489, %v1511
        %v1520 = vsub.f32 %v1494, %v1514
        %v1521 = vmul.f32 %v1515, 1.442695
        %v1522 = vpow.pop %v1521
        %v1523 = vmul.f32 %v1516, 1.442695
        %v1524 = vpow.pop %v1523
        %v1525 = vmul.f32 %v1517, 1.442695
        %v1526 = vpow.pop %v1525
        %v1527 = vmul.f32 %v1518, 1.442695
        %v1528 = vpow.pop %v1527
        %v1529 = vmul.f32 %v1519, 1.442695
        %v1530 = vpow.pop %v1529
        %v1531 = vmul.f32 %v1520, 1.442695
        %v1532 = vpow.pop %v1531
        %v1533 = vsel %vm1203, %v1522, 0.0
        %1534 = vadd.xlane.f32.xlu0 %v1533
        %v1535 = vpop.xlane.xlu0 %1534
        %v1536 = vsel %vm1203, %v1524, 0.0
        %1537 = vadd.xlane.f32.xlu0 %v1536
        %v1538 = vpop.xlane.xlu0 %1537
        %v1539 = vsel %vm1203, %v1526, 0.0
        %1540 = vadd.xlane.f32.xlu0 %v1539
        %v1541 = vpop.xlane.xlu0 %1540
        %v1542 = vsel %vm1203, %v1528, 0.0
        %1543 = vadd.xlane.f32.xlu0 %v1542
        %v1544 = vpop.xlane.xlu0 %1543
        %v1545 = vsel %vm1203, %v1530, 0.0
        %1546 = vadd.xlane.f32.xlu0 %v1545
        %v1547 = vpop.xlane.xlu0 %1546
        %v1548 = vsel %vm1203, %v1532, 0.0
        %1549 = vadd.xlane.f32.xlu0 %v1548
        %v1550 = vpop.xlane.xlu0 %1549
        %v1551 = vrcp.pop %v1535
        %v1552 = vrcp.pop %v1538
        %v1553 = vrcp.pop %v1541
        %v1554 = vrcp.pop %v1544
        %v1555 = vrcp.pop %v1547
        %v1556 = vrcp.pop %v1550
        %v1557 = vmul.f32 %v1522, %v1551
        %v1558 = vmul.f32 %v1524, %v1552
        %v1559 = vmul.f32 %v1526, %v1553
        %v1560 = vmul.f32 %v1528, %v1554
        %v1561 = vmul.f32 %v1530, %v1555
        %v1562 = vmul.f32 %v1532, %v1556
        %v1563 = vpack.c.bf16 %v1558, %v1557
        %v1564 = vpack.c.bf16 %v1560, %v1559
        %v1565 = vpack.c.bf16 %v1562, %v1561
        %1566 = vrot.lane.b32.xlu0 %v1273, 56
        %v1567 = vpop.permute.xlu0 %1566
        %1568 = vrot.lane.b32.xlu0 %v1274, 56
        %v1569 = vpop.permute.xlu0 %1568
        %1570 = vrot.lane.b32.xlu0 %v1275, 56
        %v1571 = vpop.permute.xlu0 %1570
        %v1576 = vsel %vm1203, %v1563, 0
        %v1579 = vsel %vm1203, %v1564, 0
        %v1582 = vsel %vm1203, %v1565, 0
        %1584 = vmatprep.subr.bf16.mxu0 0
        %1585 = vmatpush1.bf16.msra.mxu0 %v1567
        %1586 = vmatprep.subr.bf16.mxu0 0
        %1587 = vmatpush1.bf16.msra.mxu0 %v1569
        %1588 = vmatprep.subr.bf16.mxu0 0
        %1589 = vmatpush1.bf16.msra.mxu0 %v1571
        %1590 = vmatprep.subr.bf16.mxu0 0
        %1591 = vmatpush1.bf16.msra.mxu0 0
        %1592 = vmatprep.subr.bf16.mxu0 0
        %1593 = vmatpush1.bf16.msra.mxu0 0
        %1594 = vmatprep.subr.bf16.mxu0 0
        %1595 = vmatpush1.bf16.msra.mxu0 0
        %1596 = vmatprep.subr.bf16.mxu0 0
        %1597 = vmatpush1.bf16.msra.mxu0 0
        %1598 = vmatprep.subr.bf16.mxu0 0
        %1599 = vmatpush1.bf16.msra.mxu0 0
        %1600 = vmatprep.subr.bf16.mxu0 0
        %1601 = vmatpush1.bf16.msra.mxu0 0
        %1602 = vmatprep.subr.bf16.mxu0 0
        %1603 = vmatpush1.bf16.msra.mxu0 0
        %1604 = vmatprep.subr.bf16.mxu0 0
        %1605 = vmatpush1.bf16.msra.mxu0 0
        %1606 = vmatprep.subr.bf16.mxu0 0
        %1607 = vmatpush1.bf16.msra.mxu0 0
        %1608 = vmatprep.subr.bf16.mxu0 0
        %1609 = vmatpush1.bf16.msra.mxu0 0
        %1610 = vmatprep.subr.bf16.mxu0 0
        %1611 = vmatpush1.bf16.msra.mxu0 0
        %1612 = vmatprep.subr.bf16.mxu0 0
        %1613 = vmatpush1.bf16.msra.mxu0 0
        %1614 = vmatprep.subr.bf16.mxu0 0
        %1615 = vmatpush1.bf16.msra.mxu0 0
        %1616 = vmatprep.mubr.bf16.mxu0 0
        %1617 = vmatmul.mubr.bf16.gmra.mrb[0].mxu0 %v1576
        %v1618 = vpop.f32.mrb[0].mxu0
        %v1619 = vadd.f32 0.0, %v1618
        %v1620 = vpop.f32.mrb[0].mxu0
        %v1621 = vpop.f32.mrb[0].mxu0
        %v1622 = vadd.f32 0.0, %v1621
        %v1623 = vpop.f32.mrb[0].mxu0
        %1624 = vmatprep.mubr.bf16.mxu0 0
        %1625 = vmatmul.mubr.bf16.gmra.mrb[0].mxu0 %v1579
        %v1626 = vpop.f32.mrb[0].mxu0
        %v1627 = vadd.f32 0.0, %v1626
        %v1628 = vpop.f32.mrb[0].mxu0
        %v1629 = vpop.f32.mrb[0].mxu0
        %v1630 = vadd.f32 0.0, %v1629
        %v1631 = vpop.f32.mrb[0].mxu0
        %1632 = vmatprep.mubr.bf16.mxu0 0
        %1633 = vmatmul.mubr.bf16.gmra.mrb[0].mxu0 %v1582
        %v1634 = vpop.f32.mrb[0].mxu0
        %v1635 = vadd.f32 0.0, %v1634
        %v1636 = vpop.f32.mrb[0].mxu0
        %v1637 = vpop.f32.mrb[0].mxu0
        %v1638 = vadd.f32 0.0, %v1637
        %v1639 = vpop.f32.mrb[0].mxu0
        %1640 = vdwg.mxu0
        %1641 = vrot.lane.b32.xlu0 %v1037, 112
        %v1642 = vpop.permute.xlu0 %1641
        %1643 = vrot.lane.b32.xlu0 %v1040, 112
        %v1644 = vpop.permute.xlu0 %1643
        %1645 = vrot.lane.b32.xlu0 %v1045, 112
        %v1646 = vpop.permute.xlu0 %1645
        %1647 = vrot.lane.b32.xlu0 %v1048, 112
        %v1648 = vpop.permute.xlu0 %1647
        %1649 = vrot.lane.b32.xlu0 %v1053, 112
        %v1650 = vpop.permute.xlu0 %1649
        %1651 = vrot.lane.b32.xlu0 %v1056, 112
        %v1652 = vpop.permute.xlu0 %1651
        %1653 = vrot.lane.b32.xlu0 %v1037, 80
        %v1654 = vpop.permute.xlu0 %1653
        %1655 = vrot.lane.b32.xlu0 %v1040, 80
        %v1656 = vpop.permute.xlu0 %1655
        %1657 = vrot.lane.b32.xlu0 %v1045, 80
        %v1658 = vpop.permute.xlu0 %1657
        %1659 = vrot.lane.b32.xlu0 %v1048, 80
        %v1660 = vpop.permute.xlu0 %1659
        %1661 = vrot.lane.b32.xlu0 %v1053, 80
        %v1662 = vpop.permute.xlu0 %1661
        %1663 = vrot.lane.b32.xlu0 %v1056, 80
        %v1664 = vpop.permute.xlu0 %1663
        %v1665 = vsel %vm1083, %v1642, 0
        %v1667 = vsel %vm1083, %v1644, 0
        %v1669 = vsel %vm1083, %v1646, 0
        %v1671 = vsel %vm1083, %v1648, 0
        %v1673 = vsel %vm1083, %v1650, 0
        %v1675 = vsel %vm1083, %v1652, 0
        %v1677 = vsel %vm1083, %v1654, 0
        %v1679 = vsel %vm1083, %v1656, 0
        %v1681 = vsel %vm1083, %v1658, 0
        %v1683 = vsel %vm1083, %v1660, 0
        %v1685 = vsel %vm1083, %v1662, 0
        %v1687 = vsel %vm1083, %v1664, 0
        %1689 = vmatprep.subr.mxu0 0.0
        %1690 = vmatpush1.xpose.msra.mxu0 %v1677
        %1691 = vmatprep.subr.mxu0 0.0
        %1692 = vmatpush1.xpose.msra.mxu0 %v1679
        %1693 = vmatprep.subr.mxu0 0.0
        %1694 = vmatpush1.xpose.msra.mxu0 %v1681
        %1695 = vmatprep.subr.mxu0 0.0
        %1696 = vmatpush1.xpose.msra.mxu0 %v1683
        %1697 = vmatprep.subr.mxu0 0.0
        %1698 = vmatpush1.xpose.msra.mxu0 %v1685
        %1699 = vmatprep.subr.mxu0 0.0
        %1700 = vmatpush1.xpose.msra.mxu0 %v1687
        %1701 = vmatprep.subr.mxu0 0.0
        %1702 = vmatpush1.xpose.msra.mxu0 0.0
        %1703 = vmatprep.subr.mxu0 0.0
        %1704 = vmatpush1.xpose.msra.mxu0 0.0
        %1705 = vmatprep.subr.mxu0 0.0
        %1706 = vmatpush1.xpose.msra.mxu0 0.0
        %1707 = vmatprep.subr.mxu0 0.0
        %1708 = vmatpush1.xpose.msra.mxu0 0.0
        %1709 = vmatprep.subr.mxu0 0.0
        %1710 = vmatpush1.xpose.msra.mxu0 0.0
        %1711 = vmatprep.subr.mxu0 0.0
        %1712 = vmatpush1.xpose.msra.mxu0 0.0
        %1713 = vmatprep.subr.mxu0 0.0
        %1714 = vmatpush1.xpose.msra.mxu0 0.0
        %1715 = vmatprep.subr.mxu0 0.0
        %1716 = vmatpush1.xpose.msra.mxu0 0.0
        %1717 = vmatprep.subr.mxu0 0.0
        %1718 = vmatpush1.xpose.msra.mxu0 0.0
        %1719 = vmatprep.subr.mxu0 0.0
        %1720 = vmatpush1.xpose.msra.mxu0 0.0
        %1721 = vmatprep.subr.mxu0 0.0
        %1722 = vmatpush1.xpose.msra.mxu0 0.0
        %1723 = vmatprep.subr.mxu0 0.0
        %1724 = vmatpush1.xpose.msra.mxu0 0.0
        %1725 = vmatprep.subr.mxu0 0.0
        %1726 = vmatpush1.xpose.msra.mxu0 0.0
        %1727 = vmatprep.subr.mxu0 0.0
        %1728 = vmatpush1.xpose.msra.mxu0 0.0
        %1729 = vmatprep.subr.mxu0 0.0
        %1730 = vmatpush1.xpose.msra.mxu0 0.0
        %1731 = vmatprep.subr.mxu0 0.0
        %1732 = vmatpush1.xpose.msra.mxu0 0.0
        %1733 = vmatprep.subr.mxu0 0.0
        %1734 = vmatpush1.xpose.msra.mxu0 0.0
        %1735 = vmatprep.subr.mxu0 0.0
        %1736 = vmatpush1.xpose.msra.mxu0 0.0
        %1737 = vmatprep.subr.mxu0 0.0
        %1738 = vmatpush1.xpose.msra.mxu0 0.0
        %1739 = vmatprep.subr.mxu0 0.0
        %1740 = vmatpush1.xpose.msra.mxu0 0.0
        %1741 = vmatprep.subr.mxu0 0.0
        %1742 = vmatpush1.xpose.msra.mxu0 0.0
        %1743 = vmatprep.subr.mxu0 0.0
        %1744 = vmatpush1.xpose.msra.mxu0 0.0
        %1745 = vmatprep.subr.mxu0 0.0
        %1746 = vmatpush1.xpose.msra.mxu0 0.0
        %1747 = vmatprep.subr.mxu0 0.0
        %1748 = vmatpush1.xpose.msra.mxu0 0.0
        %1749 = vmatprep.subr.mxu0 0.0
        %1750 = vmatpush1.xpose.msra.mxu0 0.0
        %1751 = vmatprep.subr.mxu0 0.0
        %1752 = vmatpush1.xpose.msra.mxu0 0.0
        %1753 = vmatprep.mubr.f32.mxu0 0.0
        %1754 = vmatmul.mubr.f32.gmra.mrb[0].mxu0 %v1665
        %v1755 = vpop.f32.mrb[0].mxu0
        %v1756 = vadd.f32 %v1059, %v1755
        %v1757 = vpop.f32.mrb[0].mxu0
        %1758 = vmatprep.mubr.f32.mxu0 0.0
        %1759 = vmatmul.mubr.f32.gmra.mrb[0].mxu0 %v1667
        %v1760 = vpop.f32.mrb[0].mxu0
        %v1761 = vadd.f32 %v1060, %v1760
        %v1762 = vpop.f32.mrb[0].mxu0
        %1763 = vmatprep.mubr.f32.mxu0 0.0
        %1764 = vmatmul.mubr.f32.gmra.mrb[0].mxu0 %v1669
        %v1765 = vpop.f32.mrb[0].mxu0
        %v1766 = vadd.f32 %v1061, %v1765
        %v1767 = vpop.f32.mrb[0].mxu0
        %1768 = vmatprep.mubr.f32.mxu0 0.0
        %1769 = vmatmul.mubr.f32.gmra.mrb[0].mxu0 %v1671
        %v1770 = vpop.f32.mrb[0].mxu0
        %v1771 = vadd.f32 %v1062, %v1770
        %v1772 = vpop.f32.mrb[0].mxu0
        %1773 = vmatprep.mubr.f32.mxu0 0.0
        %1774 = vmatmul.mubr.f32.gmra.mrb[0].mxu0 %v1673
        %v1775 = vpop.f32.mrb[0].mxu0
        %v1776 = vadd.f32 %v1063, %v1775
        %v1777 = vpop.f32.mrb[0].mxu0
        %1778 = vmatprep.mubr.f32.mxu0 0.0
        %1779 = vmatmul.mubr.f32.gmra.mrb[0].mxu0 %v1675
        %v1780 = vpop.f32.mrb[0].mxu0
        %v1781 = vadd.f32 %v1064, %v1780
        %v1782 = vpop.f32.mrb[0].mxu0
        %1783 = vdwg.mxu0
        %v1784 = vsel %vm1203, %v1756, -inf
        %1785 = vmax.xlane.f32.xlu0 %v1784
        %v1786 = vpop.xlane.xlu0 %1785
        %v1787 = vsel %vm1203, %v1761, -inf
        %1788 = vmax.xlane.f32.xlu0 %v1787
        %v1789 = vpop.xlane.xlu0 %1788
        %v1790 = vsel %vm1203, %v1766, -inf
        %1791 = vmax.xlane.f32.xlu0 %v1790
        %v1792 = vpop.xlane.xlu0 %1791
        %v1793 = vsel %vm1203, %v1771, -inf
        %1794 = vmax.xlane.f32.xlu0 %v1793
        %v1795 = vpop.xlane.xlu0 %1794
        %v1796 = vsel %vm1203, %v1776, -inf
        %1797 = vmax.xlane.f32.xlu0 %v1796
        %v1798 = vpop.xlane.xlu0 %1797
        %v1799 = vsel %vm1203, %v1781, -inf
        %1800 = vmax.xlane.f32.xlu0 %v1799
        %v1801 = vpop.xlane.xlu0 %1800
        %v1802 = vsub.f32 %v1756, %v1786
        %v1803 = vsub.f32 %v1761, %v1789
        %v1804 = vsub.f32 %v1766, %v1792
        %v1805 = vsub.f32 %v1771, %v1795
        %v1806 = vsub.f32 %v1776, %v1798
        %v1807 = vsub.f32 %v1781, %v1801
        %v1808 = vmul.f32 %v1802, 1.442695
        %v1809 = vpow.pop %v1808
        %v1810 = vmul.f32 %v1803, 1.442695
        %v1811 = vpow.pop %v1810
        %v1812 = vmul.f32 %v1804, 1.442695
        %v1813 = vpow.pop %v1812
        %v1814 = vmul.f32 %v1805, 1.442695
        %v1815 = vpow.pop %v1814
        %v1816 = vmul.f32 %v1806, 1.442695
        %v1817 = vpow.pop %v1816
        %v1818 = vmul.f32 %v1807, 1.442695
        %v1819 = vpow.pop %v1818
        %v1820 = vsel %vm1203, %v1809, 0.0
        %1821 = vadd.xlane.f32.xlu0 %v1820
        %v1822 = vpop.xlane.xlu0 %1821
        %v1823 = vsel %vm1203, %v1811, 0.0
        %1824 = vadd.xlane.f32.xlu0 %v1823
        %v1825 = vpop.xlane.xlu0 %1824
        %v1826 = vsel %vm1203, %v1813, 0.0
        %1827 = vadd.xlane.f32.xlu0 %v1826
        %v1828 = vpop.xlane.xlu0 %1827
        %v1829 = vsel %vm1203, %v1815, 0.0
        %1830 = vadd.xlane.f32.xlu0 %v1829
        %v1831 = vpop.xlane.xlu0 %1830
        %v1832 = vsel %vm1203, %v1817, 0.0
        %1833 = vadd.xlane.f32.xlu0 %v1832
        %v1834 = vpop.xlane.xlu0 %1833
        %v1835 = vsel %vm1203, %v1819, 0.0
        %1836 = vadd.xlane.f32.xlu0 %v1835
        %v1837 = vpop.xlane.xlu0 %1836
        %v1838 = vrcp.pop %v1822
        %v1839 = vrcp.pop %v1825
        %v1840 = vrcp.pop %v1828
        %v1841 = vrcp.pop %v1831
        %v1842 = vrcp.pop %v1834
        %v1843 = vrcp.pop %v1837
        %v1844 = vmul.f32 %v1809, %v1838
        %v1845 = vmul.f32 %v1811, %v1839
        %v1846 = vmul.f32 %v1813, %v1840
        %v1847 = vmul.f32 %v1815, %v1841
        %v1848 = vmul.f32 %v1817, %v1842
        %v1849 = vmul.f32 %v1819, %v1843
        %v1850 = vpack.c.bf16 %v1845, %v1844
        %v1851 = vpack.c.bf16 %v1847, %v1846
        %v1852 = vpack.c.bf16 %v1849, %v1848
        %1853 = vrot.lane.b32.xlu0 %v1273, 48
        %v1854 = vpop.permute.xlu0 %1853
        %1855 = vrot.lane.b32.xlu0 %v1274, 48
        %v1856 = vpop.permute.xlu0 %1855
        %1857 = vrot.lane.b32.xlu0 %v1275, 48
        %v1858 = vpop.permute.xlu0 %1857
        %v1863 = vsel %vm1203, %v1850, 0
        %v1866 = vsel %vm1203, %v1851, 0
        %v1869 = vsel %vm1203, %v1852, 0
        %1871 = vmatprep.subr.bf16.mxu0 0
        %1872 = vmatpush1.bf16.msra.mxu0 %v1854
        %1873 = vmatprep.subr.bf16.mxu0 0
        %1874 = vmatpush1.bf16.msra.mxu0 %v1856
        %1875 = vmatprep.subr.bf16.mxu0 0
        %1876 = vmatpush1.bf16.msra.mxu0 %v1858
        %1877 = vmatprep.subr.bf16.mxu0 0
        %1878 = vmatpush1.bf16.msra.mxu0 0
        %1879 = vmatprep.subr.bf16.mxu0 0
        %1880 = vmatpush1.bf16.msra.mxu0 0
        %1881 = vmatprep.subr.bf16.mxu0 0
        %1882 = vmatpush1.bf16.msra.mxu0 0
        %1883 = vmatprep.subr.bf16.mxu0 0
        %1884 = vmatpush1.bf16.msra.mxu0 0
        %1885 = vmatprep.subr.bf16.mxu0 0
        %1886 = vmatpush1.bf16.msra.mxu0 0
        %1887 = vmatprep.subr.bf16.mxu0 0
        %1888 = vmatpush1.bf16.msra.mxu0 0
        %1889 = vmatprep.subr.bf16.mxu0 0
        %1890 = vmatpush1.bf16.msra.mxu0 0
        %1891 = vmatprep.subr.bf16.mxu0 0
        %1892 = vmatpush1.bf16.msra.mxu0 0
        %1893 = vmatprep.subr.bf16.mxu0 0
        %1894 = vmatpush1.bf16.msra.mxu0 0
        %1895 = vmatprep.subr.bf16.mxu0 0
        %1896 = vmatpush1.bf16.msra.mxu0 0
        %1897 = vmatprep.subr.bf16.mxu0 0
        %1898 = vmatpush1.bf16.msra.mxu0 0
        %1899 = vmatprep.subr.bf16.mxu0 0
        %1900 = vmatpush1.bf16.msra.mxu0 0
        %1901 = vmatprep.subr.bf16.mxu0 0
        %1902 = vmatpush1.bf16.msra.mxu0 0
        %1903 = vmatprep.mubr.bf16.mxu0 0
        %1904 = vmatmul.mubr.bf16.gmra.mrb[0].mxu0 %v1863
        %v1905 = vpop.f32.mrb[0].mxu0
        %v1906 = vadd.f32 0.0, %v1905
        %v1907 = vpop.f32.mrb[0].mxu0
        %v1908 = vpop.f32.mrb[0].mxu0
        %v1909 = vadd.f32 0.0, %v1908
        %v1910 = vpop.f32.mrb[0].mxu0
        %1911 = vmatprep.mubr.bf16.mxu0 0
        %1912 = vmatmul.mubr.bf16.gmra.mrb[0].mxu0 %v1866
        %v1913 = vpop.f32.mrb[0].mxu0
        %v1914 = vadd.f32 0.0, %v1913
        %v1915 = vpop.f32.mrb[0].mxu0
        %v1916 = vpop.f32.mrb[0].mxu0
        %v1917 = vadd.f32 0.0, %v1916
        %v1918 = vpop.f32.mrb[0].mxu0
        %1919 = vmatprep.mubr.bf16.mxu0 0
        %1920 = vmatmul.mubr.bf16.gmra.mrb[0].mxu0 %v1869
        %v1921 = vpop.f32.mrb[0].mxu0
        %v1922 = vadd.f32 0.0, %v1921
        %v1923 = vpop.f32.mrb[0].mxu0
        %v1924 = vpop.f32.mrb[0].mxu0
        %v1925 = vadd.f32 0.0, %v1924
        %v1926 = vpop.f32.mrb[0].mxu0
        %1927 = vdwg.mxu0
        %1928 = vrot.lane.b32.xlu0 %v1037, 104
        %v1929 = vpop.permute.xlu0 %1928
        %1930 = vrot.lane.b32.xlu0 %v1040, 104
        %v1931 = vpop.permute.xlu0 %1930
        %1932 = vrot.lane.b32.xlu0 %v1045, 104
        %v1933 = vpop.permute.xlu0 %1932
        %1934 = vrot.lane.b32.xlu0 %v1048, 104
        %v1935 = vpop.permute.xlu0 %1934
        %1936 = vrot.lane.b32.xlu0 %v1053, 104
        %v1937 = vpop.permute.xlu0 %1936
        %1938 = vrot.lane.b32.xlu0 %v1056, 104
        %v1939 = vpop.permute.xlu0 %1938
        %1940 = vrot.lane.b32.xlu0 %v1037, 72
        %v1941 = vpop.permute.xlu0 %1940
        %1942 = vrot.lane.b32.xlu0 %v1040, 72
        %v1943 = vpop.permute.xlu0 %1942
        %1944 = vrot.lane.b32.xlu0 %v1045, 72
        %v1945 = vpop.permute.xlu0 %1944
        %1946 = vrot.lane.b32.xlu0 %v1048, 72
        %v1947 = vpop.permute.xlu0 %1946
        %1948 = vrot.lane.b32.xlu0 %v1053, 72
        %v1949 = vpop.permute.xlu0 %1948
        %1950 = vrot.lane.b32.xlu0 %v1056, 72
        %v1951 = vpop.permute.xlu0 %1950
        %v1952 = vsel %vm1083, %v1929, 0
        %v1954 = vsel %vm1083, %v1931, 0
        %v1956 = vsel %vm1083, %v1933, 0
        %v1958 = vsel %vm1083, %v1935, 0
        %v1960 = vsel %vm1083, %v1937, 0
        %v1962 = vsel %vm1083, %v1939, 0
        %v1964 = vsel %vm1083, %v1941, 0
        %v1966 = vsel %vm1083, %v1943, 0
        %v1968 = vsel %vm1083, %v1945, 0
        %v1970 = vsel %vm1083, %v1947, 0
        %v1972 = vsel %vm1083, %v1949, 0
        %v1974 = vsel %vm1083, %v1951, 0
        %1976 = vmatprep.subr.mxu0 0.0
        %1977 = vmatpush1.xpose.msra.mxu0 %v1964
        %1978 = vmatprep.subr.mxu0 0.0
        %1979 = vmatpush1.xpose.msra.mxu0 %v1966
        %1980 = vmatprep.subr.mxu0 0.0
        %1981 = vmatpush1.xpose.msra.mxu0 %v1968
        %1982 = vmatprep.subr.mxu0 0.0
        %1983 = vmatpush1.xpose.msra.mxu0 %v1970
        %1984 = vmatprep.subr.mxu0 0.0
        %1985 = vmatpush1.xpose.msra.mxu0 %v1972
        %1986 = vmatprep.subr.mxu0 0.0
        %1987 = vmatpush1.xpose.msra.mxu0 %v1974
        %1988 = vmatprep.subr.mxu0 0.0
        %1989 = vmatpush1.xpose.msra.mxu0 0.0
        %1990 = vmatprep.subr.mxu0 0.0
        %1991 = vmatpush1.xpose.msra.mxu0 0.0
        %1992 = vmatprep.subr.mxu0 0.0
        %1993 = vmatpush1.xpose.msra.mxu0 0.0
        %1994 = vmatprep.subr.mxu0 0.0
        %1995 = vmatpush1.xpose.msra.mxu0 0.0
        %1996 = vmatprep.subr.mxu0 0.0
        %1997 = vmatpush1.xpose.msra.mxu0 0.0
        %1998 = vmatprep.subr.mxu0 0.0
        %1999 = vmatpush1.xpose.msra.mxu0 0.0
        %2000 = vmatprep.subr.mxu0 0.0
        %2001 = vmatpush1.xpose.msra.mxu0 0.0
        %2002 = vmatprep.subr.mxu0 0.0
        %2003 = vmatpush1.xpose.msra.mxu0 0.0
        %2004 = vmatprep.subr.mxu0 0.0
        %2005 = vmatpush1.xpose.msra.mxu0 0.0
        %2006 = vmatprep.subr.mxu0 0.0
        %2007 = vmatpush1.xpose.msra.mxu0 0.0
        %2008 = vmatprep.subr.mxu0 0.0
        %2009 = vmatpush1.xpose.msra.mxu0 0.0
        %2010 = vmatprep.subr.mxu0 0.0
        %2011 = vmatpush1.xpose.msra.mxu0 0.0
        %2012 = vmatprep.subr.mxu0 0.0
        %2013 = vmatpush1.xpose.msra.mxu0 0.0
        %2014 = vmatprep.subr.mxu0 0.0
        %2015 = vmatpush1.xpose.msra.mxu0 0.0
        %2016 = vmatprep.subr.mxu0 0.0
        %2017 = vmatpush1.xpose.msra.mxu0 0.0
        %2018 = vmatprep.subr.mxu0 0.0
        %2019 = vmatpush1.xpose.msra.mxu0 0.0
        %2020 = vmatprep.subr.mxu0 0.0
        %2021 = vmatpush1.xpose.msra.mxu0 0.0
        %2022 = vmatprep.subr.mxu0 0.0
        %2023 = vmatpush1.xpose.msra.mxu0 0.0
        %2024 = vmatprep.subr.mxu0 0.0
        %2025 = vmatpush1.xpose.msra.mxu0 0.0
        %2026 = vmatprep.subr.mxu0 0.0
        %2027 = vmatpush1.xpose.msra.mxu0 0.0
        %2028 = vmatprep.subr.mxu0 0.0
        %2029 = vmatpush1.xpose.msra.mxu0 0.0
        %2030 = vmatprep.subr.mxu0 0.0
        %2031 = vmatpush1.xpose.msra.mxu0 0.0
        %2032 = vmatprep.subr.mxu0 0.0
        %2033 = vmatpush1.xpose.msra.mxu0 0.0
        %2034 = vmatprep.subr.mxu0 0.0
        %2035 = vmatpush1.xpose.msra.mxu0 0.0
        %2036 = vmatprep.subr.mxu0 0.0
        %2037 = vmatpush1.xpose.msra.mxu0 0.0
        %2038 = vmatprep.subr.mxu0 0.0
        %2039 = vmatpush1.xpose.msra.mxu0 0.0
        %2040 = vmatprep.mubr.f32.mxu0 0.0
        %2041 = vmatmul.mubr.f32.gmra.mrb[0].mxu0 %v1952
        %v2042 = vpop.f32.mrb[0].mxu0
        %v2043 = vadd.f32 %v1059, %v2042
        %v2044 = vpop.f32.mrb[0].mxu0
        %2045 = vmatprep.mubr.f32.mxu0 0.0
        %2046 = vmatmul.mubr.f32.gmra.mrb[0].mxu0 %v1954
        %v2047 = vpop.f32.mrb[0].mxu0
        %v2048 = vadd.f32 %v1060, %v2047
        %v2049 = vpop.f32.mrb[0].mxu0
        %2050 = vmatprep.mubr.f32.mxu0 0.0
        %2051 = vmatmul.mubr.f32.gmra.mrb[0].mxu0 %v1956
        %v2052 = vpop.f32.mrb[0].mxu0
        %v2053 = vadd.f32 %v1061, %v2052
        %v2054 = vpop.f32.mrb[0].mxu0
        %2055 = vmatprep.mubr.f32.mxu0 0.0
        %2056 = vmatmul.mubr.f32.gmra.mrb[0].mxu0 %v1958
        %v2057 = vpop.f32.mrb[0].mxu0
        %v2058 = vadd.f32 %v1062, %v2057
        %v2059 = vpop.f32.mrb[0].mxu0
        %2060 = vmatprep.mubr.f32.mxu0 0.0
        %2061 = vmatmul.mubr.f32.gmra.mrb[0].mxu0 %v1960
        %v2062 = vpop.f32.mrb[0].mxu0
        %v2063 = vadd.f32 %v1063, %v2062
        %v2064 = vpop.f32.mrb[0].mxu0
        %2065 = vmatprep.mubr.f32.mxu0 0.0
        %2066 = vmatmul.mubr.f32.gmra.mrb[0].mxu0 %v1962
        %v2067 = vpop.f32.mrb[0].mxu0
        %v2068 = vadd.f32 %v1064, %v2067
        %v2069 = vpop.f32.mrb[0].mxu0
        %2070 = vdwg.mxu0
        %v2071 = vsel %vm1203, %v2043, -inf
        %2072 = vmax.xlane.f32.xlu0 %v2071
        %v2073 = vpop.xlane.xlu0 %2072
        %v2074 = vsel %vm1203, %v2048, -inf
        %2075 = vmax.xlane.f32.xlu0 %v2074
        %v2076 = vpop.xlane.xlu0 %2075
        %v2077 = vsel %vm1203, %v2053, -inf
        %2078 = vmax.xlane.f32.xlu0 %v2077
        %v2079 = vpop.xlane.xlu0 %2078
        %v2080 = vsel %vm1203, %v2058, -inf
        %2081 = vmax.xlane.f32.xlu0 %v2080
        %v2082 = vpop.xlane.xlu0 %2081
        %v2083 = vsel %vm1203, %v2063, -inf
        %2084 = vmax.xlane.f32.xlu0 %v2083
        %v2085 = vpop.xlane.xlu0 %2084
        %v2086 = vsel %vm1203, %v2068, -inf
        %2087 = vmax.xlane.f32.xlu0 %v2086
        %v2088 = vpop.xlane.xlu0 %2087
        %v2089 = vsub.f32 %v2043, %v2073
        %v2090 = vsub.f32 %v2048, %v2076
        %v2091 = vsub.f32 %v2053, %v2079
        %v2092 = vsub.f32 %v2058, %v2082
        %v2093 = vsub.f32 %v2063, %v2085
        %v2094 = vsub.f32 %v2068, %v2088
        %v2095 = vmul.f32 %v2089, 1.442695
        %v2096 = vpow.pop %v2095
        %v2097 = vmul.f32 %v2090, 1.442695
        %v2098 = vpow.pop %v2097
        %v2099 = vmul.f32 %v2091, 1.442695
        %v2100 = vpow.pop %v2099
        %v2101 = vmul.f32 %v2092, 1.442695
        %v2102 = vpow.pop %v2101
        %v2103 = vmul.f32 %v2093, 1.442695
        %v2104 = vpow.pop %v2103
        %v2105 = vmul.f32 %v2094, 1.442695
        %v2106 = vpow.pop %v2105
        %v2107 = vsel %vm1203, %v2096, 0.0
        %2108 = vadd.xlane.f32.xlu0 %v2107
        %v2109 = vpop.xlane.xlu0 %2108
        %v2110 = vsel %vm1203, %v2098, 0.0
        %2111 = vadd.xlane.f32.xlu0 %v2110
        %v2112 = vpop.xlane.xlu0 %2111
        %v2113 = vsel %vm1203, %v2100, 0.0
        %2114 = vadd.xlane.f32.xlu0 %v2113
        %v2115 = vpop.xlane.xlu0 %2114
        %v2116 = vsel %vm1203, %v2102, 0.0
        %2117 = vadd.xlane.f32.xlu0 %v2116
        %v2118 = vpop.xlane.xlu0 %2117
        %v2119 = vsel %vm1203, %v2104, 0.0
        %2120 = vadd.xlane.f32.xlu0 %v2119
        %v2121 = vpop.xlane.xlu0 %2120
        %v2122 = vsel %vm1203, %v2106, 0.0
        %2123 = vadd.xlane.f32.xlu0 %v2122
        %v2124 = vpop.xlane.xlu0 %2123
        %v2125 = vrcp.pop %v2109
        %v2126 = vrcp.pop %v2112
        %v2127 = vrcp.pop %v2115
        %v2128 = vrcp.pop %v2118
        %v2129 = vrcp.pop %v2121
        %v2130 = vrcp.pop %v2124
        %v2131 = vmul.f32 %v2096, %v2125
        %v2132 = vmul.f32 %v2098, %v2126
        %v2133 = vmul.f32 %v2100, %v2127
        %v2134 = vmul.f32 %v2102, %v2128
        %v2135 = vmul.f32 %v2104, %v2129
        %v2136 = vmul.f32 %v2106, %v2130
        %v2137 = vpack.c.bf16 %v2132, %v2131
        %v2138 = vpack.c.bf16 %v2134, %v2133
        %v2139 = vpack.c.bf16 %v2136, %v2135
        %2140 = vrot.lane.b32.xlu0 %v1273, 40
        %v2141 = vpop.permute.xlu0 %2140
        %2142 = vrot.lane.b32.xlu0 %v1274, 40
        %v2143 = vpop.permute.xlu0 %2142
        %2144 = vrot.lane.b32.xlu0 %v1275, 40
        %v2145 = vpop.permute.xlu0 %2144
        %v2150 = vsel %vm1203, %v2137, 0
        %v2153 = vsel %vm1203, %v2138, 0
        %v2156 = vsel %vm1203, %v2139, 0
        %2158 = vmatprep.subr.bf16.mxu0 0
        %2159 = vmatpush1.bf16.msra.mxu0 %v2141
        %2160 = vmatprep.subr.bf16.mxu0 0
        %2161 = vmatpush1.bf16.msra.mxu0 %v2143
        %2162 = vmatprep.subr.bf16.mxu0 0
        %2163 = vmatpush1.bf16.msra.mxu0 %v2145
        %2164 = vmatprep.subr.bf16.mxu0 0
        %2165 = vmatpush1.bf16.msra.mxu0 0
        %2166 = vmatprep.subr.bf16.mxu0 0
        %2167 = vmatpush1.bf16.msra.mxu0 0
        %2168 = vmatprep.subr.bf16.mxu0 0
        %2169 = vmatpush1.bf16.msra.mxu0 0
        %2170 = vmatprep.subr.bf16.mxu0 0
        %2171 = vmatpush1.bf16.msra.mxu0 0
        %2172 = vmatprep.subr.bf16.mxu0 0
        %2173 = vmatpush1.bf16.msra.mxu0 0
        %2174 = vmatprep.subr.bf16.mxu0 0
        %2175 = vmatpush1.bf16.msra.mxu0 0
        %2176 = vmatprep.subr.bf16.mxu0 0
        %2177 = vmatpush1.bf16.msra.mxu0 0
        %2178 = vmatprep.subr.bf16.mxu0 0
        %2179 = vmatpush1.bf16.msra.mxu0 0
        %2180 = vmatprep.subr.bf16.mxu0 0
        %2181 = vmatpush1.bf16.msra.mxu0 0
        %2182 = vmatprep.subr.bf16.mxu0 0
        %2183 = vmatpush1.bf16.msra.mxu0 0
        %2184 = vmatprep.subr.bf16.mxu0 0
        %2185 = vmatpush1.bf16.msra.mxu0 0
        %2186 = vmatprep.subr.bf16.mxu0 0
        %2187 = vmatpush1.bf16.msra.mxu0 0
        %2188 = vmatprep.subr.bf16.mxu0 0
        %2189 = vmatpush1.bf16.msra.mxu0 0
        %2190 = vmatprep.mubr.bf16.mxu0 0
        %2191 = vmatmul.mubr.bf16.gmra.mrb[0].mxu0 %v2150
        %v2192 = vpop.f32.mrb[0].mxu0
        %v2193 = vadd.f32 0.0, %v2192
        %v2194 = vpop.f32.mrb[0].mxu0
        %v2195 = vpop.f32.mrb[0].mxu0
        %v2196 = vadd.f32 0.0, %v2195
        %v2197 = vpop.f32.mrb[0].mxu0
        %2198 = vmatprep.mubr.bf16.mxu0 0
        %2199 = vmatmul.mubr.bf16.gmra.mrb[0].mxu0 %v2153
        %v2200 = vpop.f32.mrb[0].mxu0
        %v2201 = vadd.f32 0.0, %v2200
        %v2202 = vpop.f32.mrb[0].mxu0
        %v2203 = vpop.f32.mrb[0].mxu0
        %v2204 = vadd.f32 0.0, %v2203
        %v2205 = vpop.f32.mrb[0].mxu0
        %2206 = vmatprep.mubr.bf16.mxu0 0
        %2207 = vmatmul.mubr.bf16.gmra.mrb[0].mxu0 %v2156
        %v2208 = vpop.f32.mrb[0].mxu0
        %v2209 = vadd.f32 0.0, %v2208
        %v2210 = vpop.f32.mrb[0].mxu0
        %v2211 = vpop.f32.mrb[0].mxu0
        %v2212 = vadd.f32 0.0, %v2211
        %v2213 = vpop.f32.mrb[0].mxu0
        %2214 = vdwg.mxu0
        %2221 = vrot.lane.b32.xlu0 %v1619, 8
        %v2222 = vpop.permute.xlu0 %2221
        %2223 = vrot.lane.b32.xlu0 %v1622, 8
        %v2224 = vpop.permute.xlu0 %2223
        %2225 = vrot.lane.b32.xlu0 %v1627, 8
        %v2226 = vpop.permute.xlu0 %2225
        %2227 = vrot.lane.b32.xlu0 %v1630, 8
        %v2228 = vpop.permute.xlu0 %2227
        %2229 = vrot.lane.b32.xlu0 %v1635, 8
        %v2230 = vpop.permute.xlu0 %2229
        %2231 = vrot.lane.b32.xlu0 %v1638, 8
        %v2232 = vpop.permute.xlu0 %2231
        %2245 = vrot.lane.b32.xlu0 %v1906, 16
        %v2246 = vpop.permute.xlu0 %2245
        %2247 = vrot.lane.b32.xlu0 %v1909, 16
        %v2248 = vpop.permute.xlu0 %2247
        %2249 = vrot.lane.b32.xlu0 %v1914, 16
        %v2250 = vpop.permute.xlu0 %2249
        %2251 = vrot.lane.b32.xlu0 %v1917, 16
        %v2252 = vpop.permute.xlu0 %2251
        %2253 = vrot.lane.b32.xlu0 %v1922, 16
        %v2254 = vpop.permute.xlu0 %2253
        %2255 = vrot.lane.b32.xlu0 %v1925, 16
        %v2256 = vpop.permute.xlu0 %2255
        %2269 = vrot.lane.b32.xlu0 %v2193, 24
        %v2270 = vpop.permute.xlu0 %2269
        %2271 = vrot.lane.b32.xlu0 %v2196, 24
        %v2272 = vpop.permute.xlu0 %2271
        %2273 = vrot.lane.b32.xlu0 %v2201, 24
        %v2274 = vpop.permute.xlu0 %2273
        %2275 = vrot.lane.b32.xlu0 %v2204, 24
        %v2276 = vpop.permute.xlu0 %2275
        %2277 = vrot.lane.b32.xlu0 %v2209, 24
        %v2278 = vpop.permute.xlu0 %2277
        %2279 = vrot.lane.b32.xlu0 %v2212, 24
        %v2280 = vpop.permute.xlu0 %2279
        %v2287 = vsel %vm1083, %v1332, %v2222
        %v2288 = vsel %vm1083, %v1335, %v2224
        %v2289 = vsel %vm1083, %v1340, %v2226
        %v2290 = vsel %vm1083, %v1343, %v2228
        %v2291 = vsel %vm1083, %v1348, %v2230
        %v2292 = vsel %vm1083, %v1351, %v2232
        %vm2293 = vcmask 130048
        %v2294 = vsel %vm2293, %v2287, %v2246
        %v2295 = vsel %vm2293, %v2288, %v2248
        %v2296 = vsel %vm2293, %v2289, %v2250
        %v2297 = vsel %vm2293, %v2290, %v2252
        %v2298 = vsel %vm2293, %v2291, %v2254
        %v2299 = vsel %vm2293, %v2292, %v2256
        %vm2300 = vcmask 195584
        %v2301 = vsel %vm2300, %v2294, %v2270
        %v2302 = vsel %vm2300, %v2295, %v2272
        %v2303 = vsel %vm2300, %v2296, %v2274
        %v2304 = vsel %vm2300, %v2297, %v2276
        %v2305 = vsel %vm2300, %v2298, %v2278
        %v2306 = vsel %vm2300, %v2299, %v2280
        %v2307 = vpack.c.bf16 %v2302, %v2301
        %v2308 = vpack.c.bf16 %v2304, %v2303
        %v2309 = vpack.c.bf16 %v2306, %v2305
        %v2310 = vld [vmem:[%s597] sm:$0xf]
        %v2311 = vld [vmem:[%s597 + $0x4] sm:$0xf]
        %v2312 = vld [vmem:[%s597 + $0x8] sm:$0xf]
        %v2313 = vld [vmem:[%s597 + $0xc] sm:$0xf]
        %v2314 = vlaneseq
        %v2315 = vshrl.u32 %v2314, 7
        %v2316 = vsub.s32 3, %v2315
        %v2317 = vrot.slane %v863, %v2316
        %v2322 = vunpack.c.l.b16 %v2310
        %v2323 = vunpack.c.l.b16 %v2311
        %v2324 = vunpack.c.l.b16 %v2312
        %v2325 = vunpack.c.l.b16 %v2313
        %v2326 = vpack.c.b16 %v2323, %v2322
        %v2327 = vpack.c.b16 %v2325, %v2324
        %v2331 = vsel %vm870, %v2307, 0
        %v2334 = vsel %vm870, %v2308, 0
        %v2337 = vsel %vm870, %v2309, 0
        %2339 = vmatprep.subr.bf16.mxu0 0
        %2340 = vmatpush1.bf16.msra.mxu0 %v2326
        %2341 = vmatprep.subr.bf16.mxu0 0
        %2342 = vmatpush1.bf16.msra.mxu0 %v2327
        %2343 = vmatprep.subr.bf16.mxu0 0
        %2344 = vmatpush1.bf16.msra.mxu0 0
        %2345 = vmatprep.subr.bf16.mxu0 0
        %2346 = vmatpush1.bf16.msra.mxu0 0
        %2347 = vmatprep.subr.bf16.mxu0 0
        %2348 = vmatpush1.bf16.msra.mxu0 0
        %2349 = vmatprep.subr.bf16.mxu0 0
        %2350 = vmatpush1.bf16.msra.mxu0 0
        %2351 = vmatprep.subr.bf16.mxu0 0
        %2352 = vmatpush1.bf16.msra.mxu0 0
        %2353 = vmatprep.subr.bf16.mxu0 0
        %2354 = vmatpush1.bf16.msra.mxu0 0
        %2355 = vmatprep.subr.bf16.mxu0 0
        %2356 = vmatpush1.bf16.msra.mxu0 0
        %2357 = vmatprep.subr.bf16.mxu0 0
        %2358 = vmatpush1.bf16.msra.mxu0 0
        %2359 = vmatprep.subr.bf16.mxu0 0
        %2360 = vmatpush1.bf16.msra.mxu0 0
        %2361 = vmatprep.subr.bf16.mxu0 0
        %2362 = vmatpush1.bf16.msra.mxu0 0
        %2363 = vmatprep.subr.bf16.mxu0 0
        %2364 = vmatpush1.bf16.msra.mxu0 0
        %2365 = vmatprep.subr.bf16.mxu0 0
        %2366 = vmatpush1.bf16.msra.mxu0 0
        %2367 = vmatprep.subr.bf16.mxu0 0
        %2368 = vmatpush1.bf16.msra.mxu0 0
        %2369 = vmatprep.subr.bf16.mxu0 0
        %2370 = vmatpush1.bf16.msra.mxu0 0
        %2371 = vmatprep.mubr.bf16.mxu0 0
        %2372 = vmatmul.mubr.bf16.gmra.mrb[0].mxu0 %v2331
        %v2373 = vpop.f32.mrb[0].mxu0
        %v2374 = vadd.f32 %v2317, %v2373
        %v2375 = vpop.f32.mrb[0].mxu0
        %v2376 = vpop.f32.mrb[0].mxu0
        %v2377 = vadd.f32 %v2317, %v2376
        %v2378 = vpop.f32.mrb[0].mxu0
        %2379 = vmatprep.mubr.bf16.mxu0 0
        %2380 = vmatmul.mubr.bf16.gmra.mrb[0].mxu0 %v2334
        %v2381 = vpop.f32.mrb[0].mxu0
        %v2382 = vadd.f32 %v2317, %v2381
        %v2383 = vpop.f32.mrb[0].mxu0
        %v2384 = vpop.f32.mrb[0].mxu0
        %v2385 = vadd.f32 %v2317, %v2384
        %v2386 = vpop.f32.mrb[0].mxu0
        %2387 = vmatprep.mubr.bf16.mxu0 0
        %2388 = vmatmul.mubr.bf16.gmra.mrb[0].mxu0 %v2337
        %v2389 = vpop.f32.mrb[0].mxu0
        %v2390 = vadd.f32 %v2317, %v2389
        %v2391 = vpop.f32.mrb[0].mxu0
        %v2392 = vpop.f32.mrb[0].mxu0
        %v2393 = vadd.f32 %v2317, %v2392
        %v2394 = vpop.f32.mrb[0].mxu0
        %2395 = vdwg.mxu0
        %v2396 = vadd.f32 %v864, %v2374
        %v2397 = vadd.f32 %v865, %v2377
        %v2398 = vadd.f32 %v866, %v2382
        %v2399 = vadd.f32 %v867, %v2385
        %v2400 = vadd.f32 %v868, %v2390
        %v2401 = vadd.f32 %v869, %v2393
        %v2402 = vsel %vm870, %v2396, 0.0
        %2403 = vadd.xlane.f32.xlu0 %v2402
        %v2404 = vpop.xlane.xlu0 %2403
        %v2405 = vsel %vm870, %v2397, 0.0
        %2406 = vadd.xlane.f32.xlu0 %v2405
        %v2407 = vpop.xlane.xlu0 %2406
        %v2408 = vsel %vm870, %v2398, 0.0
        %2409 = vadd.xlane.f32.xlu0 %v2408
        %v2410 = vpop.xlane.xlu0 %2409
        %v2411 = vsel %vm870, %v2399, 0.0
        %2412 = vadd.xlane.f32.xlu0 %v2411
        %v2413 = vpop.xlane.xlu0 %2412
        %v2414 = vsel %vm870, %v2400, 0.0
        %2415 = vadd.xlane.f32.xlu0 %v2414
        %v2416 = vpop.xlane.xlu0 %2415
        %v2417 = vsel %vm870, %v2401, 0.0
        %2418 = vadd.xlane.f32.xlu0 %v2417
        %v2419 = vpop.xlane.xlu0 %2418
        %v2420 = vmul.f32 %v2404, %v889
        %v2421 = vmul.f32 %v2407, %v889
        %v2422 = vmul.f32 %v2410, %v889
        %v2423 = vmul.f32 %v2413, %v889
        %v2424 = vmul.f32 %v2416, %v889
        %v2425 = vmul.f32 %v2419, %v889
        %v2426 = vsub.f32 %v2396, %v2420
        %v2427 = vsub.f32 %v2397, %v2421
        %v2428 = vsub.f32 %v2398, %v2422
        %v2429 = vsub.f32 %v2399, %v2423
        %v2430 = vsub.f32 %v2400, %v2424
        %v2431 = vsub.f32 %v2401, %v2425
        %v2432 = vmul.f32 %v2426, %v2426
        %v2433 = vmul.f32 %v2427, %v2427
        %v2434 = vmul.f32 %v2428, %v2428
        %v2435 = vmul.f32 %v2429, %v2429
        %v2436 = vmul.f32 %v2430, %v2430
        %v2437 = vmul.f32 %v2431, %v2431
        %v2438 = vsel %vm870, %v2432, 0.0
        %2439 = vadd.xlane.f32.xlu0 %v2438
        %v2440 = vpop.xlane.xlu0 %2439
        %v2441 = vsel %vm870, %v2433, 0.0
        %2442 = vadd.xlane.f32.xlu0 %v2441
        %v2443 = vpop.xlane.xlu0 %2442
        %v2444 = vsel %vm870, %v2434, 0.0
        %2445 = vadd.xlane.f32.xlu0 %v2444
        %v2446 = vpop.xlane.xlu0 %2445
        %v2447 = vsel %vm870, %v2435, 0.0
        %2448 = vadd.xlane.f32.xlu0 %v2447
        %v2449 = vpop.xlane.xlu0 %2448
        %v2450 = vsel %vm870, %v2436, 0.0
        %2451 = vadd.xlane.f32.xlu0 %v2450
        %v2452 = vpop.xlane.xlu0 %2451
        %v2453 = vsel %vm870, %v2437, 0.0
        %2454 = vadd.xlane.f32.xlu0 %v2453
        %v2455 = vpop.xlane.xlu0 %2454
        %v2456 = vmul.f32 %v2440, %v889
        %v2457 = vmul.f32 %v2443, %v889
        %v2458 = vmul.f32 %v2446, %v889
        %v2459 = vmul.f32 %v2449, %v889
        %v2460 = vmul.f32 %v2452, %v889
        %v2461 = vmul.f32 %v2455, %v889
        %v2462 = vadd.f32 %v2456, 1e-05
        %v2463 = vadd.f32 %v2457, 1e-05
        %v2464 = vadd.f32 %v2458, 1e-05
        %v2465 = vadd.f32 %v2459, 1e-05
        %v2466 = vadd.f32 %v2460, 1e-05
        %v2467 = vadd.f32 %v2461, 1e-05
        %v2468 = vrsqrt.pop %v2462
        %v2469 = vrsqrt.pop %v2463
        %v2470 = vrsqrt.pop %v2464
        %v2471 = vrsqrt.pop %v2465
        %v2472 = vrsqrt.pop %v2466
        %v2473 = vrsqrt.pop %v2467
        %v2474 = vmul.f32 %v2426, %v2468
        %v2475 = vmul.f32 %v2427, %v2469
        %v2476 = vmul.f32 %v2428, %v2470
        %v2477 = vmul.f32 %v2429, %v2471
        %v2478 = vmul.f32 %v2430, %v2472
        %v2479 = vmul.f32 %v2431, %v2473
        %v2480 = vlaneseq
        %v2481 = vshrl.u32 %v2480, 7
        %v2482 = vsub.s32 4, %v2481
        %v2483 = vrot.slane %v863, %v2482
        %v2484 = vmul.f32 %v2474, %v2483
        %v2485 = vmul.f32 %v2475, %v2483
        %v2486 = vmul.f32 %v2476, %v2483
        %v2487 = vmul.f32 %v2477, %v2483
        %v2488 = vmul.f32 %v2478, %v2483
        %v2489 = vmul.f32 %v2479, %v2483
        %v2490 = vlaneseq
        %v2491 = vshrl.u32 %v2490, 7
        %v2492 = vsub.s32 5, %v2491
        %v2493 = vrot.slane %v863, %v2492
        %v2494 = vadd.f32 %v2484, %v2493
        %v2495 = vadd.f32 %v2485, %v2493
        %v2496 = vadd.f32 %v2486, %v2493
        %v2497 = vadd.f32 %v2487, %v2493
        %v2498 = vadd.f32 %v2488, %v2493
        %v2499 = vadd.f32 %v2489, %v2493
        %v2500 = vpack.c.bf16 %v2495, %v2494
        %v2501 = vpack.c.bf16 %v2497, %v2496
        %v2502 = vpack.c.bf16 %v2499, %v2498
        %v2503 = vld [vmem:[%s602] sm:$0xf]
        %v2504 = vld [vmem:[%s602 + $0x4] sm:$0xf]
        %v2505 = vld [vmem:[%s602 + $0x8] sm:$0xf]
        %v2506 = vld [vmem:[%s602 + $0xc] sm:$0xf]
        %v2507 = vlaneseq
        %v2508 = vshrl.u32 %v2507, 7
        %v2509 = vsub.s32 6, %v2508
        %v2510 = vrot.slane %v863, %v2509
        %v2515 = vunpack.c.l.b16 %v2503
        %v2516 = vunpack.c.l.b16 %v2504
        %v2517 = vunpack.c.l.b16 %v2505
        %v2518 = vunpack.c.l.b16 %v2506
        %v2519 = vpack.c.b16 %v2516, %v2515
        %v2520 = vpack.c.b16 %v2518, %v2517
        %v2524 = vsel %vm870, %v2500, 0
        %v2527 = vsel %vm870, %v2501, 0
        %v2530 = vsel %vm870, %v2502, 0
        %2532 = vmatprep.subr.bf16.mxu0 0
        %2533 = vmatpush1.bf16.msra.mxu0 %v2519
        %2534 = vmatprep.subr.bf16.mxu0 0
        %2535 = vmatpush1.bf16.msra.mxu0 %v2520
        %2536 = vmatprep.subr.bf16.mxu0 0
        %2537 = vmatpush1.bf16.msra.mxu0 0
        %2538 = vmatprep.subr.bf16.mxu0 0
        %2539 = vmatpush1.bf16.msra.mxu0 0
        %2540 = vmatprep.subr.bf16.mxu0 0
        %2541 = vmatpush1.bf16.msra.mxu0 0
        %2542 = vmatprep.subr.bf16.mxu0 0
        %2543 = vmatpush1.bf16.msra.mxu0 0
        %2544 = vmatprep.subr.bf16.mxu0 0
        %2545 = vmatpush1.bf16.msra.mxu0 0
        %2546 = vmatprep.subr.bf16.mxu0 0
        %2547 = vmatpush1.bf16.msra.mxu0 0
        %2548 = vmatprep.subr.bf16.mxu0 0
        %2549 = vmatpush1.bf16.msra.mxu0 0
        %2550 = vmatprep.subr.bf16.mxu0 0
        %2551 = vmatpush1.bf16.msra.mxu0 0
        %2552 = vmatprep.subr.bf16.mxu0 0
        %2553 = vmatpush1.bf16.msra.mxu0 0
        %2554 = vmatprep.subr.bf16.mxu0 0
        %2555 = vmatpush1.bf16.msra.mxu0 0
        %2556 = vmatprep.subr.bf16.mxu0 0
        %2557 = vmatpush1.bf16.msra.mxu0 0
        %2558 = vmatprep.subr.bf16.mxu0 0
        %2559 = vmatpush1.bf16.msra.mxu0 0
        %2560 = vmatprep.subr.bf16.mxu0 0
        %2561 = vmatpush1.bf16.msra.mxu0 0
        %2562 = vmatprep.subr.bf16.mxu0 0
        %2563 = vmatpush1.bf16.msra.mxu0 0
        %2564 = vmatprep.mubr.bf16.mxu0 0
        %2565 = vmatmul.mubr.bf16.gmra.mrb[0].mxu0 %v2524
        %v2566 = vpop.f32.mrb[0].mxu0
        %v2567 = vadd.f32 %v2510, %v2566
        %v2568 = vpop.f32.mrb[0].mxu0
        %v2569 = vpop.f32.mrb[0].mxu0
        %v2570 = vadd.f32 %v2510, %v2569
        %v2571 = vpop.f32.mrb[0].mxu0
        %2572 = vmatprep.mubr.bf16.mxu0 0
        %2573 = vmatmul.mubr.bf16.gmra.mrb[0].mxu0 %v2527
        %v2574 = vpop.f32.mrb[0].mxu0
        %v2575 = vadd.f32 %v2510, %v2574
        %v2576 = vpop.f32.mrb[0].mxu0
        %v2577 = vpop.f32.mrb[0].mxu0
        %v2578 = vadd.f32 %v2510, %v2577
        %v2579 = vpop.f32.mrb[0].mxu0
        %2580 = vmatprep.mubr.bf16.mxu0 0
        %2581 = vmatmul.mubr.bf16.gmra.mrb[0].mxu0 %v2530
        %v2582 = vpop.f32.mrb[0].mxu0
        %v2583 = vadd.f32 %v2510, %v2582
        %v2584 = vpop.f32.mrb[0].mxu0
        %v2585 = vpop.f32.mrb[0].mxu0
        %v2586 = vadd.f32 %v2510, %v2585
        %v2587 = vpop.f32.mrb[0].mxu0
        %2588 = vdwg.mxu0
        %v2589 = vmul.f32 %v2567, 1.702
        %v2590 = vmul.f32 %v2570, 1.702
        %v2591 = vmul.f32 %v2575, 1.702
        %v2592 = vmul.f32 %v2578, 1.702
        %v2593 = vmul.f32 %v2583, 1.702
        %v2594 = vmul.f32 %v2586, 1.702
        %v2595 = vxor.u32 %v2589, 2147483648
        %v2596 = vxor.u32 %v2590, 2147483648
        %v2597 = vxor.u32 %v2591, 2147483648
        %v2598 = vxor.u32 %v2592, 2147483648
        %v2599 = vxor.u32 %v2593, 2147483648
        %v2600 = vxor.u32 %v2594, 2147483648
        %v2601 = vmul.f32 %v2595, 1.442695
        %v2602 = vpow.pop %v2601
        %v2603 = vmul.f32 %v2596, 1.442695
        %v2604 = vpow.pop %v2603
        %v2605 = vmul.f32 %v2597, 1.442695
        %v2606 = vpow.pop %v2605
        %v2607 = vmul.f32 %v2598, 1.442695
        %v2608 = vpow.pop %v2607
        %v2609 = vmul.f32 %v2599, 1.442695
        %v2610 = vpow.pop %v2609
        %v2611 = vmul.f32 %v2600, 1.442695
        %v2612 = vpow.pop %v2611
        %v2613 = vadd.f32 %v2602, 1.0
        %v2614 = vadd.f32 %v2604, 1.0
        %v2615 = vadd.f32 %v2606, 1.0
        %v2616 = vadd.f32 %v2608, 1.0
        %v2617 = vadd.f32 %v2610, 1.0
        %v2618 = vadd.f32 %v2612, 1.0
        %v2619 = vrcp.pop %v2613
        %v2620 = vmul.f32 1.0, %v2619
        %v2621 = vrcp.pop %v2614
        %v2622 = vmul.f32 1.0, %v2621
        %v2623 = vrcp.pop %v2615
        %v2624 = vmul.f32 1.0, %v2623
        %v2625 = vrcp.pop %v2616
        %v2626 = vmul.f32 1.0, %v2625
        %v2627 = vrcp.pop %v2617
        %v2628 = vmul.f32 1.0, %v2627
        %v2629 = vrcp.pop %v2618
        %v2630 = vmul.f32 1.0, %v2629
        %v2631 = vmul.f32 %v2567, %v2620
        %v2632 = vmul.f32 %v2570, %v2622
        %v2633 = vmul.f32 %v2575, %v2624
        %v2634 = vmul.f32 %v2578, %v2626
        %v2635 = vmul.f32 %v2583, %v2628
        %v2636 = vmul.f32 %v2586, %v2630
        %v2637 = vpack.c.bf16 %v2632, %v2631
        %v2638 = vpack.c.bf16 %v2634, %v2633
        %v2639 = vpack.c.bf16 %v2636, %v2635
        %v2640 = vld [vmem:[%s607] sm:$0xf]
        %v2641 = vld [vmem:[%s607 + $0x4] sm:$0xf]
        %v2642 = vld [vmem:[%s607 + $0x8] sm:$0xf]
        %v2643 = vld [vmem:[%s607 + $0xc] sm:$0xf]
        %v2644 = vld [vmem:[%s607 + $0x10] sm:$0xf]
        %v2645 = vld [vmem:[%s607 + $0x14] sm:$0xf]
        %v2646 = vld [vmem:[%s607 + $0x18] sm:$0xf]
        %v2647 = vld [vmem:[%s607 + $0x1c] sm:$0xf]
        %v2648 = vld [vmem:[%s607 + $0x20] sm:$0xf]
        %v2649 = vld [vmem:[%s607 + $0x24] sm:$0xf]
        %v2650 = vld [vmem:[%s607 + $0x28] sm:$0xf]
        %v2651 = vld [vmem:[%s607 + $0x2c] sm:$0xf]
        %v2652 = vld [vmem:[%s607 + $0x30] sm:$0xf]
        %v2653 = vld [vmem:[%s607 + $0x34] sm:$0xf]
        %v2654 = vld [vmem:[%s607 + $0x38] sm:$0xf]
        %v2655 = vld [vmem:[%s607 + $0x3c] sm:$0xf]
        %v2656 = vlaneseq
        %v2657 = vshrl.u32 %v2656, 7
        %v2658 = vsub.s32 7, %v2657
        %v2659 = vrot.slane %v863, %v2658
        %v2676 = vunpack.c.l.b16 %v2640
        %v2677 = vunpack.c.l.b16 %v2641
        %v2678 = vunpack.c.l.b16 %v2642
        %v2679 = vunpack.c.l.b16 %v2643
        %v2680 = vunpack.c.l.b16 %v2644
        %v2681 = vunpack.c.l.b16 %v2645
        %v2682 = vunpack.c.l.b16 %v2646
        %v2683 = vunpack.c.l.b16 %v2647
        %v2684 = vunpack.c.l.b16 %v2648
        %v2685 = vunpack.c.l.b16 %v2649
        %v2686 = vunpack.c.l.b16 %v2650
        %v2687 = vunpack.c.l.b16 %v2651
        %v2688 = vunpack.c.l.b16 %v2652
        %v2689 = vunpack.c.l.b16 %v2653
        %v2690 = vunpack.c.l.b16 %v2654
        %v2691 = vunpack.c.l.b16 %v2655
        %v2692 = vpack.c.b16 %v2677, %v2676
        %v2693 = vpack.c.b16 %v2679, %v2678
        %v2694 = vpack.c.b16 %v2681, %v2680
        %v2695 = vpack.c.b16 %v2683, %v2682
        %v2696 = vpack.c.b16 %v2685, %v2684
        %v2697 = vpack.c.b16 %v2687, %v2686
        %v2698 = vpack.c.b16 %v2689, %v2688
        %v2699 = vpack.c.b16 %v2691, %v2690
        %2708 = vmatprep.subr.bf16.mxu0 0
        %2709 = vmatpush1.bf16.msra.mxu0 %v2692
        %2710 = vmatprep.subr.bf16.mxu0 0
        %2711 = vmatpush1.bf16.msra.mxu0 %v2693
        %2712 = vmatprep.subr.bf16.mxu0 0
        %2713 = vmatpush1.bf16.msra.mxu0 %v2694
        %2714 = vmatprep.subr.bf16.mxu0 0
        %2715 = vmatpush1.bf16.msra.mxu0 %v2695
        %2716 = vmatprep.subr.bf16.mxu0 0
        %2717 = vmatpush1.bf16.msra.mxu0 %v2696
        %2718 = vmatprep.subr.bf16.mxu0 0
        %2719 = vmatpush1.bf16.msra.mxu0 %v2697
        %2720 = vmatprep.subr.bf16.mxu0 0
        %2721 = vmatpush1.bf16.msra.mxu0 %v2698
        %2722 = vmatprep.subr.bf16.mxu0 0
        %2723 = vmatpush1.bf16.msra.mxu0 %v2699
        %2724 = vmatprep.subr.bf16.mxu0 0
        %2725 = vmatpush1.bf16.msra.mxu0 0
        %2726 = vmatprep.subr.bf16.mxu0 0
        %2727 = vmatpush1.bf16.msra.mxu0 0
        %2728 = vmatprep.subr.bf16.mxu0 0
        %2729 = vmatpush1.bf16.msra.mxu0 0
        %2730 = vmatprep.subr.bf16.mxu0 0
        %2731 = vmatpush1.bf16.msra.mxu0 0
        %2732 = vmatprep.subr.bf16.mxu0 0
        %2733 = vmatpush1.bf16.msra.mxu0 0
        %2734 = vmatprep.subr.bf16.mxu0 0
        %2735 = vmatpush1.bf16.msra.mxu0 0
        %2736 = vmatprep.subr.bf16.mxu0 0
        %2737 = vmatpush1.bf16.msra.mxu0 0
        %2738 = vmatprep.subr.bf16.mxu0 0
        %2739 = vmatpush1.bf16.msra.mxu0 0
        %2740 = vmatprep.mubr.bf16.mxu0 0
        %2741 = vmatmul.mubr.bf16.gmra.mrb[0].mxu0 %v2637
        %v2742 = vpop.f32.mrb[0].mxu0
        %v2743 = vadd.f32 %v2659, %v2742
        %v2744 = vpop.f32.mrb[0].mxu0
        %v2745 = vpop.f32.mrb[0].mxu0
        %v2746 = vadd.f32 %v2659, %v2745
        %v2747 = vpop.f32.mrb[0].mxu0
        %2748 = vmatprep.mubr.bf16.mxu0 0
        %2749 = vmatmul.mubr.bf16.gmra.mrb[0].mxu0 %v2638
        %v2750 = vpop.f32.mrb[0].mxu0
        %v2751 = vadd.f32 %v2659, %v2750
        %v2752 = vpop.f32.mrb[0].mxu0
        %v2753 = vpop.f32.mrb[0].mxu0
        %v2754 = vadd.f32 %v2659, %v2753
        %v2755 = vpop.f32.mrb[0].mxu0
        %2756 = vmatprep.mubr.bf16.mxu0 0
        %2757 = vmatmul.mubr.bf16.gmra.mrb[0].mxu0 %v2639
        %v2758 = vpop.f32.mrb[0].mxu0
        %v2759 = vadd.f32 %v2659, %v2758
        %v2760 = vpop.f32.mrb[0].mxu0
        %v2761 = vpop.f32.mrb[0].mxu0
        %v2762 = vadd.f32 %v2659, %v2761
        %v2763 = vpop.f32.mrb[0].mxu0
        %2764 = vdwg.mxu0
        %v2765 = vadd.f32 %v2396, %v2743
        %v2766 = vadd.f32 %v2397, %v2746
        %v2767 = vadd.f32 %v2398, %v2751
        %v2768 = vadd.f32 %v2399, %v2754
        %v2769 = vadd.f32 %v2400, %v2759
        %v2770 = vadd.f32 %v2401, %v2762
        %2771 = vst.msk [vmem:[#allocation2] sm:$0xff] %vm870, %v2765
        %2772 = vst.msk [vmem:[#allocation2 + $0x8] sm:$0xff] %vm870, %v2766
        %2773 = vst.msk [vmem:[#allocation2 + $0x10] sm:$0xff] %vm870, %v2767
        %2774 = vst.msk [vmem:[#allocation2 + $0x18] sm:$0xff] %vm870, %v2768
        %2775 = vst.msk [vmem:[#allocation2 + $0x20] sm:$0xff] %vm870, %v2769
        %2776 = vst.msk [vmem:[#allocation2 + $0x28] sm:$0xff] %vm870, %v2770
        %p2777 = scmp.eq.s32.totalorder %s29, 11
        // Predicated region
        $region97: #{vpt_vit_forward.1} parent=87 // pred_check
          %p2778 = pneg %p2777
        $region98: #{vpt_vit_forward.1} parent=87 // pred_check_branch
          %2780 = sbr.rel (%p2778) target = $region100
        $region99: #{vpt_vit_forward.1} parent=87 // pred_region
          %v2782 = vrot.slane %v2768, 7
          %vm2784 = vcmask 1040384
          %v2785 = vsel %vm2784, %v2765, %v2782
          %v2786 = vld [vmem:[%s14] sm:$0x1]
          %v2787 = vld [vmem:[%s15] sm:$0x1]
          %vm2788 = vcmask 254976
          %v2789 = vsel %vm2788, %v2785, 0.0
          %2790 = vadd.xlane.f32.xlu0 %v2789
          %v2791 = vpop.xlane.xlu0 %2790
          %v2792 = vmul.f32 %v2791, %v889
          %v2793 = vsub.f32 %v2785, %v2792
          %v2794 = vmul.f32 %v2793, %v2793
          %v2795 = vsel %vm2788, %v2794, 0.0
          %2796 = vadd.xlane.f32.xlu0 %v2795
          %v2797 = vpop.xlane.xlu0 %2796
          %v2798 = vmul.f32 %v2797, %v889
          %v2799 = vadd.f32 %v2798, 1e-05
          %v2800 = vrsqrt.pop %v2799
          %v2801 = vmul.f32 %v2793, %v2800
          %v2803 = vlaneseq
          %v2804 = vshrl.u32 %v2803, 7
          %v2805 = vsub.s32 0, %v2804
          %v2806 = vrot.slane %v2786, %v2805
          %v2808 = vmul.f32 %v2801, %v2806
          %v2810 = vlaneseq
          %v2811 = vshrl.u32 %v2810, 7
          %v2812 = vsub.s32 0, %v2811
          %v2813 = vrot.slane %v2787, %v2812
          %v2815 = vadd.f32 %v2808, %v2813
          %v2816 = vld [vmem:[%s16] sm:$0xff]
          %v2817 = vld [vmem:[%s16 + $0x8] sm:$0xff]
          %v2818 = vld [vmem:[%s16 + $0x10] sm:$0xff]
          %v2819 = vld [vmem:[%s16 + $0x18] sm:$0xff]
          %v2821 = vsel %vm870, %v2815, 0
          %2823 = vmatprep.subr.mxu0 0.0
          %2824 = vmatpush1.msra.mxu0 %v2816
          %2825 = vmatprep.subr.mxu0 0.0
          %2826 = vmatpush1.msra.mxu0 %v2817
          %2827 = vmatprep.subr.mxu0 0.0
          %2828 = vmatpush1.msra.mxu0 %v2818
          %2829 = vmatprep.subr.mxu0 0.0
          %2830 = vmatpush1.msra.mxu0 %v2819
          %2831 = vmatprep.subr.mxu0 0.0
          %2832 = vmatpush1.msra.mxu0 0.0
          %2833 = vmatprep.subr.mxu0 0.0
          %2834 = vmatpush1.msra.mxu0 0.0
          %2835 = vmatprep.subr.mxu0 0.0
          %2836 = vmatpush1.msra.mxu0 0.0
          %2837 = vmatprep.subr.mxu0 0.0
          %2838 = vmatpush1.msra.mxu0 0.0
          %2839 = vmatprep.subr.mxu0 0.0
          %2840 = vmatpush1.msra.mxu0 0.0
          %2841 = vmatprep.subr.mxu0 0.0
          %2842 = vmatpush1.msra.mxu0 0.0
          %2843 = vmatprep.subr.mxu0 0.0
          %2844 = vmatpush1.msra.mxu0 0.0
          %2845 = vmatprep.subr.mxu0 0.0
          %2846 = vmatpush1.msra.mxu0 0.0
          %2847 = vmatprep.subr.mxu0 0.0
          %2848 = vmatpush1.msra.mxu0 0.0
          %2849 = vmatprep.subr.mxu0 0.0
          %2850 = vmatpush1.msra.mxu0 0.0
          %2851 = vmatprep.subr.mxu0 0.0
          %2852 = vmatpush1.msra.mxu0 0.0
          %2853 = vmatprep.subr.mxu0 0.0
          %2854 = vmatpush1.msra.mxu0 0.0
          %2855 = vmatprep.subr.mxu0 0.0
          %2856 = vmatpush1.msra.mxu0 0.0
          %2857 = vmatprep.subr.mxu0 0.0
          %2858 = vmatpush1.msra.mxu0 0.0
          %2859 = vmatprep.subr.mxu0 0.0
          %2860 = vmatpush1.msra.mxu0 0.0
          %2861 = vmatprep.subr.mxu0 0.0
          %2862 = vmatpush1.msra.mxu0 0.0
          %2863 = vmatprep.subr.mxu0 0.0
          %2864 = vmatpush1.msra.mxu0 0.0
          %2865 = vmatprep.subr.mxu0 0.0
          %2866 = vmatpush1.msra.mxu0 0.0
          %2867 = vmatprep.subr.mxu0 0.0
          %2868 = vmatpush1.msra.mxu0 0.0
          %2869 = vmatprep.subr.mxu0 0.0
          %2870 = vmatpush1.msra.mxu0 0.0
          %2871 = vmatprep.subr.mxu0 0.0
          %2872 = vmatpush1.msra.mxu0 0.0
          %2873 = vmatprep.subr.mxu0 0.0
          %2874 = vmatpush1.msra.mxu0 0.0
          %2875 = vmatprep.subr.mxu0 0.0
          %2876 = vmatpush1.msra.mxu0 0.0
          %2877 = vmatprep.subr.mxu0 0.0
          %2878 = vmatpush1.msra.mxu0 0.0
          %2879 = vmatprep.subr.mxu0 0.0
          %2880 = vmatpush1.msra.mxu0 0.0
          %2881 = vmatprep.subr.mxu0 0.0
          %2882 = vmatpush1.msra.mxu0 0.0
          %2883 = vmatprep.subr.mxu0 0.0
          %2884 = vmatpush1.msra.mxu0 0.0
          %2885 = vmatprep.subr.mxu0 0.0
          %2886 = vmatpush1.msra.mxu0 0.0
          %2887 = vmatprep.mubr.f32.mxu0 0.0
          %2888 = vmatmul.mubr.f32.gmra.mrb[0].mxu0 %v2821
          %v2889 = vpop.f32.mrb[0].mxu0
          %v2890 = vadd.f32 0.0, %v2889
          %v2891 = vpop.f32.mrb[0].mxu0
          %2892 = vdwg.mxu0
          %vm2893 = vcmask 123904
          %2894 = vst.msk [vmem:[#allocation3] sm:$0x3] %vm2893, %v2890
        $region100: #{vpt_vit_forward.1} parent=87 // pred_fallthru
          _
        // Predicated region
        $region101: #{vpt_vit_forward.1} parent=87 // pred_check
          %p2895 = pneg %p424
        $region102: #{vpt_vit_forward.1} parent=87 // pred_check_branch
          %2897 = sbr.rel (%p2895) target = $region104
        $region103: #{vpt_vit_forward.1} parent=87 // pred_region
          %s2899 = ssub.s32 32, 32
          %2900 = vsyncadd [#allocation4], %s2899
          %s2902 = sshll.u32 [#allocation3], 4
          %s2903 = int_to_ptr.vmem [resolvable:$true] %s2902
          %2905 = dma.vmem_to_hbm [thread:$0]  %s2903, 32, %s17, [#allocation4]
        $region104: #{vpt_vit_forward.1} parent=87 // pred_fallthru
          _
        // Predicated region
        $region105: #{vpt_vit_forward.1} parent=87 // pred_check
          %p2906 = pneg %p424
        $region106: #{vpt_vit_forward.1} parent=87 // pred_check_branch
          %2908 = sbr.rel (%p2906) target = $region108
        $region107: #{vpt_vit_forward.1} parent=87 // pred_region
          %2909 = dma.done [#allocation4], 32
        $region108: #{vpt_vit_forward.1} parent=87 // pred_fallthru
          _
      $region88: #{vpt_vit_forward.1} parent=5 // pred_fallthru
        _
      %p2910 = scmp.le.s32.totalorder 2, %s24
      // Predicated region
      $region109: #{vpt_vit_forward.1} parent=5 // pred_check
        %p2911 = pneg %p2910
      $region110: #{vpt_vit_forward.1} parent=5 // pred_check_branch
        %2913 = sbr.rel (%p2911) target = $region112
      $region111: #{vpt_vit_forward.1} parent=5 // pred_region
        %s2914 = ssub.s32 %s24, 2
      $region112: #{vpt_vit_forward.1} parent=5 // pred_fallthru
        _
    $region6: #{vpt_vit_forward.1} parent=1 // loop_footer
      %s28 = sadd.s32 1, %s24
    $region7: #{vpt_vit_forward.1} parent=1 // loop_footer_branch
      %23 = sbr.rel target = $region3
    $region8: #{vpt_vit_forward.1} parent=1 // loop_exit
      _
    %2915 = vsyncpa [#allocation4], 1
    %s2916 = scalar_lea.sflag [#allocation4], 1
    %2917 = vsyncpa %s2916, 1

</llo_original>
